<compile_context>
chip_gen: v5e
topology: v5e:2x2
jax: 0.10.0
libtpu: 0.0.40
codegen_flags: <defaults>
</compile_context>

<pallas_src>
import functools

import jax
import jax.numpy as jnp
from jax.experimental import pallas as pl
from jax.experimental.pallas import tpu as pltpu


def round_up(x, m):
    return (x + m - 1) // m * m


# ----------------------------------------------------------------------------
# Hardware-aware knobs
# ----------------------------------------------------------------------------
@functools.lru_cache(maxsize=None)
def _vmem_limit_bytes():
    """~3/4 of physical VMEM (128 MiB on v5e/v6e, 64 MiB on v7x), capped."""
    try:
        cap = int(pltpu.get_tpu_info().vmem_capacity_bytes)
    except Exception:
        cap = 64 * 1024 * 1024
    return int(min(cap * 3 // 4, 96 * 1024 * 1024))


@functools.lru_cache(maxsize=None)
def _buffered_one_ok():
    """Probe whether pipeline_mode=pl.Buffered(1) (single-buffered constant
    operands, i.e. no pointless double-buffering of resident weights) compiles,
    runs and is correct on this JAX/Mosaic build.  Fall back otherwise."""
    try:
        def k(x_ref, o_ref):
            o_ref[...] = x_ref[...] + 1.0

        y = pl.pallas_call(
            k,
            out_shape=jax.ShapeDtypeStruct((16, 128), jnp.float32),
            grid=(2,),
            in_specs=[pl.BlockSpec((8, 128), lambda i: (0, 0),
                                   pipeline_mode=pl.Buffered(1))],
            out_specs=pl.BlockSpec((8, 128), lambda i: (i, 0)),
            compiler_params=pltpu.CompilerParams(
                dimension_semantics=("parallel",)),
        )(jnp.ones((8, 128), jnp.float32))
        return bool(jnp.all(y == 2.0))
    except Exception:
        return False


def _const_spec(shape):
    """BlockSpec for an operand identical on every grid step (weights,
    scale+shift): whole array, constant index map, single pipeline buffer
    when supported."""
    index_map = lambda i: (0,) * len(shape)
    if _buffered_one_ok():
        return pl.BlockSpec(shape, index_map, pipeline_mode=pl.Buffered(1))
    return pl.BlockSpec(shape, index_map)


def pick_nb(n, rows_per_img, row_bytes, *, target_rows=1536,
            max_block_bytes=6 * 1024 * 1024):
    """Images per grid step for the tap-conv layers: fill the MXU M dimension,
    keep the (double-buffered) input block inside VMEM, prefer an even grid
    (two v7x TensorCores), keep >=2 grid steps when there are >=2 images."""
    best, best_key = 1, None
    for d in range(1, n + 1):
        if n % d:
            continue
        grid = n // d
        if d > 1 and d * rows_per_img * row_bytes > max_block_bytes:
            continue
        if n >= 2 and grid < 2:
            continue
        key = (min(d * rows_per_img, target_rows), (grid % 2) == 0, -d)
        if best_key is None or key > best_key:
            best, best_key = d, key
    return best


def pick_tm(m):
    """M-tile for the plain GEMM kernels (layer 1 / final dense): multiple of
    8, biggest sensible block, even grid when possible."""
    mp8 = round_up(m, 8)
    if mp8 <= 512:
        half = mp8 // 2
        return half if (half % 8 == 0 and half > 0) else mp8
    tm = 512
    for cand in (1024, 2048, 4096):
        if mp8 % cand == 0 and (mp8 // cand) >= 2 and (mp8 // cand) % 2 == 0:
            tm = cand
    return tm


# ----------------------------------------------------------------------------
# Pallas kernel 1: GEMM + scale/shift (+ LeakyReLU 0.2), lane-dense output.
# Used for layer 1 (full 4x4 im2col, K = 48) and for the final 8*dim -> 1 conv
# (kernel == full spatial extent, K = 16*8*dim).
# ----------------------------------------------------------------------------
def _gemm_kernel(x_ref, w_ref, ss_ref, o_ref, *, leaky):
    acc = jnp.dot(x_ref[...], w_ref[...], preferred_element_type=jnp.float32)
    y = acc * ss_ref[0:1, :] + ss_ref[1:2, :]
    if leaky:
        y = jnp.maximum(y, 0.2 * y)                # LeakyReLU(0.2)
    o_ref[...] = y.astype(o_ref.dtype)


def gemm_bias_act(a, w, ss, *, leaky, out_dtype):
    m, k = a.shape
    coutp = w.shape[1]
    tm = pick_tm(m)
    mp = round_up(m, tm)
    if mp != m:
        a = jnp.pad(a, ((0, mp - m), (0, 0)))
    out = pl.pallas_call(
        functools.partial(_gemm_kernel, leaky=leaky),
        out_shape=jax.ShapeDtypeStruct((mp, coutp), out_dtype),
        grid=(mp // tm,),
        in_specs=[pl.BlockSpec((tm, k), lambda i: (i, 0)),
                  _const_spec((k, coutp)),
                  _const_spec((2, coutp))],
        out_specs=pl.BlockSpec((tm, coutp), lambda i: (i, 0)),
        compiler_params=pltpu.CompilerParams(
            dimension_semantics=("parallel",),
            vmem_limit_bytes=_vmem_limit_bytes()),
    )(a, w, ss)
    return out[:m] if mp != m else out


# ----------------------------------------------------------------------------
# Pallas kernel 2: 4x4 / stride-2 / pad-1 conv as 4 offset-tap GEMMs on a
# space-to-depth input, batch folded into the GEMM M dimension, fused
# BN(scale/shift) + LeakyReLU(0.2) epilogue.
#
#   x_ref  : (nb*R, 4*Cin)     bf16  -- nb images, each R flattened s2d rows
#   w_ref  : (4, 4*Cin, CoutP) bf16  -- per-tap weight matrices
#   ss_ref : (2, CoutP)        f32   -- row 0 = scale, row 1 = shift
#   o_ref  : (nb*Me_pad, CoutP) bf16 -- per-image "extended" output rows
#
# One jnp.dot per tap over a single contiguous slab of ell = (nb-1)*R + Me rows
# spanning all nb images; the (R - Me) rows between images are junk (finite,
# coming from the zero row padding) and are never stored.
# ----------------------------------------------------------------------------
def _conv_taps_kernel(x_ref, w_ref, ss_ref, o_ref, *, nb, r, me, me_pad, ws):
    ell = (nb - 1) * r + me
    acc = None
    for t, off in enumerate((0, 1, ws, ws + 1)):   # taps (dh, dw) of the 2x2 conv
        xt = x_ref[pl.ds(off, ell), :]
        part = jnp.dot(xt, w_ref[t], preferred_element_type=jnp.float32)
        acc = part if acc is None else acc + part
    y = acc * ss_ref[0:1, :] + ss_ref[1:2, :]
    y = jnp.maximum(y, 0.2 * y)                    # LeakyReLU(0.2)
    y = y.astype(o_ref.dtype)
    for b in range(nb):                            # dense per-image output rows
        o_ref[pl.ds(b * me_pad, me), :] = y[b * r:b * r + me]
        if me_pad > me:                            # keep pad rows deterministic
            o_ref[pl.ds(b * me_pad + me, me_pad - me), :] = jnp.zeros(
                (me_pad - me, o_ref.shape[-1]), o_ref.dtype)


def conv_taps_layer(x, w_taps, ss, cout):
    """4x4 conv, stride 2, pad 1, fused BN(scale/shift) + LeakyReLU(0.2).

    x: (N, H, W, Cin) bf16 (true channels only).  Returns (N, H//2, W//2, cout).
    """
    n, h, w_sp, cin = x.shape
    ho, wo = h // 2, w_sp // 2
    hs, ws = ho + 1, wo + 1
    c4 = 4 * cin
    me = ho * ws                                   # valid cols + 1 junk col / row
    me_pad = round_up(me, 8)
    r = round_up(hs * ws + 1, 8)                   # per-image rows (zero padded)
    coutp = w_taps.shape[-1]
    # The tap at offset ws+1 reads up to row me+ws of each image's block; those
    # rows must be covered by the zero row padding appended below.
    assert r >= me + ws + 1

    nb = pick_nb(n, r, c4 * 2)

    # ---- layout glue: pad + space-to-depth + flatten (one fused XLA gather) --
    xp = jnp.pad(x, ((0, 0), (1, 1), (1, 1), (0, 0)))
    xs = xp.reshape(n, hs, 2, ws, 2, cin)
    xs = jnp.transpose(xs, (0, 1, 3, 2, 4, 5)).reshape(n, hs * ws, c4)
    xf = jnp.pad(xs, ((0, 0), (0, r - hs * ws), (0, 0)))
    xf = xf.reshape(n * r, c4).astype(jnp.bfloat16)

    kernel = functools.partial(_conv_taps_kernel, nb=nb, r=r, me=me,
                               me_pad=me_pad, ws=ws)
    y2d = pl.pallas_call(
        kernel,
        out_shape=jax.ShapeDtypeStruct((n * me_pad, coutp), jnp.bfloat16),
        grid=(n // nb,),
        in_specs=[pl.BlockSpec((nb * r, c4), lambda i: (i, 0)),
                  _const_spec((4, c4, coutp)),
                  _const_spec((2, coutp))],
        out_specs=pl.BlockSpec((nb * me_pad, coutp), lambda i: (i, 0)),
        compiler_params=pltpu.CompilerParams(
            dimension_semantics=("parallel",),     # batch tiles over TCs
            vmem_limit_bytes=_vmem_limit_bytes()),
    )(xf, w_taps, ss)

    # Drop the 1 junk column per row (Ws -> Wo) and the Cout lane padding.
    y = y2d.reshape(n, me_pad, coutp)[:, :me].reshape(n, ho, ws, coutp)
    return y[:, :, :wo, :cout]


# ----------------------------------------------------------------------------
# Layer-1 im2col + parameter packing (done once at init, not per forward).
# ----------------------------------------------------------------------------
def _im2col_4x4_s2(x):
    """(N, H, W, C) -> (N*Ho*Wo, 16*C) patches of the 4x4/stride-2/pad-1 conv,
    K ordered (kh, kw, c).  Used for layer 1 only (C = 3, ~100 KB/image)."""
    n, h, w, c = x.shape
    ho, wo = h // 2, w // 2
    xp = jnp.pad(x, ((0, 0), (1, 1), (1, 1), (0, 0)))
    cols = [xp[:, kh:kh + 2 * ho:2, kw:kw + 2 * wo:2, :]
            for kh in range(4) for kw in range(4)]
    patches = jnp.concatenate(cols, axis=-1)       # (N, Ho, Wo, 16*C)
    return patches.reshape(n * ho * wo, 16 * c)


def _build_taps(w, coutp):
    """(Cout, Cin, 4, 4) torch-layout conv weight -> (4, 4*Cin, CoutP) bf16
    per-tap matrices for the space-to-depth formulation."""
    cout, cin = w.shape[0], w.shape[1]
    wt = jnp.transpose(w, (2, 3, 1, 0))            # (kh, kw, cin, cout)
    wt = wt.reshape(2, 2, 2, 2, cin, cout)         # (dh, sh, dw, sw, cin, cout)
    wt = jnp.transpose(wt, (0, 2, 1, 3, 4, 5))     # (dh, dw, sh, sw, cin, cout)
    wt = wt.reshape(4, 4 * cin, cout)              # tap = dh*2+dw ; K = (sh,sw,cin)
    wt = jnp.pad(wt, ((0, 0), (0, 0), (0, coutp - cout)))
    return wt.astype(jnp.bfloat16)


def _pack_dense(w, coutp):
    """(Cout, Cin, 4, 4) -> (16*Cin, CoutP) bf16, K ordered (kh, kw, cin)."""
    cout, cin = w.shape[0], w.shape[1]
    wm = jnp.transpose(w, (2, 3, 1, 0)).reshape(16 * cin, cout)
    wm = jnp.pad(wm, ((0, 0), (0, coutp - cout)))
    return wm.astype(jnp.bfloat16)


def init_params(key, dim):
    chans = [3, dim, 2 * dim, 4 * dim, 8 * dim, 1]
    has_bn = [False, True, True, True, False]
    eps = 1e-5
    params = []
    for li in range(5):
        cin, cout = chans[li], chans[li + 1]
        key, kw_, kb, kg, kbe, km, kv = jax.random.split(key, 7)
        w = jax.random.normal(kw_, (cout, cin, 4, 4), jnp.float32) * 0.05
        b = jax.random.normal(kb, (cout,), jnp.float32) * 0.05
        if has_bn[li]:
            gamma = 1.0 + 0.1 * jax.random.normal(kg, (cout,), jnp.float32)
            beta = 0.1 * jax.random.normal(kbe, (cout,), jnp.float32)
            mean = 0.1 * jax.random.normal(km, (cout,), jnp.float32)
            var = 1.0 + 0.1 * jnp.abs(jax.random.normal(kv, (cout,), jnp.float32))
            s = gamma / jnp.sqrt(var + eps)
            scale = s
            shift = (b - mean) * s + beta          # conv bias then inference BN
        else:
            scale = jnp.ones((cout,), jnp.float32)
            shift = b
        coutp = round_up(cout, 128)                # lane-dense output channels
        if li in (0, 4):
            w_packed = _pack_dense(w, coutp)       # layer 1 (K=48) / final dense
        else:
            w_packed = _build_taps(w, coutp)
        scale_p = jnp.pad(scale, (0, coutp - cout), constant_values=1.0)
        shift_p = jnp.pad(shift, (0, coutp - cout))
        ss = jnp.stack([scale_p, shift_p]).astype(jnp.float32)   # (2, CoutP)
        params.append((w_packed, ss))
    return tuple(params)


# ----------------------------------------------------------------------------
# Full forward pass
# ----------------------------------------------------------------------------
@functools.partial(jax.jit, static_argnames=("dim",))
def discriminator_wgan_forward(x_nchw, params, *, dim):
    x = jnp.transpose(x_nchw, (0, 2, 3, 1)).astype(jnp.bfloat16)   # NCHW -> NHWC
    n, h, w_sp, _ = x.shape
    ho, wo = h // 2, w_sp // 2

    # Layer 1: Conv(3, dim, 4, 2, 1) + LeakyReLU as a single K=48 GEMM.
    w1, ss1 = params[0]
    patches = _im2col_4x4_s2(x)                    # (N*Ho*Wo, 48) bf16
    y = gemm_bias_act(patches, w1, ss1, leaky=True, out_dtype=jnp.bfloat16)
    y = y.reshape(n, ho, wo, w1.shape[1])[..., :dim]

    # Layers 2-4: conv + BN + LeakyReLU via batch-folded space-to-depth taps.
    for li, cout in enumerate((2 * dim, 4 * dim, 8 * dim)):
        w_taps, ss = params[1 + li]
        y = conv_taps_layer(y, w_taps, ss, cout)

    # Final Conv(8*dim, 1, 4): kernel == full 4x4 extent -> dense GEMM.
    w5, ss5 = params[4]
    patches5 = y.reshape(n, -1)                    # (N, 16*8*dim), order (h,w,c)
    out = gemm_bias_act(patches5, w5, ss5, leaky=False, out_dtype=jnp.float32)
    return out[:, 0]                               # == y.view(-1)


if __name__ == "__main__":
    key = jax.random.PRNGKey(0)
    key_x, key_p = jax.random.split(key)

    dim = 8       # small dim for a quick synthetic run (PyTorch default is 64)
    batch = 2
    # Spatial size 64 is implied by the architecture (64->32->16->8->4 -> 1x1).
    x = jax.random.normal(key_x, (batch, 3, 64, 64), jnp.float32)

    params = init_params(key_p, dim)

    _buffered_one_ok()            # run the Buffered(1) probe eagerly, outside jit

    y = discriminator_wgan_forward(x, params, dim=dim)
    y = jax.block_until_ready(y)

    assert y.shape == (batch,), y.shape
    assert bool(jnp.all(jnp.isfinite(y)))
    print("KERNEL_OK")
</pallas_src>

<mosaic_0001>
module attributes {stable_mosaic.version = 11 : i64} {
  func.func @k(%arg0: i32, %arg1: memref<8x128xf32, #tpu.memory_space<vmem>>, %arg2: memref<8x128xf32, #tpu.memory_space<vmem>>) attributes {dimension_semantics = [#tpu.dimension_semantics<parallel>], iteration_bounds = array<i64: 2>, scalar_prefetch = 0 : i64, scratch_operands = 0 : i64, tpu.core_type = #tpu.core_type<tc>, window_params = [{pipeline_mode = #tpu.pipeline_mode<synchronous>, transform_indices = @transform_0, window_bounds = array<i64: 8, 128>}, {transform_indices = @transform_1, window_bounds = array<i64: 8, 128>}]} {
    %c0 = arith.constant 0 : index
    %c0_0 = arith.constant 0 : index
    %0 = vector.load %arg1[%c0, %c0_0] : memref<8x128xf32, #tpu.memory_space<vmem>>, vector<8x128xf32>
    %cst = arith.constant 1.000000e+00 : f32
    %1 = vector.broadcast %cst : f32 to vector<8x128xf32>
    %2 = arith.addf %0, %1 : vector<8x128xf32>
    %c0_1 = arith.constant 0 : index
    %c0_2 = arith.constant 0 : index
    %3 = vector.load %arg2[%c0_1, %c0_2] : memref<8x128xf32, #tpu.memory_space<vmem>>, vector<8x128xf32>
    tpu.vector_store %arg2[%c0_1, %c0_2], %2 {strides = array<i32>} : memref<8x128xf32, #tpu.memory_space<vmem>>, vector<8x128xf32>,
    return
  }
  func.func @transform_0(%arg0: i32) -> (i32, i32) {
    %c0_i32 = arith.constant 0 : i32
    %c0_i32_0 = arith.constant 0 : i32
    %c0_i32_1 = arith.constant 0 : i32
    return %c0_i32, %c0_i32_0 : i32, i32
  }
  func.func @transform_1(%arg0: i32) -> (i32, i32) {
    %c0_i32 = arith.constant 0 : i32
    %c0_i32_0 = arith.constant 0 : i32
    return %arg0, %c0_i32 : i32, i32
  }
}

module attributes {stable_mosaic.version = 11 : i64} {
  func.func @_gemm_kernel(%arg0: i32, %arg1: memref<1024x48xbf16, #tpu.memory_space<vmem>>, %arg2: memref<48x128xbf16, #tpu.memory_space<vmem>>, %arg3: memref<2x128xf32, #tpu.memory_space<vmem>>, %arg4: memref<1024x128xbf16, #tpu.memory_space<vmem>>) attributes {dimension_semantics = [#tpu.dimension_semantics<parallel>], iteration_bounds = array<i64: 2>, scalar_prefetch = 0 : i64, scratch_operands = 0 : i64, tpu.core_type = #tpu.core_type<tc>, window_params = [{transform_indices = @transform_0, window_bounds = array<i64: 1024, 48>}, {pipeline_mode = #tpu.pipeline_mode<synchronous>, transform_indices = @transform_1, window_bounds = array<i64: 48, 128>}, {pipeline_mode = #tpu.pipeline_mode<synchronous>, transform_indices = @transform_2, window_bounds = array<i64: 2, 128>}, {transform_indices = @transform_3, window_bounds = array<i64: 1024, 128>}]} {
    %c0 = arith.constant 0 : index
    %c0_0 = arith.constant 0 : index
    %0 = vector.load %arg1[%c0, %c0_0] : memref<1024x48xbf16, #tpu.memory_space<vmem>>, vector<1024x48xbf16>
    %c0_1 = arith.constant 0 : index
    %c0_2 = arith.constant 0 : index
    %1 = vector.load %arg2[%c0_1, %c0_2] : memref<48x128xbf16, #tpu.memory_space<vmem>>, vector<48x128xbf16>
    %cst = arith.constant dense<0.000000e+00> : vector<1024x128xf32>
    %2 = tpu.matmul %0, %1, %cst {dimension_numbers = #tpu.dot_dimension_numbers<[1], [0], [0], [1], [0, 0, 1, 1], [], []>} : vector<1024x48xbf16>, vector<48x128xbf16>, vector<1024x128xf32> -> vector<1024x128xf32>
    %c0_3 = arith.constant 0 : index
    %c0_4 = arith.constant 0 : index
    %3 = vector.load %arg3[%c0_3, %c0_4] : memref<2x128xf32, #tpu.memory_space<vmem>>, vector<1x128xf32>
    %4 = vector.broadcast %3 : vector<1x128xf32> to vector<1024x128xf32>
    %5 = arith.mulf %2, %4 : vector<1024x128xf32>
    %c1 = arith.constant 1 : index
    %c0_5 = arith.constant 0 : index
    %6 = vector.load %arg3[%c1, %c0_5] : memref<2x128xf32, #tpu.memory_space<vmem>>, vector<1x128xf32>
    %7 = vector.broadcast %6 : vector<1x128xf32> to vector<1024x128xf32>
    %8 = arith.addf %5, %7 : vector<1024x128xf32>
    %cst_6 = arith.constant 2.000000e-01 : f32
    %9 = vector.broadcast %cst_6 : f32 to vector<1024x128xf32>
    %10 = arith.mulf %9, %8 : vector<1024x128xf32>
    %11 = arith.maximumf %8, %10 : vector<1024x128xf32>
    %12 = arith.truncf %11 : vector<1024x128xf32> to vector<1024x128xbf16>
    %c0_7 = arith.constant 0 : index
    %c0_8 = arith.constant 0 : index
    %13 = vector.load %arg4[%c0_7, %c0_8] : memref<1024x128xbf16, #tpu.memory_space<vmem>>, vector<1024x128xbf16>
    tpu.vector_store %arg4[%c0_7, %c0_8], %12 {strides = array<i32>} : memref<1024x128xbf16, #tpu.memory_space<vmem>>, vector<1024x128xbf16>,
    return
  }
  func.func @transform_0(%arg0: i32) -> (i32, i32) {
    %c0_i32 = arith.constant 0 : i32
    %c0_i32_0 = arith.constant 0 : i32
    return %arg0, %c0_i32 : i32, i32
  }
  func.func @transform_1(%arg0: i32) -> (i32, i32) {
    %c0_i32 = arith.constant 0 : i32
    %c0_i32_0 = arith.constant 0 : i32
    %c0_i32_1 = arith.constant 0 : i32
    return %c0_i32, %c0_i32_0 : i32, i32
  }
  func.func @transform_2(%arg0: i32) -> (i32, i32) {
    %c0_i32 = arith.constant 0 : i32
    %c0_i32_0 = arith.constant 0 : i32
    %c0_i32_1 = arith.constant 0 : i32
    return %c0_i32, %c0_i32_0 : i32, i32
  }
  func.func @transform_3(%arg0: i32) -> (i32, i32) {
    %c0_i32 = arith.constant 0 : i32
    %c0_i32_0 = arith.constant 0 : i32
    return %arg0, %c0_i32 : i32, i32
  }
}

module attributes {stable_mosaic.version = 11 : i64} {
  func.func @_conv_taps_kernel(%arg0: i32, %arg1: memref<296x32xbf16, #tpu.memory_space<vmem>>, %arg2: memref<4x32x128xbf16, #tpu.memory_space<vmem>>, %arg3: memref<2x128xf32, #tpu.memory_space<vmem>>, %arg4: memref<272x128xbf16, #tpu.memory_space<vmem>>) attributes {dimension_semantics = [#tpu.dimension_semantics<parallel>], iteration_bounds = array<i64: 2>, scalar_prefetch = 0 : i64, scratch_operands = 0 : i64, tpu.core_type = #tpu.core_type<tc>, window_params = [{transform_indices = @transform_0, window_bounds = array<i64: 296, 32>}, {pipeline_mode = #tpu.pipeline_mode<synchronous>, transform_indices = @transform_1, window_bounds = array<i64: 4, 32, 128>}, {pipeline_mode = #tpu.pipeline_mode<synchronous>, transform_indices = @transform_2, window_bounds = array<i64: 2, 128>}, {transform_indices = @transform_3, window_bounds = array<i64: 272, 128>}]} {
    %c0 = arith.constant 0 : index
    %c0_0 = arith.constant 0 : index
    %0 = vector.load %arg1[%c0, %c0_0] : memref<296x32xbf16, #tpu.memory_space<vmem>>, vector<272x32xbf16>
    %c0_1 = arith.constant 0 : index
    %c0_2 = arith.constant 0 : index
    %c0_3 = arith.constant 0 : index
    %1 = vector.load %arg2[%c0_1, %c0_2, %c0_3] : memref<4x32x128xbf16, #tpu.memory_space<vmem>>, vector<1x32x128xbf16>
    %2 = vector.shape_cast %1 : vector<1x32x128xbf16> to vector<32x128xbf16>
    %cst = arith.constant dense<0.000000e+00> : vector<272x128xf32>
    %3 = tpu.matmul %0, %2, %cst {dimension_numbers = #tpu.dot_dimension_numbers<[1], [0], [0], [1], [0, 0, 1, 1], [], []>} : vector<272x32xbf16>, vector<32x128xbf16>, vector<272x128xf32> -> vector<272x128xf32>
    %c1 = arith.constant 1 : index
    %c0_4 = arith.constant 0 : index
    %4 = vector.load %arg1[%c1, %c0_4] : memref<296x32xbf16, #tpu.memory_space<vmem>>, vector<272x32xbf16>
    %c1_5 = arith.constant 1 : index
    %c0_6 = arith.constant 0 : index
    %c0_7 = arith.constant 0 : index
    %5 = vector.load %arg2[%c1_5, %c0_6, %c0_7] : memref<4x32x128xbf16, #tpu.memory_space<vmem>>, vector<1x32x128xbf16>
    %6 = vector.shape_cast %5 : vector<1x32x128xbf16> to vector<32x128xbf16>
    %cst_8 = arith.constant dense<0.000000e+00> : vector<272x128xf32>
    %7 = tpu.matmul %4, %6, %cst_8 {dimension_numbers = #tpu.dot_dimension_numbers<[1], [0], [0], [1], [0, 0, 1, 1], [], []>} : vector<272x32xbf16>, vector<32x128xbf16>, vector<272x128xf32> -> vector<272x128xf32>
    %8 = arith.addf %3, %7 : vector<272x128xf32>
    %c17 = arith.constant 17 : index
    %c0_9 = arith.constant 0 : index
    %9 = vector.load %arg1[%c17, %c0_9] : memref<296x32xbf16, #tpu.memory_space<vmem>>, vector<272x32xbf16>
    %c2 = arith.constant 2 : index
    %c0_10 = arith.constant 0 : index
    %c0_11 = arith.constant 0 : index
    %10 = vector.load %arg2[%c2, %c0_10, %c0_11] : memref<4x32x128xbf16, #tpu.memory_space<vmem>>, vector<1x32x128xbf16>
    %11 = vector.shape_cast %10 : vector<1x32x128xbf16> to vector<32x128xbf16>
    %cst_12 = arith.constant dense<0.000000e+00> : vector<272x128xf32>
    %12 = tpu.matmul %9, %11, %cst_12 {dimension_numbers = #tpu.dot_dimension_numbers<[1], [0], [0], [1], [0, 0, 1, 1], [], []>} : vector<272x32xbf16>, vector<32x128xbf16>, vector<272x128xf32> -> vector<272x128xf32>
    %13 = arith.addf %8, %12 : vector<272x128xf32>
    %c18 = arith.constant 18 : index
    %c0_13 = arith.constant 0 : index
    %14 = vector.load %arg1[%c18, %c0_13] : memref<296x32xbf16, #tpu.memory_space<vmem>>, vector<272x32xbf16>
    %c3 = arith.constant 3 : index
    %c0_14 = arith.constant 0 : index
    %c0_15 = arith.constant 0 : index
    %15 = vector.load %arg2[%c3, %c0_14, %c0_15] : memref<4x32x128xbf16, #tpu.memory_space<vmem>>, vector<1x32x128xbf16>
    %16 = vector.shape_cast %15 : vector<1x32x128xbf16> to vector<32x128xbf16>
    %cst_16 = arith.constant dense<0.000000e+00> : vector<272x128xf32>
    %17 = tpu.matmul %14, %16, %cst_16 {dimension_numbers = #tpu.dot_dimension_numbers<[1], [0], [0], [1], [0, 0, 1, 1], [], []>} : vector<272x32xbf16>, vector<32x128xbf16>, vector<272x128xf32> -> vector<272x128xf32>
    %18 = arith.addf %13, %17 : vector<272x128xf32>
    %c0_17 = arith.constant 0 : index
    %c0_18 = arith.constant 0 : index
    %19 = vector.load %arg3[%c0_17, %c0_18] : memref<2x128xf32, #tpu.memory_space<vmem>>, vector<1x128xf32>
    %20 = vector.broadcast %19 : vector<1x128xf32> to vector<272x128xf32>
    %21 = arith.mulf %18, %20 : vector<272x128xf32>
    %c1_19 = arith.constant 1 : index
    %c0_20 = arith.constant 0 : index
    %22 = vector.load %arg3[%c1_19, %c0_20] : memref<2x128xf32, #tpu.memory_space<vmem>>, vector<1x128xf32>
    %23 = vector.broadcast %22 : vector<1x128xf32> to vector<272x128xf32>
    %24 = arith.addf %21, %23 : vector<272x128xf32>
    %cst_21 = arith.constant 2.000000e-01 : f32
    %25 = vector.broadcast %cst_21 : f32 to vector<272x128xf32>
    %26 = arith.mulf %25, %24 : vector<272x128xf32>
    %27 = arith.maximumf %24, %26 : vector<272x128xf32>
    %28 = arith.truncf %27 : vector<272x128xf32> to vector<272x128xbf16>
    %c0_22 = arith.constant 0 : index
    %c0_23 = arith.constant 0 : index
    %29 = vector.load %arg4[%c0_22, %c0_23] : memref<272x128xbf16, #tpu.memory_space<vmem>>, vector<272x128xbf16>
    tpu.vector_store %arg4[%c0_22, %c0_23], %28 {strides = array<i32>} : memref<272x128xbf16, #tpu.memory_space<vmem>>, vector<272x128xbf16>,
    return
  }
  func.func @transform_0(%arg0: i32) -> (i32, i32) {
    %c0_i32 = arith.constant 0 : i32
    %c0_i32_0 = arith.constant 0 : i32
    return %arg0, %c0_i32 : i32, i32
  }
  func.func @transform_1(%arg0: i32) -> (i32, i32, i32) {
    %c0_i32 = arith.constant 0 : i32
    %c0_i32_0 = arith.constant 0 : i32
    %c0_i32_1 = arith.constant 0 : i32
    %c0_i32_2 = arith.constant 0 : i32
    return %c0_i32, %c0_i32_0, %c0_i32_1 : i32, i32, i32
  }
  func.func @transform_2(%arg0: i32) -> (i32, i32) {
    %c0_i32 = arith.constant 0 : i32
    %c0_i32_0 = arith.constant 0 : i32
    %c0_i32_1 = arith.constant 0 : i32
    return %c0_i32, %c0_i32_0 : i32, i32
  }
  func.func @transform_3(%arg0: i32) -> (i32, i32) {
    %c0_i32 = arith.constant 0 : i32
    %c0_i32_0 = arith.constant 0 : i32
    return %arg0, %c0_i32 : i32, i32
  }
}

module attributes {stable_mosaic.version = 11 : i64} {
  func.func @_conv_taps_kernel(%arg0: i32, %arg1: memref<88x64xbf16, #tpu.memory_space<vmem>>, %arg2: memref<4x64x128xbf16, #tpu.memory_space<vmem>>, %arg3: memref<2x128xf32, #tpu.memory_space<vmem>>, %arg4: memref<72x128xbf16, #tpu.memory_space<vmem>>) attributes {dimension_semantics = [#tpu.dimension_semantics<parallel>], iteration_bounds = array<i64: 2>, scalar_prefetch = 0 : i64, scratch_operands = 0 : i64, tpu.core_type = #tpu.core_type<tc>, window_params = [{transform_indices = @transform_0, window_bounds = array<i64: 88, 64>}, {pipeline_mode = #tpu.pipeline_mode<synchronous>, transform_indices = @transform_1, window_bounds = array<i64: 4, 64, 128>}, {pipeline_mode = #tpu.pipeline_mode<synchronous>, transform_indices = @transform_2, window_bounds = array<i64: 2, 128>}, {transform_indices = @transform_3, window_bounds = array<i64: 72, 128>}]} {
    %c0 = arith.constant 0 : index
    %c0_0 = arith.constant 0 : index
    %0 = vector.load %arg1[%c0, %c0_0] : memref<88x64xbf16, #tpu.memory_space<vmem>>, vector<72x64xbf16>
    %c0_1 = arith.constant 0 : index
    %c0_2 = arith.constant 0 : index
    %c0_3 = arith.constant 0 : index
    %1 = vector.load %arg2[%c0_1, %c0_2, %c0_3] : memref<4x64x128xbf16, #tpu.memory_space<vmem>>, vector<1x64x128xbf16>
    %2 = vector.shape_cast %1 : vector<1x64x128xbf16> to vector<64x128xbf16>
    %cst = arith.constant dense<0.000000e+00> : vector<72x128xf32>
    %3 = tpu.matmul %0, %2, %cst {dimension_numbers = #tpu.dot_dimension_numbers<[1], [0], [0], [1], [0, 0, 1, 1], [], []>} : vector<72x64xbf16>, vector<64x128xbf16>, vector<72x128xf32> -> vector<72x128xf32>
    %c1 = arith.constant 1 : index
    %c0_4 = arith.constant 0 : index
    %4 = vector.load %arg1[%c1, %c0_4] : memref<88x64xbf16, #tpu.memory_space<vmem>>, vector<72x64xbf16>
    %c1_5 = arith.constant 1 : index
    %c0_6 = arith.constant 0 : index
    %c0_7 = arith.constant 0 : index
    %5 = vector.load %arg2[%c1_5, %c0_6, %c0_7] : memref<4x64x128xbf16, #tpu.memory_space<vmem>>, vector<1x64x128xbf16>
    %6 = vector.shape_cast %5 : vector<1x64x128xbf16> to vector<64x128xbf16>
    %cst_8 = arith.constant dense<0.000000e+00> : vector<72x128xf32>
    %7 = tpu.matmul %4, %6, %cst_8 {dimension_numbers = #tpu.dot_dimension_numbers<[1], [0], [0], [1], [0, 0, 1, 1], [], []>} : vector<72x64xbf16>, vector<64x128xbf16>, vector<72x128xf32> -> vector<72x128xf32>
    %8 = arith.addf %3, %7 : vector<72x128xf32>
    %c9 = arith.constant 9 : index
    %c0_9 = arith.constant 0 : index
    %9 = vector.load %arg1[%c9, %c0_9] : memref<88x64xbf16, #tpu.memory_space<vmem>>, vector<72x64xbf16>
    %c2 = arith.constant 2 : index
    %c0_10 = arith.constant 0 : index
    %c0_11 = arith.constant 0 : index
    %10 = vector.load %arg2[%c2, %c0_10, %c0_11] : memref<4x64x128xbf16, #tpu.memory_space<vmem>>, vector<1x64x128xbf16>
    %11 = vector.shape_cast %10 : vector<1x64x128xbf16> to vector<64x128xbf16>
    %cst_12 = arith.constant dense<0.000000e+00> : vector<72x128xf32>
    %12 = tpu.matmul %9, %11, %cst_12 {dimension_numbers = #tpu.dot_dimension_numbers<[1], [0], [0], [1], [0, 0, 1, 1], [], []>} : vector<72x64xbf16>, vector<64x128xbf16>, vector<72x128xf32> -> vector<72x128xf32>
    %13 = arith.addf %8, %12 : vector<72x128xf32>
    %c10 = arith.constant 10 : index
    %c0_13 = arith.constant 0 : index
    %14 = vector.load %arg1[%c10, %c0_13] : memref<88x64xbf16, #tpu.memory_space<vmem>>, vector<72x64xbf16>
    %c3 = arith.constant 3 : index
    %c0_14 = arith.constant 0 : index
    %c0_15 = arith.constant 0 : index
    %15 = vector.load %arg2[%c3, %c0_14, %c0_15] : memref<4x64x128xbf16, #tpu.memory_space<vmem>>, vector<1x64x128xbf16>
    %16 = vector.shape_cast %15 : vector<1x64x128xbf16> to vector<64x128xbf16>
    %cst_16 = arith.constant dense<0.000000e+00> : vector<72x128xf32>
    %17 = tpu.matmul %14, %16, %cst_16 {dimension_numbers = #tpu.dot_dimension_numbers<[1], [0], [0], [1], [0, 0, 1, 1], [], []>} : vector<72x64xbf16>, vector<64x128xbf16>, vector<72x128xf32> -> vector<72x128xf32>
    %18 = arith.addf %13, %17 : vector<72x128xf32>
    %c0_17 = arith.constant 0 : index
    %c0_18 = arith.constant 0 : index
    %19 = vector.load %arg3[%c0_17, %c0_18] : memref<2x128xf32, #tpu.memory_space<vmem>>, vector<1x128xf32>
    %20 = vector.broadcast %19 : vector<1x128xf32> to vector<72x128xf32>
    %21 = arith.mulf %18, %20 : vector<72x128xf32>
    %c1_19 = arith.constant 1 : index
    %c0_20 = arith.constant 0 : index
    %22 = vector.load %arg3[%c1_19, %c0_20] : memref<2x128xf32, #tpu.memory_space<vmem>>, vector<1x128xf32>
    %23 = vector.broadcast %22 : vector<1x128xf32> to vector<72x128xf32>
    %24 = arith.addf %21, %23 : vector<72x128xf32>
    %cst_21 = arith.constant 2.000000e-01 : f32
    %25 = vector.broadcast %cst_21 : f32 to vector<72x128xf32>
    %26 = arith.mulf %25, %24 : vector<72x128xf32>
    %27 = arith.maximumf %24, %26 : vector<72x128xf32>
    %28 = arith.truncf %27 : vector<72x128xf32> to vector<72x128xbf16>
    %c0_22 = arith.constant 0 : index
    %c0_23 = arith.constant 0 : index
    %29 = vector.load %arg4[%c0_22, %c0_23] : memref<72x128xbf16, #tpu.memory_space<vmem>>, vector<72x128xbf16>
    tpu.vector_store %arg4[%c0_22, %c0_23], %28 {strides = array<i32>} : memref<72x128xbf16, #tpu.memory_space<vmem>>, vector<72x128xbf16>,
    return
  }
  func.func @transform_0(%arg0: i32) -> (i32, i32) {
    %c0_i32 = arith.constant 0 : i32
    %c0_i32_0 = arith.constant 0 : i32
    return %arg0, %c0_i32 : i32, i32
  }
  func.func @transform_1(%arg0: i32) -> (i32, i32, i32) {
    %c0_i32 = arith.constant 0 : i32
    %c0_i32_0 = arith.constant 0 : i32
    %c0_i32_1 = arith.constant 0 : i32
    %c0_i32_2 = arith.constant 0 : i32
    return %c0_i32, %c0_i32_0, %c0_i32_1 : i32, i32, i32
  }
  func.func @transform_2(%arg0: i32) -> (i32, i32) {
    %c0_i32 = arith.constant 0 : i32
    %c0_i32_0 = arith.constant 0 : i32
    %c0_i32_1 = arith.constant 0 : i32
    return %c0_i32, %c0_i32_0 : i32, i32
  }
  func.func @transform_3(%arg0: i32) -> (i32, i32) {
    %c0_i32 = arith.constant 0 : i32
    %c0_i32_0 = arith.constant 0 : i32
    return %arg0, %c0_i32 : i32, i32
  }
}

module attributes {stable_mosaic.version = 11 : i64} {
  func.func @_conv_taps_kernel(%arg0: i32, %arg1: memref<32x128xbf16, #tpu.memory_space<vmem>>, %arg2: memref<4x128x128xbf16, #tpu.memory_space<vmem>>, %arg3: memref<2x128xf32, #tpu.memory_space<vmem>>, %arg4: memref<24x128xbf16, #tpu.memory_space<vmem>>) attributes {dimension_semantics = [#tpu.dimension_semantics<parallel>], iteration_bounds = array<i64: 2>, scalar_prefetch = 0 : i64, scratch_operands = 0 : i64, tpu.core_type = #tpu.core_type<tc>, window_params = [{transform_indices = @transform_0, window_bounds = array<i64: 32, 128>}, {pipeline_mode = #tpu.pipeline_mode<synchronous>, transform_indices = @transform_1, window_bounds = array<i64: 4, 128, 128>}, {pipeline_mode = #tpu.pipeline_mode<synchronous>, transform_indices = @transform_2, window_bounds = array<i64: 2, 128>}, {transform_indices = @transform_3, window_bounds = array<i64: 24, 128>}]} {
    %c0 = arith.constant 0 : index
    %c0_0 = arith.constant 0 : index
    %0 = vector.load %arg1[%c0, %c0_0] : memref<32x128xbf16, #tpu.memory_space<vmem>>, vector<20x128xbf16>
    %c0_1 = arith.constant 0 : index
    %c0_2 = arith.constant 0 : index
    %c0_3 = arith.constant 0 : index
    %1 = vector.load %arg2[%c0_1, %c0_2, %c0_3] : memref<4x128x128xbf16, #tpu.memory_space<vmem>>, vector<1x128x128xbf16>
    %2 = vector.shape_cast %1 : vector<1x128x128xbf16> to vector<128x128xbf16>
    %cst = arith.constant dense<0.000000e+00> : vector<20x128xf32>
    %3 = tpu.matmul %0, %2, %cst {dimension_numbers = #tpu.dot_dimension_numbers<[1], [0], [0], [1], [0, 0, 1, 1], [], []>} : vector<20x128xbf16>, vector<128x128xbf16>, vector<20x128xf32> -> vector<20x128xf32>
    %c1 = arith.constant 1 : index
    %c0_4 = arith.constant 0 : index
    %4 = vector.load %arg1[%c1, %c0_4] : memref<32x128xbf16, #tpu.memory_space<vmem>>, vector<20x128xbf16>
    %c1_5 = arith.constant 1 : index
    %c0_6 = arith.constant 0 : index
    %c0_7 = arith.constant 0 : index
    %5 = vector.load %arg2[%c1_5, %c0_6, %c0_7] : memref<4x128x128xbf16, #tpu.memory_space<vmem>>, vector<1x128x128xbf16>
    %6 = vector.shape_cast %5 : vector<1x128x128xbf16> to vector<128x128xbf16>
    %cst_8 = arith.constant dense<0.000000e+00> : vector<20x128xf32>
    %7 = tpu.matmul %4, %6, %cst_8 {dimension_numbers = #tpu.dot_dimension_numbers<[1], [0], [0], [1], [0, 0, 1, 1], [], []>} : vector<20x128xbf16>, vector<128x128xbf16>, vector<20x128xf32> -> vector<20x128xf32>
    %8 = arith.addf %3, %7 : vector<20x128xf32>
    %c5 = arith.constant 5 : index
    %c0_9 = arith.constant 0 : index
    %9 = vector.load %arg1[%c5, %c0_9] : memref<32x128xbf16, #tpu.memory_space<vmem>>, vector<20x128xbf16>
    %c2 = arith.constant 2 : index
    %c0_10 = arith.constant 0 : index
    %c0_11 = arith.constant 0 : index
    %10 = vector.load %arg2[%c2, %c0_10, %c0_11] : memref<4x128x128xbf16, #tpu.memory_space<vmem>>, vector<1x128x128xbf16>
    %11 = vector.shape_cast %10 : vector<1x128x128xbf16> to vector<128x128xbf16>
    %cst_12 = arith.constant dense<0.000000e+00> : vector<20x128xf32>
    %12 = tpu.matmul %9, %11, %cst_12 {dimension_numbers = #tpu.dot_dimension_numbers<[1], [0], [0], [1], [0, 0, 1, 1], [], []>} : vector<20x128xbf16>, vector<128x128xbf16>, vector<20x128xf32> -> vector<20x128xf32>
    %13 = arith.addf %8, %12 : vector<20x128xf32>
    %c6 = arith.constant 6 : index
    %c0_13 = arith.constant 0 : index
    %14 = vector.load %arg1[%c6, %c0_13] : memref<32x128xbf16, #tpu.memory_space<vmem>>, vector<20x128xbf16>
    %c3 = arith.constant 3 : index
    %c0_14 = arith.constant 0 : index
    %c0_15 = arith.constant 0 : index
    %15 = vector.load %arg2[%c3, %c0_14, %c0_15] : memref<4x128x128xbf16, #tpu.memory_space<vmem>>, vector<1x128x128xbf16>
    %16 = vector.shape_cast %15 : vector<1x128x128xbf16> to vector<128x128xbf16>
    %cst_16 = arith.constant dense<0.000000e+00> : vector<20x128xf32>
    %17 = tpu.matmul %14, %16, %cst_16 {dimension_numbers = #tpu.dot_dimension_numbers<[1], [0], [0], [1], [0, 0, 1, 1], [], []>} : vector<20x128xbf16>, vector<128x128xbf16>, vector<20x128xf32> -> vector<20x128xf32>
    %18 = arith.addf %13, %17 : vector<20x128xf32>
    %c0_17 = arith.constant 0 : index
    %c0_18 = arith.constant 0 : index
    %19 = vector.load %arg3[%c0_17, %c0_18] : memref<2x128xf32, #tpu.memory_space<vmem>>, vector<1x128xf32>
    %20 = vector.broadcast %19 : vector<1x128xf32> to vector<20x128xf32>
    %21 = arith.mulf %18, %20 : vector<20x128xf32>
    %c1_19 = arith.constant 1 : index
    %c0_20 = arith.constant 0 : index
    %22 = vector.load %arg3[%c1_19, %c0_20] : memref<2x128xf32, #tpu.memory_space<vmem>>, vector<1x128xf32>
    %23 = vector.broadcast %22 : vector<1x128xf32> to vector<20x128xf32>
    %24 = arith.addf %21, %23 : vector<20x128xf32>
    %cst_21 = arith.constant 2.000000e-01 : f32
    %25 = vector.broadcast %cst_21 : f32 to vector<20x128xf32>
    %26 = arith.mulf %25, %24 : vector<20x128xf32>
    %27 = arith.maximumf %24, %26 : vector<20x128xf32>
    %28 = arith.truncf %27 : vector<20x128xf32> to vector<20x128xbf16>
    %c0_22 = arith.constant 0 : index
    %c0_23 = arith.constant 0 : index
    %29 = vector.load %arg4[%c0_22, %c0_23] : memref<24x128xbf16, #tpu.memory_space<vmem>>, vector<20x128xbf16>
    tpu.vector_store %arg4[%c0_22, %c0_23], %28 {strides = array<i32>} : memref<24x128xbf16, #tpu.memory_space<vmem>>, vector<20x128xbf16>,
    %cst_24 = arith.constant 0.000000e+00 : bf16
    %30 = vector.broadcast %cst_24 : bf16 to vector<4x128xbf16>
    %c20 = arith.constant 20 : index
    %c0_25 = arith.constant 0 : index
    %31 = vector.load %arg4[%c20, %c0_25] : memref<24x128xbf16, #tpu.memory_space<vmem>>, vector<4x128xbf16>
    tpu.vector_store %arg4[%c20, %c0_25], %30 {strides = array<i32>} : memref<24x128xbf16, #tpu.memory_space<vmem>>, vector<4x128xbf16>,
    return
  }
  func.func @transform_0(%arg0: i32) -> (i32, i32) {
    %c0_i32 = arith.constant 0 : i32
    %c0_i32_0 = arith.constant 0 : i32
    return %arg0, %c0_i32 : i32, i32
  }
  func.func @transform_1(%arg0: i32) -> (i32, i32, i32) {
    %c0_i32 = arith.constant 0 : i32
    %c0_i32_0 = arith.constant 0 : i32
    %c0_i32_1 = arith.constant 0 : i32
    %c0_i32_2 = arith.constant 0 : i32
    return %c0_i32, %c0_i32_0, %c0_i32_1 : i32, i32, i32
  }
  func.func @transform_2(%arg0: i32) -> (i32, i32) {
    %c0_i32 = arith.constant 0 : i32
    %c0_i32_0 = arith.constant 0 : i32
    %c0_i32_1 = arith.constant 0 : i32
    return %c0_i32, %c0_i32_0 : i32, i32
  }
  func.func @transform_3(%arg0: i32) -> (i32, i32) {
    %c0_i32 = arith.constant 0 : i32
    %c0_i32_0 = arith.constant 0 : i32
    return %arg0, %c0_i32 : i32, i32
  }
}

module attributes {stable_mosaic.version = 11 : i64} {
  func.func @_gemm_kernel(%arg0: i32, %arg1: memref<8x1024xbf16, #tpu.memory_space<vmem>>, %arg2: memref<1024x128xbf16, #tpu.memory_space<vmem>>, %arg3: memref<2x128xf32, #tpu.memory_space<vmem>>, %arg4: memref<8x128xf32, #tpu.memory_space<vmem>>) attributes {dimension_semantics = [#tpu.dimension_semantics<parallel>], iteration_bounds = array<i64: 1>, scalar_prefetch = 0 : i64, scratch_operands = 0 : i64, tpu.core_type = #tpu.core_type<tc>, window_params = [{transform_indices = @transform_0, window_bounds = array<i64: 8, 1024>}, {pipeline_mode = #tpu.pipeline_mode<synchronous>, transform_indices = @transform_1, window_bounds = array<i64: 1024, 128>}, {pipeline_mode = #tpu.pipeline_mode<synchronous>, transform_indices = @transform_2, window_bounds = array<i64: 2, 128>}, {transform_indices = @transform_3, window_bounds = array<i64: 8, 128>}]} {
    %c0 = arith.constant 0 : index
    %c0_0 = arith.constant 0 : index
    %0 = vector.load %arg1[%c0, %c0_0] : memref<8x1024xbf16, #tpu.memory_space<vmem>>, vector<8x1024xbf16>
    %c0_1 = arith.constant 0 : index
    %c0_2 = arith.constant 0 : index
    %1 = vector.load %arg2[%c0_1, %c0_2] : memref<1024x128xbf16, #tpu.memory_space<vmem>>, vector<1024x128xbf16>
    %cst = arith.constant dense<0.000000e+00> : vector<8x128xf32>
    %2 = tpu.matmul %0, %1, %cst {dimension_numbers = #tpu.dot_dimension_numbers<[1], [0], [0], [1], [0, 0, 1, 1], [], []>} : vector<8x1024xbf16>, vector<1024x128xbf16>, vector<8x128xf32> -> vector<8x128xf32>
    %c0_3 = arith.constant 0 : index
    %c0_4 = arith.constant 0 : index
    %3 = vector.load %arg3[%c0_3, %c0_4] : memref<2x128xf32, #tpu.memory_space<vmem>>, vector<1x128xf32>
    %4 = vector.broadcast %3 : vector<1x128xf32> to vector<8x128xf32>
    %5 = arith.mulf %2, %4 : vector<8x128xf32>
    %c1 = arith.constant 1 : index
    %c0_5 = arith.constant 0 : index
    %6 = vector.load %arg3[%c1, %c0_5] : memref<2x128xf32, #tpu.memory_space<vmem>>, vector<1x128xf32>
    %7 = vector.broadcast %6 : vector<1x128xf32> to vector<8x128xf32>
    %8 = arith.addf %5, %7 : vector<8x128xf32>
    %c0_6 = arith.constant 0 : index
    %c0_7 = arith.constant 0 : index
    %9 = vector.load %arg4[%c0_6, %c0_7] : memref<8x128xf32, #tpu.memory_space<vmem>>, vector<8x128xf32>
    tpu.vector_store %arg4[%c0_6, %c0_7], %8 {strides = array<i32>} : memref<8x128xf32, #tpu.memory_space<vmem>>, vector<8x128xf32>,
    return
  }
  func.func @transform_0(%arg0: i32) -> (i32, i32) {
    %c0_i32 = arith.constant 0 : i32
    %c0_i32_0 = arith.constant 0 : i32
    return %arg0, %c0_i32 : i32, i32
  }
  func.func @transform_1(%arg0: i32) -> (i32, i32) {
    %c0_i32 = arith.constant 0 : i32
    %c0_i32_0 = arith.constant 0 : i32
    %c0_i32_1 = arith.constant 0 : i32
    return %c0_i32, %c0_i32_0 : i32, i32
  }
  func.func @transform_2(%arg0: i32) -> (i32, i32) {
    %c0_i32 = arith.constant 0 : i32
    %c0_i32_0 = arith.constant 0 : i32
    %c0_i32_1 = arith.constant 0 : i32
    return %c0_i32, %c0_i32_0 : i32, i32
  }
  func.func @transform_3(%arg0: i32) -> (i32, i32) {
    %c0_i32 = arith.constant 0 : i32
    %c0_i32_0 = arith.constant 0 : i32
    return %arg0, %c0_i32 : i32, i32
  }
}

</mosaic_0001>

<llo_original>
// kernel: tpu_custom_call.1
$region0: #{tpu_custom_call.1}
  #allocation0 [shape = 'u32[]', space=smem, size = 0x4, offset = 0x4, fixed_abs, tag = 'smem constant byte address 0x4 - core index']
  #allocation1 [shape = 'u32[72,128]{1,0:T(1,128)}', space=vmem, size = 0x9000, scoped, tag = 'internal scratch']
  %s0 = inlined_call_operand.hbm [shape: f32[8,128], index: 0, kind: input, shape index: {}]
  %s1 = inlined_call_operand.hbm [shape: f32[16,128], index: 1, kind: output, shape index: {}]
  %s2 = sld [smem:[#allocation0]]
  $region41: #{tpu_custom_call.1} parent=0
    _
  %s4 = ssub.s32 1, %s2
  %s5 = scalar_select 0, %s4, %s2
  $region1: #{tpu_custom_call.1} parent=0
    #allocation2 [shape = 'u8[4096]{0}', space=vmem, size = 0x1000, scoped, tag = 'input window, operand 0, single buffered']
    #allocation3 [shape = 's32[2]{0}', space=sflag, size = 0x8, scoped, tag = 'scoped memory for tpu_custom_call.1']
    #allocation4 [shape = 's32[2]{0}', space=sflag, size = 0x8, scoped, tag = 'scoped memory for tpu_custom_call.1']
    #allocation5 [shape = 'u8[8192]{0}', space=vmem, size = 0x2000, scoped, tag = 'output window, operand 0']
    %6 = vsyncpa [#allocation3], 0
    %7 = vsyncpa [#allocation4], 0
    %s8 = scalar_lea.sflag [#allocation4], 1
    %9 = vsyncpa %s8, 0
    loop: start=0, step=1, limit=4
    $region2: #{tpu_custom_call.1} parent=1 // loop_pre_header
      _
    $region3: #{tpu_custom_call.1} parent=1 // loop_header
      %s11 = sphi 0, %s15
      %p12 = scmp.ge.s32.totalorder %s11, 4
      %s19 = sphi 0, %s19
      %s21 = sphi 0, %s19
      %s22 = sphi 0, %s21
      %s36 = sphi 0, %s22
      %s42 = sphi 0, %s44
      %s45 = sphi 0, %s42
      %s46 = sphi 0, %s45
      %s62 = sphi 0, %s46
    $region4: #{tpu_custom_call.1} parent=1 // loop_header_branch
      %14 = sbr.rel (%p12) target = $region8
    $region5: #{tpu_custom_call.1} parent=1 // loop_body
      %s16 = ssub.s32 %s11, 1
      %s17 = ssub.s32 %s11, 2
      %s18 = sadd.s32 %s11, 1
      %s20 = sadd.s32 %s19, 1
      %p23 = scmp.eq.s32.totalorder %s11, 1
      %p24 = scmp.ne.s32.totalorder %s19, %s21
      %p25 = scmp.eq.s32.totalorder %s11, 0
      %p26 = por %p24, %p25
      %p27 = scmp.ne.s32.totalorder %s19, %s21
      %p28 = scmp.eq.s32.totalorder %s16, 1
      %p29 = por %p27, %p28
      %p30 = scmp.ne.s32.totalorder %s21, %s22
      %p31 = scmp.eq.s32.totalorder %s16, 0
      %p32 = por %p30, %p31
      %p33 = scmp.ne.s32.totalorder %s21, %s22
      %p34 = scmp.eq.s32.totalorder %s17, 1
      %p35 = por %p33, %p34
      %p37 = scmp.ne.s32.totalorder %s22, %s36
      %p38 = scmp.eq.s32.totalorder %s17, 0
      %p39 = por %p37, %p38
      %s40 = ssub.s32 %s11, %s18
      %p41 = scmp.eq.s32.totalorder %s40, 0
      %s43 = sadd.s32 %s42, 1
      %s44 = scalar_select %p41, %s42, %s43
      %p47 = pneg %p41
      %p48 = scmp.eq.s32.totalorder %s11, 1
      %p49 = por %p47, %p48
      %p50 = scmp.ne.s32.totalorder %s42, %s45
      %p51 = scmp.eq.s32.totalorder %s11, 0
      %p52 = por %p50, %p51
      %p53 = scmp.ne.s32.totalorder %s42, %s45
      %p54 = scmp.eq.s32.totalorder %s16, 1
      %p55 = por %p53, %p54
      %p56 = scmp.ne.s32.totalorder %s45, %s46
      %p57 = scmp.eq.s32.totalorder %s16, 0
      %p58 = por %p56, %p57
      %p59 = scmp.ne.s32.totalorder %s45, %s46
      %p60 = scmp.eq.s32.totalorder %s17, 1
      %p61 = por %p59, %p60
      %p63 = scmp.ne.s32.totalorder %s46, %s62
      %p64 = scmp.eq.s32.totalorder %s17, 0
      %p65 = por %p63, %p64
      %p66 = scmp.le.s32.totalorder 1, %s11
      %p67 = scmp.lt.s32.totalorder %s11, 3
      %p68 = pnand %p66, %p67
      %p69 = pneg %p68
      // Predicated region
      $region9: #{tpu_custom_call.1} parent=5 // pred_check
        _
      $region10: #{tpu_custom_call.1} parent=5 // pred_check_branch
        %71 = sbr.rel (%p68) target = $region12
      $region11: #{tpu_custom_call.1} parent=5 // pred_region
        %s72 = ssub.s32 %s11, 1
        // Predicated region
        $region13: #{tpu_custom_call.1} parent=11 // pred_check
          %p73 = pneg %p32
        $region14: #{tpu_custom_call.1} parent=11 // pred_check_branch
          %75 = sbr.rel (%p73) target = $region16
        $region15: #{tpu_custom_call.1} parent=11 // pred_region
          %77 = vsyncadd [#allocation3], 0
          %s79 = sshll.u32 %s0, 4
          %s80 = int_to_ptr.hbm [resolvable:$true] %s79
          %s81 = sshll.u32 [#allocation2], 4
          %s82 = int_to_ptr.vmem [resolvable:$true] %s81
          %84 = dma.hbm_to_vmem [thread:$0]  %s80, 128, %s82, [#allocation3]
        $region16: #{tpu_custom_call.1} parent=11 // pred_fallthru
          _
      $region12: #{tpu_custom_call.1} parent=5 // pred_fallthru
        _
      %p85 = scmp.lt.s32.totalorder %s11, 2
      // Predicated region
      $region17: #{tpu_custom_call.1} parent=5 // pred_check
        %p86 = pneg %p85
      $region18: #{tpu_custom_call.1} parent=5 // pred_check_branch
        %88 = sbr.rel (%p86) target = $region20
      $region19: #{tpu_custom_call.1} parent=5 // pred_region
        _
      $region20: #{tpu_custom_call.1} parent=5 // pred_fallthru
        _
      %p89 = scmp.le.s32.totalorder 1, %s11
      %p90 = scmp.lt.s32.totalorder %s11, 3
      %p91 = pnand %p89, %p90
      %p92 = pneg %p91
      // Predicated region
      $region21: #{tpu_custom_call.1} parent=5 // pred_check
        _
      $region22: #{tpu_custom_call.1} parent=5 // pred_check_branch
        %94 = sbr.rel (%p91) target = $region24
      $region23: #{tpu_custom_call.1} parent=5 // pred_region
        %s95 = ssub.s32 %s11, 1
        // Predicated region
        $region25: #{tpu_custom_call.1} parent=23 // pred_check
          %p96 = pneg %p32
        $region26: #{tpu_custom_call.1} parent=23 // pred_check_branch
          %98 = sbr.rel (%p96) target = $region28
        $region27: #{tpu_custom_call.1} parent=23 // pred_region
          %100 = dma.done [#allocation3], 128
        $region28: #{tpu_custom_call.1} parent=23 // pred_fallthru
          _
        %p101 = pneg %p32
        %p102 = pneg %p29
        %p103 = pneg %p58
        %p104 = pneg %p55
        %s105 = sand.u32 %s45, 1
        %s106 = scalar_lea.sflag [#allocation4], %s105
        %s107 = sand.u32 %s45, 1
        %s108 = smul.addr %s107, 8
        %s109 = scalar_lea.vmem [#allocation5], %s108
        %v110 = vld [vmem:[#allocation2] sm:$0xff]
        %v111 = vadd.f32 %v110, 1.0
        %112 = vst [vmem:[%s109] sm:$0xff] %v111
        %s113 = sand.u32 %s45, 1
        %s114 = scalar_lea.sflag [#allocation4], %s113
        %s115 = sand.u32 %s45, 1
        %s116 = smul.addr %s115, 8
        %s117 = scalar_lea.vmem [#allocation5], %s116
        // Predicated region
        $region29: #{tpu_custom_call.1} parent=23 // pred_check
          %p118 = pneg %p55
        $region30: #{tpu_custom_call.1} parent=23 // pred_check_branch
          %120 = sbr.rel (%p118) target = $region32
        $region31: #{tpu_custom_call.1} parent=23 // pred_region
          %122 = vsyncadd %s114, 0
          %s123 = smul.addr %s16, 8
          %s124 = scalar_lea.hbm %s1, %s123
          %s126 = sshll.u32 %s117, 4
          %s127 = int_to_ptr.vmem [resolvable:$true] %s126
          %s128 = sshll.u32 %s124, 4
          %s129 = int_to_ptr.hbm [resolvable:$true] %s128
          %131 = dma.vmem_to_hbm [thread:$0]  %s127, 128, %s129, %s114
        $region32: #{tpu_custom_call.1} parent=23 // pred_fallthru
          _
      $region24: #{tpu_custom_call.1} parent=5 // pred_fallthru
        _
      %p132 = scmp.le.s32.totalorder 2, %s11
      // Predicated region
      $region33: #{tpu_custom_call.1} parent=5 // pred_check
        %p133 = pneg %p132
      $region34: #{tpu_custom_call.1} parent=5 // pred_check_branch
        %135 = sbr.rel (%p133) target = $region36
      $region35: #{tpu_custom_call.1} parent=5 // pred_region
        %s136 = ssub.s32 %s11, 2
        // Predicated region
        $region37: #{tpu_custom_call.1} parent=35 // pred_check
          %p137 = pneg %p61
        $region38: #{tpu_custom_call.1} parent=35 // pred_check_branch
          %139 = sbr.rel (%p137) target = $region40
        $region39: #{tpu_custom_call.1} parent=35 // pred_region
          %s140 = sand.u32 %s46, 1
          %s141 = scalar_lea.sflag [#allocation4], %s140
          %s142 = sand.u32 %s46, 1
          %s143 = smul.addr %s142, 8
          %s144 = scalar_lea.vmem [#allocation5], %s143
          %146 = dma.done %s141, 128
        $region40: #{tpu_custom_call.1} parent=35 // pred_fallthru
          _
      $region36: #{tpu_custom_call.1} parent=5 // pred_fallthru
        _
    $region6: #{tpu_custom_call.1} parent=1 // loop_footer
      %s15 = sadd.s32 1, %s11
    $region7: #{tpu_custom_call.1} parent=1 // loop_footer_branch
      %10 = sbr.rel target = $region3
    $region8: #{tpu_custom_call.1} parent=1 // loop_exit
      _
    %147 = vsyncpa [#allocation3], 1
    %s148 = scalar_lea.sflag [#allocation3], 1
    %149 = vsyncpa %s148, 1
    %150 = vsyncpa [#allocation4], 1
    %s151 = scalar_lea.sflag [#allocation4], 1
    %152 = vsyncpa %s151, 1

// kernel: discriminator_wgan_forward.5
$region0: #{discriminator_wgan_forward.5}
  #allocation0 [shape = 'u32[]', space=smem, size = 0x4, offset = 0x4, fixed_abs, tag = 'smem constant byte address 0x4 - core index']
  #allocation1 [shape = 'u32[72,128]{1,0:T(1,128)}', space=vmem, size = 0x9000, scoped, tag = 'internal scratch']
  %s0 = inlined_call_operand.vmem [shape: bf16[2048,48], index: 0, kind: input, shape index: {}]
  %s1 = inlined_call_operand.vmem [shape: bf16[48,128], index: 1, kind: input, shape index: {}]
  %s2 = inlined_call_operand.vmem [shape: f32[2,128], index: 2, kind: input, shape index: {}]
  %s3 = inlined_call_operand.vmem [shape: bf16[2048,128], index: 3, kind: output, shape index: {}]
  %s4 = sld [smem:[#allocation0]]
  $region45: #{discriminator_wgan_forward.5} parent=0
    _
  %s6 = ssub.s32 1, %s4
  %s7 = scalar_select 0, %s6, %s4
  loop: start=0, step=1, limit=4
  $region2: #{discriminator_wgan_forward.5} parent=0 // loop_pre_header
    _
  $region3: #{discriminator_wgan_forward.5} parent=0 // loop_header
    %s9 = sphi 0, %s13
    %p10 = scmp.ge.s32.totalorder %s9, 4
    %s19 = sphi 0, %s21
    %s22 = sphi 0, %s19
    %s23 = sphi 0, %s22
    %s39 = sphi 0, %s23
    %s43 = sphi 0, %s43
    %s45 = sphi 0, %s43
    %s46 = sphi 0, %s45
    %s60 = sphi 0, %s46
    %s64 = sphi 0, %s64
    %s66 = sphi 0, %s64
    %s67 = sphi 0, %s66
    %s81 = sphi 0, %s67
    %s87 = sphi 0, %s89
    %s90 = sphi 0, %s87
    %s91 = sphi 0, %s90
    %s107 = sphi 0, %s91
  $region4: #{discriminator_wgan_forward.5} parent=0 // loop_header_branch
    %12 = sbr.rel (%p10) target = $region8
  $region5: #{discriminator_wgan_forward.5} parent=0 // loop_body
    %s14 = ssub.s32 %s9, 1
    %s15 = ssub.s32 %s9, 2
    %s16 = sadd.s32 %s9, 1
    %s17 = ssub.s32 %s9, %s16
    %p18 = scmp.eq.s32.totalorder %s17, 0
    %s20 = sadd.s32 %s19, 1
    %s21 = scalar_select %p18, %s19, %s20
    %p24 = pneg %p18
    %p25 = scmp.eq.s32.totalorder %s9, 1
    %p26 = por %p24, %p25
    %p27 = scmp.ne.s32.totalorder %s19, %s22
    %p28 = scmp.eq.s32.totalorder %s9, 0
    %p29 = por %p27, %p28
    %p30 = scmp.ne.s32.totalorder %s19, %s22
    %p31 = scmp.eq.s32.totalorder %s14, 1
    %p32 = por %p30, %p31
    %p33 = scmp.ne.s32.totalorder %s22, %s23
    %p34 = scmp.eq.s32.totalorder %s14, 0
    %p35 = por %p33, %p34
    %p36 = scmp.ne.s32.totalorder %s22, %s23
    %p37 = scmp.eq.s32.totalorder %s15, 1
    %p38 = por %p36, %p37
    %p40 = scmp.ne.s32.totalorder %s23, %s39
    %p41 = scmp.eq.s32.totalorder %s15, 0
    %p42 = por %p40, %p41
    %s44 = sadd.s32 %s43, 1
    %p47 = scmp.eq.s32.totalorder %s9, 1
    %p48 = scmp.ne.s32.totalorder %s43, %s45
    %p49 = scmp.eq.s32.totalorder %s9, 0
    %p50 = por %p48, %p49
    %p51 = scmp.ne.s32.totalorder %s43, %s45
    %p52 = scmp.eq.s32.totalorder %s14, 1
    %p53 = por %p51, %p52
    %p54 = scmp.ne.s32.totalorder %s45, %s46
    %p55 = scmp.eq.s32.totalorder %s14, 0
    %p56 = por %p54, %p55
    %p57 = scmp.ne.s32.totalorder %s45, %s46
    %p58 = scmp.eq.s32.totalorder %s15, 1
    %p59 = por %p57, %p58
    %p61 = scmp.ne.s32.totalorder %s46, %s60
    %p62 = scmp.eq.s32.totalorder %s15, 0
    %p63 = por %p61, %p62
    %s65 = sadd.s32 %s64, 1
    %p68 = scmp.eq.s32.totalorder %s9, 1
    %p69 = scmp.ne.s32.totalorder %s64, %s66
    %p70 = scmp.eq.s32.totalorder %s9, 0
    %p71 = por %p69, %p70
    %p72 = scmp.ne.s32.totalorder %s64, %s66
    %p73 = scmp.eq.s32.totalorder %s14, 1
    %p74 = por %p72, %p73
    %p75 = scmp.ne.s32.totalorder %s66, %s67
    %p76 = scmp.eq.s32.totalorder %s14, 0
    %p77 = por %p75, %p76
    %p78 = scmp.ne.s32.totalorder %s66, %s67
    %p79 = scmp.eq.s32.totalorder %s15, 1
    %p80 = por %p78, %p79
    %p82 = scmp.ne.s32.totalorder %s67, %s81
    %p83 = scmp.eq.s32.totalorder %s15, 0
    %p84 = por %p82, %p83
    %s85 = ssub.s32 %s9, %s16
    %p86 = scmp.eq.s32.totalorder %s85, 0
    %s88 = sadd.s32 %s87, 1
    %s89 = scalar_select %p86, %s87, %s88
    %p92 = pneg %p86
    %p93 = scmp.eq.s32.totalorder %s9, 1
    %p94 = por %p92, %p93
    %p95 = scmp.ne.s32.totalorder %s87, %s90
    %p96 = scmp.eq.s32.totalorder %s9, 0
    %p97 = por %p95, %p96
    %p98 = scmp.ne.s32.totalorder %s87, %s90
    %p99 = scmp.eq.s32.totalorder %s14, 1
    %p100 = por %p98, %p99
    %p101 = scmp.ne.s32.totalorder %s90, %s91
    %p102 = scmp.eq.s32.totalorder %s14, 0
    %p103 = por %p101, %p102
    %p104 = scmp.ne.s32.totalorder %s90, %s91
    %p105 = scmp.eq.s32.totalorder %s15, 1
    %p106 = por %p104, %p105
    %p108 = scmp.ne.s32.totalorder %s91, %s107
    %p109 = scmp.eq.s32.totalorder %s15, 0
    %p110 = por %p108, %p109
    %p111 = scmp.le.s32.totalorder 1, %s9
    %p112 = scmp.lt.s32.totalorder %s9, 3
    %p113 = pnand %p111, %p112
    %p114 = pneg %p113
    // Predicated region
    $region9: #{discriminator_wgan_forward.5} parent=5 // pred_check
      _
    $region10: #{discriminator_wgan_forward.5} parent=5 // pred_check_branch
      %116 = sbr.rel (%p113) target = $region12
    $region11: #{discriminator_wgan_forward.5} parent=5 // pred_region
      %s117 = ssub.s32 %s9, 1
      // Predicated region
      $region13: #{discriminator_wgan_forward.5} parent=11 // pred_check
        %p118 = pneg %p56
      $region14: #{discriminator_wgan_forward.5} parent=11 // pred_check_branch
        %120 = sbr.rel (%p118) target = $region16
      $region15: #{discriminator_wgan_forward.5} parent=11 // pred_region
        _
      $region16: #{discriminator_wgan_forward.5} parent=11 // pred_fallthru
        _
      // Predicated region
      $region17: #{discriminator_wgan_forward.5} parent=11 // pred_check
        %p121 = pneg %p77
      $region18: #{discriminator_wgan_forward.5} parent=11 // pred_check_branch
        %123 = sbr.rel (%p121) target = $region20
      $region19: #{discriminator_wgan_forward.5} parent=11 // pred_region
        _
      $region20: #{discriminator_wgan_forward.5} parent=11 // pred_fallthru
        _
    $region12: #{discriminator_wgan_forward.5} parent=5 // pred_fallthru
      _
    %p124 = scmp.lt.s32.totalorder %s9, 2
    // Predicated region
    $region21: #{discriminator_wgan_forward.5} parent=5 // pred_check
      %p125 = pneg %p124
    $region22: #{discriminator_wgan_forward.5} parent=5 // pred_check_branch
      %127 = sbr.rel (%p125) target = $region24
    $region23: #{discriminator_wgan_forward.5} parent=5 // pred_region
      // Predicated region
      $region25: #{discriminator_wgan_forward.5} parent=23 // pred_check
        %p128 = pneg %p29
      $region26: #{discriminator_wgan_forward.5} parent=23 // pred_check_branch
        %130 = sbr.rel (%p128) target = $region28
      $region27: #{discriminator_wgan_forward.5} parent=23 // pred_region
        %s131 = smul.u32 128, %s9
        %p132 = scmp.lt.s32.totalorder %s131, 255
        %s133 = scalar_select %p132, %s131, 255
        %s134 = smul.addr %s133, 4
        %s135 = scalar_lea.vmem %s0, %s134
        %s136 = smul.u32 128, %s9
      $region28: #{discriminator_wgan_forward.5} parent=23 // pred_fallthru
        _
    $region24: #{discriminator_wgan_forward.5} parent=5 // pred_fallthru
      _
    %p137 = scmp.le.s32.totalorder 1, %s9
    %p138 = scmp.lt.s32.totalorder %s9, 3
    %p139 = pnand %p137, %p138
    %p140 = pneg %p139
    // Predicated region
    $region29: #{discriminator_wgan_forward.5} parent=5 // pred_check
      _
    $region30: #{discriminator_wgan_forward.5} parent=5 // pred_check_branch
      %142 = sbr.rel (%p139) target = $region32
    $region31: #{discriminator_wgan_forward.5} parent=5 // pred_region
      %s143 = ssub.s32 %s9, 1
      %s144 = smul.u32 128, %s14
      %p145 = scmp.lt.s32.totalorder %s144, 255
      %s146 = scalar_select %p145, %s144, 255
      %s147 = smul.addr %s146, 4
      %s148 = scalar_lea.vmem %s0, %s147
      %p149 = pneg %p35
      %p150 = pneg %p32
      %p151 = pneg %p56
      %p152 = pneg %p53
      %p153 = pneg %p77
      %p154 = pneg %p74
      %p155 = pneg %p103
      %p156 = pneg %p100
      %s157 = smul.u32 128, %s14
      %p158 = scmp.lt.s32.totalorder %s157, 255
      %s159 = scalar_select %p158, %s157, 255
      %s160 = smul.addr %s159, 4
      %s161 = scalar_lea.vmem %s3, %s160
      %s162 = smul.u32 128, %s14
      %p163 = scmp.lt.s32.totalorder %s162, 255
      %s164 = scalar_select %p163, %s162, 255
      %s165 = smul.addr %s164, 4
      %s166 = scalar_lea.vmem %s0, %s165
      %s167 = smul.u32 128, %s14
      %s168 = smul.u32 128, %s14
      %p169 = scmp.lt.s32.totalorder %s168, 255
      %s170 = scalar_select %p169, %s168, 255
      %s171 = smul.addr %s170, 4
      %s172 = scalar_lea.vmem %s3, %s171
      %s173 = smul.u32 128, %s14
      %v175 = vld [vmem:[%s166] sm:$0xf]
      %v176 = vld [vmem:[%s166 + $0x4] sm:$0xf]
      %v177 = vld [vmem:[%s166 + $0x8] sm:$0xf]
      %v178 = vld [vmem:[%s166 + $0xc] sm:$0xf]
      %v179 = vld [vmem:[%s166 + $0x10] sm:$0xf]
      %v180 = vld [vmem:[%s166 + $0x14] sm:$0xf]
      %v181 = vld [vmem:[%s166 + $0x18] sm:$0xf]
      %v182 = vld [vmem:[%s166 + $0x1c] sm:$0xf]
      %v183 = vld [vmem:[%s166 + $0x20] sm:$0xf]
      %v184 = vld [vmem:[%s166 + $0x24] sm:$0xf]
      %v185 = vld [vmem:[%s166 + $0x28] sm:$0xf]
      %v186 = vld [vmem:[%s166 + $0x2c] sm:$0xf]
      %v187 = vld [vmem:[%s166 + $0x30] sm:$0xf]
      %v188 = vld [vmem:[%s166 + $0x34] sm:$0xf]
      %v189 = vld [vmem:[%s166 + $0x38] sm:$0xf]
      %v190 = vld [vmem:[%s166 + $0x3c] sm:$0xf]
      %v191 = vld [vmem:[%s166 + $0x40] sm:$0xf]
      %v192 = vld [vmem:[%s166 + $0x44] sm:$0xf]
      %v193 = vld [vmem:[%s166 + $0x48] sm:$0xf]
      %v194 = vld [vmem:[%s166 + $0x4c] sm:$0xf]
      %v195 = vld [vmem:[%s166 + $0x50] sm:$0xf]
      %v196 = vld [vmem:[%s166 + $0x54] sm:$0xf]
      %v197 = vld [vmem:[%s166 + $0x58] sm:$0xf]
      %v198 = vld [vmem:[%s166 + $0x5c] sm:$0xf]
      %v199 = vld [vmem:[%s166 + $0x60] sm:$0xf]
      %v200 = vld [vmem:[%s166 + $0x64] sm:$0xf]
      %v201 = vld [vmem:[%s166 + $0x68] sm:$0xf]
      %v202 = vld [vmem:[%s166 + $0x6c] sm:$0xf]
      %v203 = vld [vmem:[%s166 + $0x70] sm:$0xf]
      %v204 = vld [vmem:[%s166 + $0x74] sm:$0xf]
      %v205 = vld [vmem:[%s166 + $0x78] sm:$0xf]
      %v206 = vld [vmem:[%s166 + $0x7c] sm:$0xf]
      %v207 = vld [vmem:[%s166 + $0x80] sm:$0xf]
      %v208 = vld [vmem:[%s166 + $0x84] sm:$0xf]
      %v209 = vld [vmem:[%s166 + $0x88] sm:$0xf]
      %v210 = vld [vmem:[%s166 + $0x8c] sm:$0xf]
      %v211 = vld [vmem:[%s166 + $0x90] sm:$0xf]
      %v212 = vld [vmem:[%s166 + $0x94] sm:$0xf]
      %v213 = vld [vmem:[%s166 + $0x98] sm:$0xf]
      %v214 = vld [vmem:[%s166 + $0x9c] sm:$0xf]
      %v215 = vld [vmem:[%s166 + $0xa0] sm:$0xf]
      %v216 = vld [vmem:[%s166 + $0xa4] sm:$0xf]
      %v217 = vld [vmem:[%s166 + $0xa8] sm:$0xf]
      %v218 = vld [vmem:[%s166 + $0xac] sm:$0xf]
      %v219 = vld [vmem:[%s166 + $0xb0] sm:$0xf]
      %v220 = vld [vmem:[%s166 + $0xb4] sm:$0xf]
      %v221 = vld [vmem:[%s166 + $0xb8] sm:$0xf]
      %v222 = vld [vmem:[%s166 + $0xbc] sm:$0xf]
      %v223 = vld [vmem:[%s166 + $0xc0] sm:$0xf]
      %v224 = vld [vmem:[%s166 + $0xc4] sm:$0xf]
      %v225 = vld [vmem:[%s166 + $0xc8] sm:$0xf]
      %v226 = vld [vmem:[%s166 + $0xcc] sm:$0xf]
      %v227 = vld [vmem:[%s166 + $0xd0] sm:$0xf]
      %v228 = vld [vmem:[%s166 + $0xd4] sm:$0xf]
      %v229 = vld [vmem:[%s166 + $0xd8] sm:$0xf]
      %v230 = vld [vmem:[%s166 + $0xdc] sm:$0xf]
      %v231 = vld [vmem:[%s166 + $0xe0] sm:$0xf]
      %v232 = vld [vmem:[%s166 + $0xe4] sm:$0xf]
      %v233 = vld [vmem:[%s166 + $0xe8] sm:$0xf]
      %v234 = vld [vmem:[%s166 + $0xec] sm:$0xf]
      %v235 = vld [vmem:[%s166 + $0xf0] sm:$0xf]
      %v236 = vld [vmem:[%s166 + $0xf4] sm:$0xf]
      %v237 = vld [vmem:[%s166 + $0xf8] sm:$0xf]
      %v238 = vld [vmem:[%s166 + $0xfc] sm:$0xf]
      %v239 = vld [vmem:[%s166 + $0x100] sm:$0xf]
      %v240 = vld [vmem:[%s166 + $0x104] sm:$0xf]
      %v241 = vld [vmem:[%s166 + $0x108] sm:$0xf]
      %v242 = vld [vmem:[%s166 + $0x10c] sm:$0xf]
      %v243 = vld [vmem:[%s166 + $0x110] sm:$0xf]
      %v244 = vld [vmem:[%s166 + $0x114] sm:$0xf]
      %v245 = vld [vmem:[%s166 + $0x118] sm:$0xf]
      %v246 = vld [vmem:[%s166 + $0x11c] sm:$0xf]
      %v247 = vld [vmem:[%s166 + $0x120] sm:$0xf]
      %v248 = vld [vmem:[%s166 + $0x124] sm:$0xf]
      %v249 = vld [vmem:[%s166 + $0x128] sm:$0xf]
      %v250 = vld [vmem:[%s166 + $0x12c] sm:$0xf]
      %v251 = vld [vmem:[%s166 + $0x130] sm:$0xf]
      %v252 = vld [vmem:[%s166 + $0x134] sm:$0xf]
      %v253 = vld [vmem:[%s166 + $0x138] sm:$0xf]
      %v254 = vld [vmem:[%s166 + $0x13c] sm:$0xf]
      %v255 = vld [vmem:[%s166 + $0x140] sm:$0xf]
      %v256 = vld [vmem:[%s166 + $0x144] sm:$0xf]
      %v257 = vld [vmem:[%s166 + $0x148] sm:$0xf]
      %v258 = vld [vmem:[%s166 + $0x14c] sm:$0xf]
      %v259 = vld [vmem:[%s166 + $0x150] sm:$0xf]
      %v260 = vld [vmem:[%s166 + $0x154] sm:$0xf]
      %v261 = vld [vmem:[%s166 + $0x158] sm:$0xf]
      %v262 = vld [vmem:[%s166 + $0x15c] sm:$0xf]
      %v263 = vld [vmem:[%s166 + $0x160] sm:$0xf]
      %v264 = vld [vmem:[%s166 + $0x164] sm:$0xf]
      %v265 = vld [vmem:[%s166 + $0x168] sm:$0xf]
      %v266 = vld [vmem:[%s166 + $0x16c] sm:$0xf]
      %v267 = vld [vmem:[%s166 + $0x170] sm:$0xf]
      %v268 = vld [vmem:[%s166 + $0x174] sm:$0xf]
      %v269 = vld [vmem:[%s166 + $0x178] sm:$0xf]
      %v270 = vld [vmem:[%s166 + $0x17c] sm:$0xf]
      %v271 = vld [vmem:[%s166 + $0x180] sm:$0xf]
      %v272 = vld [vmem:[%s166 + $0x184] sm:$0xf]
      %v273 = vld [vmem:[%s166 + $0x188] sm:$0xf]
      %v274 = vld [vmem:[%s166 + $0x18c] sm:$0xf]
      %v275 = vld [vmem:[%s166 + $0x190] sm:$0xf]
      %v276 = vld [vmem:[%s166 + $0x194] sm:$0xf]
      %v277 = vld [vmem:[%s166 + $0x198] sm:$0xf]
      %v278 = vld [vmem:[%s166 + $0x19c] sm:$0xf]
      %v279 = vld [vmem:[%s166 + $0x1a0] sm:$0xf]
      %v280 = vld [vmem:[%s166 + $0x1a4] sm:$0xf]
      %v281 = vld [vmem:[%s166 + $0x1a8] sm:$0xf]
      %v282 = vld [vmem:[%s166 + $0x1ac] sm:$0xf]
      %v283 = vld [vmem:[%s166 + $0x1b0] sm:$0xf]
      %v284 = vld [vmem:[%s166 + $0x1b4] sm:$0xf]
      %v285 = vld [vmem:[%s166 + $0x1b8] sm:$0xf]
      %v286 = vld [vmem:[%s166 + $0x1bc] sm:$0xf]
      %v287 = vld [vmem:[%s166 + $0x1c0] sm:$0xf]
      %v288 = vld [vmem:[%s166 + $0x1c4] sm:$0xf]
      %v289 = vld [vmem:[%s166 + $0x1c8] sm:$0xf]
      %v290 = vld [vmem:[%s166 + $0x1cc] sm:$0xf]
      %v291 = vld [vmem:[%s166 + $0x1d0] sm:$0xf]
      %v292 = vld [vmem:[%s166 + $0x1d4] sm:$0xf]
      %v293 = vld [vmem:[%s166 + $0x1d8] sm:$0xf]
      %v294 = vld [vmem:[%s166 + $0x1dc] sm:$0xf]
      %v295 = vld [vmem:[%s166 + $0x1e0] sm:$0xf]
      %v296 = vld [vmem:[%s166 + $0x1e4] sm:$0xf]
      %v297 = vld [vmem:[%s166 + $0x1e8] sm:$0xf]
      %v298 = vld [vmem:[%s166 + $0x1ec] sm:$0xf]
      %v299 = vld [vmem:[%s166 + $0x1f0] sm:$0xf]
      %v300 = vld [vmem:[%s166 + $0x1f4] sm:$0xf]
      %v301 = vld [vmem:[%s166 + $0x1f8] sm:$0xf]
      %v302 = vld [vmem:[%s166 + $0x1fc] sm:$0xf]
      %v303 = vld [vmem:[%s1] sm:$0xf]
      %v304 = vld [vmem:[%s1 + $0x4] sm:$0xf]
      %v305 = vld [vmem:[%s1 + $0x8] sm:$0xf]
      %v306 = vld [vmem:[%s1 + $0xc] sm:$0xf]
      %v307 = vld [vmem:[%s1 + $0x10] sm:$0xf]
      %v308 = vld [vmem:[%s1 + $0x14] sm:$0xf]
      %v437 = vunpack.c.l.b16 %v175
      %v438 = vunpack.c.l.b16 %v176
      %v439 = vunpack.c.l.b16 %v177
      %v440 = vunpack.c.l.b16 %v178
      %v441 = vunpack.c.l.b16 %v179
      %v442 = vunpack.c.l.b16 %v180
      %v443 = vunpack.c.l.b16 %v181
      %v444 = vunpack.c.l.b16 %v182
      %v445 = vunpack.c.l.b16 %v183
      %v446 = vunpack.c.l.b16 %v184
      %v447 = vunpack.c.l.b16 %v185
      %v448 = vunpack.c.l.b16 %v186
      %v449 = vunpack.c.l.b16 %v187
      %v450 = vunpack.c.l.b16 %v188
      %v451 = vunpack.c.l.b16 %v189
      %v452 = vunpack.c.l.b16 %v190
      %v453 = vunpack.c.l.b16 %v191
      %v454 = vunpack.c.l.b16 %v192
      %v455 = vunpack.c.l.b16 %v193
      %v456 = vunpack.c.l.b16 %v194
      %v457 = vunpack.c.l.b16 %v195
      %v458 = vunpack.c.l.b16 %v196
      %v459 = vunpack.c.l.b16 %v197
      %v460 = vunpack.c.l.b16 %v198
      %v461 = vunpack.c.l.b16 %v199
      %v462 = vunpack.c.l.b16 %v200
      %v463 = vunpack.c.l.b16 %v201
      %v464 = vunpack.c.l.b16 %v202
      %v465 = vunpack.c.l.b16 %v203
      %v466 = vunpack.c.l.b16 %v204
      %v467 = vunpack.c.l.b16 %v205
      %v468 = vunpack.c.l.b16 %v206
      %v469 = vunpack.c.l.b16 %v207
      %v470 = vunpack.c.l.b16 %v208
      %v471 = vunpack.c.l.b16 %v209
      %v472 = vunpack.c.l.b16 %v210
      %v473 = vunpack.c.l.b16 %v211
      %v474 = vunpack.c.l.b16 %v212
      %v475 = vunpack.c.l.b16 %v213
      %v476 = vunpack.c.l.b16 %v214
      %v477 = vunpack.c.l.b16 %v215
      %v478 = vunpack.c.l.b16 %v216
      %v479 = vunpack.c.l.b16 %v217
      %v480 = vunpack.c.l.b16 %v218
      %v481 = vunpack.c.l.b16 %v219
      %v482 = vunpack.c.l.b16 %v220
      %v483 = vunpack.c.l.b16 %v221
      %v484 = vunpack.c.l.b16 %v222
      %v485 = vunpack.c.l.b16 %v223
      %v486 = vunpack.c.l.b16 %v224
      %v487 = vunpack.c.l.b16 %v225
      %v488 = vunpack.c.l.b16 %v226
      %v489 = vunpack.c.l.b16 %v227
      %v490 = vunpack.c.l.b16 %v228
      %v491 = vunpack.c.l.b16 %v229
      %v492 = vunpack.c.l.b16 %v230
      %v493 = vunpack.c.l.b16 %v231
      %v494 = vunpack.c.l.b16 %v232
      %v495 = vunpack.c.l.b16 %v233
      %v496 = vunpack.c.l.b16 %v234
      %v497 = vunpack.c.l.b16 %v235
      %v498 = vunpack.c.l.b16 %v236
      %v499 = vunpack.c.l.b16 %v237
      %v500 = vunpack.c.l.b16 %v238
      %v501 = vunpack.c.l.b16 %v239
      %v502 = vunpack.c.l.b16 %v240
      %v503 = vunpack.c.l.b16 %v241
      %v504 = vunpack.c.l.b16 %v242
      %v505 = vunpack.c.l.b16 %v243
      %v506 = vunpack.c.l.b16 %v244
      %v507 = vunpack.c.l.b16 %v245
      %v508 = vunpack.c.l.b16 %v246
      %v509 = vunpack.c.l.b16 %v247
      %v510 = vunpack.c.l.b16 %v248
      %v511 = vunpack.c.l.b16 %v249
      %v512 = vunpack.c.l.b16 %v250
      %v513 = vunpack.c.l.b16 %v251
      %v514 = vunpack.c.l.b16 %v252
      %v515 = vunpack.c.l.b16 %v253
      %v516 = vunpack.c.l.b16 %v254
      %v517 = vunpack.c.l.b16 %v255
      %v518 = vunpack.c.l.b16 %v256
      %v519 = vunpack.c.l.b16 %v257
      %v520 = vunpack.c.l.b16 %v258
      %v521 = vunpack.c.l.b16 %v259
      %v522 = vunpack.c.l.b16 %v260
      %v523 = vunpack.c.l.b16 %v261
      %v524 = vunpack.c.l.b16 %v262
      %v525 = vunpack.c.l.b16 %v263
      %v526 = vunpack.c.l.b16 %v264
      %v527 = vunpack.c.l.b16 %v265
      %v528 = vunpack.c.l.b16 %v266
      %v529 = vunpack.c.l.b16 %v267
      %v530 = vunpack.c.l.b16 %v268
      %v531 = vunpack.c.l.b16 %v269
      %v532 = vunpack.c.l.b16 %v270
      %v533 = vunpack.c.l.b16 %v271
      %v534 = vunpack.c.l.b16 %v272
      %v535 = vunpack.c.l.b16 %v273
      %v536 = vunpack.c.l.b16 %v274
      %v537 = vunpack.c.l.b16 %v275
      %v538 = vunpack.c.l.b16 %v276
      %v539 = vunpack.c.l.b16 %v277
      %v540 = vunpack.c.l.b16 %v278
      %v541 = vunpack.c.l.b16 %v279
      %v542 = vunpack.c.l.b16 %v280
      %v543 = vunpack.c.l.b16 %v281
      %v544 = vunpack.c.l.b16 %v282
      %v545 = vunpack.c.l.b16 %v283
      %v546 = vunpack.c.l.b16 %v284
      %v547 = vunpack.c.l.b16 %v285
      %v548 = vunpack.c.l.b16 %v286
      %v549 = vunpack.c.l.b16 %v287
      %v550 = vunpack.c.l.b16 %v288
      %v551 = vunpack.c.l.b16 %v289
      %v552 = vunpack.c.l.b16 %v290
      %v553 = vunpack.c.l.b16 %v291
      %v554 = vunpack.c.l.b16 %v292
      %v555 = vunpack.c.l.b16 %v293
      %v556 = vunpack.c.l.b16 %v294
      %v557 = vunpack.c.l.b16 %v295
      %v558 = vunpack.c.l.b16 %v296
      %v559 = vunpack.c.l.b16 %v297
      %v560 = vunpack.c.l.b16 %v298
      %v561 = vunpack.c.l.b16 %v299
      %v562 = vunpack.c.l.b16 %v300
      %v563 = vunpack.c.l.b16 %v301
      %v564 = vunpack.c.l.b16 %v302
      %v565 = vpack.c.b16 %v438, %v437
      %v566 = vpack.c.b16 %v440, %v439
      %v567 = vpack.c.b16 %v442, %v441
      %v568 = vpack.c.b16 %v444, %v443
      %v569 = vpack.c.b16 %v446, %v445
      %v570 = vpack.c.b16 %v448, %v447
      %v571 = vpack.c.b16 %v450, %v449
      %v572 = vpack.c.b16 %v452, %v451
      %v573 = vpack.c.b16 %v454, %v453
      %v574 = vpack.c.b16 %v456, %v455
      %v575 = vpack.c.b16 %v458, %v457
      %v576 = vpack.c.b16 %v460, %v459
      %v577 = vpack.c.b16 %v462, %v461
      %v578 = vpack.c.b16 %v464, %v463
      %v579 = vpack.c.b16 %v466, %v465
      %v580 = vpack.c.b16 %v468, %v467
      %v581 = vpack.c.b16 %v470, %v469
      %v582 = vpack.c.b16 %v472, %v471
      %v583 = vpack.c.b16 %v474, %v473
      %v584 = vpack.c.b16 %v476, %v475
      %v585 = vpack.c.b16 %v478, %v477
      %v586 = vpack.c.b16 %v480, %v479
      %v587 = vpack.c.b16 %v482, %v481
      %v588 = vpack.c.b16 %v484, %v483
      %v589 = vpack.c.b16 %v486, %v485
      %v590 = vpack.c.b16 %v488, %v487
      %v591 = vpack.c.b16 %v490, %v489
      %v592 = vpack.c.b16 %v492, %v491
      %v593 = vpack.c.b16 %v494, %v493
      %v594 = vpack.c.b16 %v496, %v495
      %v595 = vpack.c.b16 %v498, %v497
      %v596 = vpack.c.b16 %v500, %v499
      %v597 = vpack.c.b16 %v502, %v501
      %v598 = vpack.c.b16 %v504, %v503
      %v599 = vpack.c.b16 %v506, %v505
      %v600 = vpack.c.b16 %v508, %v507
      %v601 = vpack.c.b16 %v510, %v509
      %v602 = vpack.c.b16 %v512, %v511
      %v603 = vpack.c.b16 %v514, %v513
      %v604 = vpack.c.b16 %v516, %v515
      %v605 = vpack.c.b16 %v518, %v517
      %v606 = vpack.c.b16 %v520, %v519
      %v607 = vpack.c.b16 %v522, %v521
      %v608 = vpack.c.b16 %v524, %v523
      %v609 = vpack.c.b16 %v526, %v525
      %v610 = vpack.c.b16 %v528, %v527
      %v611 = vpack.c.b16 %v530, %v529
      %v612 = vpack.c.b16 %v532, %v531
      %v613 = vpack.c.b16 %v534, %v533
      %v614 = vpack.c.b16 %v536, %v535
      %v615 = vpack.c.b16 %v538, %v537
      %v616 = vpack.c.b16 %v540, %v539
      %v617 = vpack.c.b16 %v542, %v541
      %v618 = vpack.c.b16 %v544, %v543
      %v619 = vpack.c.b16 %v546, %v545
      %v620 = vpack.c.b16 %v548, %v547
      %v621 = vpack.c.b16 %v550, %v549
      %v622 = vpack.c.b16 %v552, %v551
      %v623 = vpack.c.b16 %v554, %v553
      %v624 = vpack.c.b16 %v556, %v555
      %v625 = vpack.c.b16 %v558, %v557
      %v626 = vpack.c.b16 %v560, %v559
      %v627 = vpack.c.b16 %v562, %v561
      %v628 = vpack.c.b16 %v564, %v563
      %v635 = vunpack.c.l.b16 %v303
      %v636 = vunpack.c.l.b16 %v304
      %v637 = vunpack.c.l.b16 %v305
      %v638 = vunpack.c.l.b16 %v306
      %v639 = vunpack.c.l.b16 %v307
      %v640 = vunpack.c.l.b16 %v308
      %v641 = vpack.c.b16 %v636, %v635
      %v642 = vpack.c.b16 %v638, %v637
      %v643 = vpack.c.b16 %v640, %v639
      %vm647 = vcmask 392192
      %v649 = vsel %vm647, %v565, 0
      %v652 = vsel %vm647, %v566, 0
      %v655 = vsel %vm647, %v567, 0
      %v658 = vsel %vm647, %v568, 0
      %v661 = vsel %vm647, %v569, 0
      %v664 = vsel %vm647, %v570, 0
      %v667 = vsel %vm647, %v571, 0
      %v670 = vsel %vm647, %v572, 0
      %v673 = vsel %vm647, %v573, 0
      %v676 = vsel %vm647, %v574, 0
      %v679 = vsel %vm647, %v575, 0
      %v682 = vsel %vm647, %v576, 0
      %v685 = vsel %vm647, %v577, 0
      %v688 = vsel %vm647, %v578, 0
      %v691 = vsel %vm647, %v579, 0
      %v694 = vsel %vm647, %v580, 0
      %v697 = vsel %vm647, %v581, 0
      %v700 = vsel %vm647, %v582, 0
      %v703 = vsel %vm647, %v583, 0
      %v706 = vsel %vm647, %v584, 0
      %v709 = vsel %vm647, %v585, 0
      %v712 = vsel %vm647, %v586, 0
      %v715 = vsel %vm647, %v587, 0
      %v718 = vsel %vm647, %v588, 0
      %v721 = vsel %vm647, %v589, 0
      %v724 = vsel %vm647, %v590, 0
      %v727 = vsel %vm647, %v591, 0
      %v730 = vsel %vm647, %v592, 0
      %v733 = vsel %vm647, %v593, 0
      %v736 = vsel %vm647, %v594, 0
      %v739 = vsel %vm647, %v595, 0
      %v742 = vsel %vm647, %v596, 0
      %v745 = vsel %vm647, %v597, 0
      %v748 = vsel %vm647, %v598, 0
      %v751 = vsel %vm647, %v599, 0
      %v754 = vsel %vm647, %v600, 0
      %v757 = vsel %vm647, %v601, 0
      %v760 = vsel %vm647, %v602, 0
      %v763 = vsel %vm647, %v603, 0
      %v766 = vsel %vm647, %v604, 0
      %v769 = vsel %vm647, %v605, 0
      %v772 = vsel %vm647, %v606, 0
      %v775 = vsel %vm647, %v607, 0
      %v778 = vsel %vm647, %v608, 0
      %v781 = vsel %vm647, %v609, 0
      %v784 = vsel %vm647, %v610, 0
      %v787 = vsel %vm647, %v611, 0
      %v790 = vsel %vm647, %v612, 0
      %v793 = vsel %vm647, %v613, 0
      %v796 = vsel %vm647, %v614, 0
      %v799 = vsel %vm647, %v615, 0
      %v802 = vsel %vm647, %v616, 0
      %v805 = vsel %vm647, %v617, 0
      %v808 = vsel %vm647, %v618, 0
      %v811 = vsel %vm647, %v619, 0
      %v814 = vsel %vm647, %v620, 0
      %v817 = vsel %vm647, %v621, 0
      %v820 = vsel %vm647, %v622, 0
      %v823 = vsel %vm647, %v623, 0
      %v826 = vsel %vm647, %v624, 0
      %v829 = vsel %vm647, %v625, 0
      %v832 = vsel %vm647, %v626, 0
      %v835 = vsel %vm647, %v627, 0
      %v838 = vsel %vm647, %v628, 0
      %840 = vmatpush.bf16.msra.mxu0 0
      %841 = vmatpush.bf16.msra.mxu0 0
      %842 = vmatpush.bf16.msra.mxu0 0
      %843 = vmatpush.bf16.msra.mxu0 0
      %844 = vmatpush.bf16.msra.mxu0 0
      %845 = vmatpush.bf16.msra.mxu0 %v643
      %846 = vmatpush.bf16.msra.mxu0 %v642
      %847 = vmatpush.bf16.msra.mxu0 %v641
      %848 = vmatmul.bf16.gmra.mxu0 %v649
      %v849 = vpop.f32.mrf.mxu0
      %v850 = vadd.f32 0.0, %v849
      %v851 = vpop.f32.mrf.mxu0
      %v852 = vadd.f32 0.0, %v851
      %853 = vmatmul.bf16.gmra.mxu0 %v652
      %v854 = vpop.f32.mrf.mxu0
      %v855 = vadd.f32 0.0, %v854
      %v856 = vpop.f32.mrf.mxu0
      %v857 = vadd.f32 0.0, %v856
      %858 = vmatmul.bf16.gmra.mxu0 %v655
      %v859 = vpop.f32.mrf.mxu0
      %v860 = vadd.f32 0.0, %v859
      %v861 = vpop.f32.mrf.mxu0
      %v862 = vadd.f32 0.0, %v861
      %863 = vmatmul.bf16.gmra.mxu0 %v658
      %v864 = vpop.f32.mrf.mxu0
      %v865 = vadd.f32 0.0, %v864
      %v866 = vpop.f32.mrf.mxu0
      %v867 = vadd.f32 0.0, %v866
      %868 = vmatmul.bf16.gmra.mxu0 %v661
      %v869 = vpop.f32.mrf.mxu0
      %v870 = vadd.f32 0.0, %v869
      %v871 = vpop.f32.mrf.mxu0
      %v872 = vadd.f32 0.0, %v871
      %873 = vmatmul.bf16.gmra.mxu0 %v664
      %v874 = vpop.f32.mrf.mxu0
      %v875 = vadd.f32 0.0, %v874
      %v876 = vpop.f32.mrf.mxu0
      %v877 = vadd.f32 0.0, %v876
      %878 = vmatmul.bf16.gmra.mxu0 %v667
      %v879 = vpop.f32.mrf.mxu0
      %v880 = vadd.f32 0.0, %v879
      %v881 = vpop.f32.mrf.mxu0
      %v882 = vadd.f32 0.0, %v881
      %883 = vmatmul.bf16.gmra.mxu0 %v670
      %v884 = vpop.f32.mrf.mxu0
      %v885 = vadd.f32 0.0, %v884
      %v886 = vpop.f32.mrf.mxu0
      %v887 = vadd.f32 0.0, %v886
      %888 = vmatmul.bf16.gmra.mxu0 %v673
      %v889 = vpop.f32.mrf.mxu0
      %v890 = vadd.f32 0.0, %v889
      %v891 = vpop.f32.mrf.mxu0
      %v892 = vadd.f32 0.0, %v891
      %893 = vmatmul.bf16.gmra.mxu0 %v676
      %v894 = vpop.f32.mrf.mxu0
      %v895 = vadd.f32 0.0, %v894
      %v896 = vpop.f32.mrf.mxu0
      %v897 = vadd.f32 0.0, %v896
      %898 = vmatmul.bf16.gmra.mxu0 %v679
      %v899 = vpop.f32.mrf.mxu0
      %v900 = vadd.f32 0.0, %v899
      %v901 = vpop.f32.mrf.mxu0
      %v902 = vadd.f32 0.0, %v901
      %903 = vmatmul.bf16.gmra.mxu0 %v682
      %v904 = vpop.f32.mrf.mxu0
      %v905 = vadd.f32 0.0, %v904
      %v906 = vpop.f32.mrf.mxu0
      %v907 = vadd.f32 0.0, %v906
      %908 = vmatmul.bf16.gmra.mxu0 %v685
      %v909 = vpop.f32.mrf.mxu0
      %v910 = vadd.f32 0.0, %v909
      %v911 = vpop.f32.mrf.mxu0
      %v912 = vadd.f32 0.0, %v911
      %913 = vmatmul.bf16.gmra.mxu0 %v688
      %v914 = vpop.f32.mrf.mxu0
      %v915 = vadd.f32 0.0, %v914
      %v916 = vpop.f32.mrf.mxu0
      %v917 = vadd.f32 0.0, %v916
      %918 = vmatmul.bf16.gmra.mxu0 %v691
      %v919 = vpop.f32.mrf.mxu0
      %v920 = vadd.f32 0.0, %v919
      %v921 = vpop.f32.mrf.mxu0
      %v922 = vadd.f32 0.0, %v921
      %923 = vmatmul.bf16.gmra.mxu0 %v694
      %v924 = vpop.f32.mrf.mxu0
      %v925 = vadd.f32 0.0, %v924
      %v926 = vpop.f32.mrf.mxu0
      %v927 = vadd.f32 0.0, %v926
      %928 = vmatmul.bf16.gmra.mxu0 %v697
      %v929 = vpop.f32.mrf.mxu0
      %v930 = vadd.f32 0.0, %v929
      %v931 = vpop.f32.mrf.mxu0
      %v932 = vadd.f32 0.0, %v931
      %933 = vmatmul.bf16.gmra.mxu0 %v700
      %v934 = vpop.f32.mrf.mxu0
      %v935 = vadd.f32 0.0, %v934
      %v936 = vpop.f32.mrf.mxu0
      %v937 = vadd.f32 0.0, %v936
      %938 = vmatmul.bf16.gmra.mxu0 %v703
      %v939 = vpop.f32.mrf.mxu0
      %v940 = vadd.f32 0.0, %v939
      %v941 = vpop.f32.mrf.mxu0
      %v942 = vadd.f32 0.0, %v941
      %943 = vmatmul.bf16.gmra.mxu0 %v706
      %v944 = vpop.f32.mrf.mxu0
      %v945 = vadd.f32 0.0, %v944
      %v946 = vpop.f32.mrf.mxu0
      %v947 = vadd.f32 0.0, %v946
      %948 = vmatmul.bf16.gmra.mxu0 %v709
      %v949 = vpop.f32.mrf.mxu0
      %v950 = vadd.f32 0.0, %v949
      %v951 = vpop.f32.mrf.mxu0
      %v952 = vadd.f32 0.0, %v951
      %953 = vmatmul.bf16.gmra.mxu0 %v712
      %v954 = vpop.f32.mrf.mxu0
      %v955 = vadd.f32 0.0, %v954
      %v956 = vpop.f32.mrf.mxu0
      %v957 = vadd.f32 0.0, %v956
      %958 = vmatmul.bf16.gmra.mxu0 %v715
      %v959 = vpop.f32.mrf.mxu0
      %v960 = vadd.f32 0.0, %v959
      %v961 = vpop.f32.mrf.mxu0
      %v962 = vadd.f32 0.0, %v961
      %963 = vmatmul.bf16.gmra.mxu0 %v718
      %v964 = vpop.f32.mrf.mxu0
      %v965 = vadd.f32 0.0, %v964
      %v966 = vpop.f32.mrf.mxu0
      %v967 = vadd.f32 0.0, %v966
      %968 = vmatmul.bf16.gmra.mxu0 %v721
      %v969 = vpop.f32.mrf.mxu0
      %v970 = vadd.f32 0.0, %v969
      %v971 = vpop.f32.mrf.mxu0
      %v972 = vadd.f32 0.0, %v971
      %973 = vmatmul.bf16.gmra.mxu0 %v724
      %v974 = vpop.f32.mrf.mxu0
      %v975 = vadd.f32 0.0, %v974
      %v976 = vpop.f32.mrf.mxu0
      %v977 = vadd.f32 0.0, %v976
      %978 = vmatmul.bf16.gmra.mxu0 %v727
      %v979 = vpop.f32.mrf.mxu0
      %v980 = vadd.f32 0.0, %v979
      %v981 = vpop.f32.mrf.mxu0
      %v982 = vadd.f32 0.0, %v981
      %983 = vmatmul.bf16.gmra.mxu0 %v730
      %v984 = vpop.f32.mrf.mxu0
      %v985 = vadd.f32 0.0, %v984
      %v986 = vpop.f32.mrf.mxu0
      %v987 = vadd.f32 0.0, %v986
      %988 = vmatmul.bf16.gmra.mxu0 %v733
      %v989 = vpop.f32.mrf.mxu0
      %v990 = vadd.f32 0.0, %v989
      %v991 = vpop.f32.mrf.mxu0
      %v992 = vadd.f32 0.0, %v991
      %993 = vmatmul.bf16.gmra.mxu0 %v736
      %v994 = vpop.f32.mrf.mxu0
      %v995 = vadd.f32 0.0, %v994
      %v996 = vpop.f32.mrf.mxu0
      %v997 = vadd.f32 0.0, %v996
      %998 = vmatmul.bf16.gmra.mxu0 %v739
      %v999 = vpop.f32.mrf.mxu0
      %v1000 = vadd.f32 0.0, %v999
      %v1001 = vpop.f32.mrf.mxu0
      %v1002 = vadd.f32 0.0, %v1001
      %1003 = vmatmul.bf16.gmra.mxu0 %v742
      %v1004 = vpop.f32.mrf.mxu0
      %v1005 = vadd.f32 0.0, %v1004
      %v1006 = vpop.f32.mrf.mxu0
      %v1007 = vadd.f32 0.0, %v1006
      %1008 = vmatmul.bf16.gmra.mxu0 %v745
      %v1009 = vpop.f32.mrf.mxu0
      %v1010 = vadd.f32 0.0, %v1009
      %v1011 = vpop.f32.mrf.mxu0
      %v1012 = vadd.f32 0.0, %v1011
      %1013 = vmatmul.bf16.gmra.mxu0 %v748
      %v1014 = vpop.f32.mrf.mxu0
      %v1015 = vadd.f32 0.0, %v1014
      %v1016 = vpop.f32.mrf.mxu0
      %v1017 = vadd.f32 0.0, %v1016
      %1018 = vmatmul.bf16.gmra.mxu0 %v751
      %v1019 = vpop.f32.mrf.mxu0
      %v1020 = vadd.f32 0.0, %v1019
      %v1021 = vpop.f32.mrf.mxu0
      %v1022 = vadd.f32 0.0, %v1021
      %1023 = vmatmul.bf16.gmra.mxu0 %v754
      %v1024 = vpop.f32.mrf.mxu0
      %v1025 = vadd.f32 0.0, %v1024
      %v1026 = vpop.f32.mrf.mxu0
      %v1027 = vadd.f32 0.0, %v1026
      %1028 = vmatmul.bf16.gmra.mxu0 %v757
      %v1029 = vpop.f32.mrf.mxu0
      %v1030 = vadd.f32 0.0, %v1029
      %v1031 = vpop.f32.mrf.mxu0
      %v1032 = vadd.f32 0.0, %v1031
      %1033 = vmatmul.bf16.gmra.mxu0 %v760
      %v1034 = vpop.f32.mrf.mxu0
      %v1035 = vadd.f32 0.0, %v1034
      %v1036 = vpop.f32.mrf.mxu0
      %v1037 = vadd.f32 0.0, %v1036
      %1038 = vmatmul.bf16.gmra.mxu0 %v763
      %v1039 = vpop.f32.mrf.mxu0
      %v1040 = vadd.f32 0.0, %v1039
      %v1041 = vpop.f32.mrf.mxu0
      %v1042 = vadd.f32 0.0, %v1041
      %1043 = vmatmul.bf16.gmra.mxu0 %v766
      %v1044 = vpop.f32.mrf.mxu0
      %v1045 = vadd.f32 0.0, %v1044
      %v1046 = vpop.f32.mrf.mxu0
      %v1047 = vadd.f32 0.0, %v1046
      %1048 = vmatmul.bf16.gmra.mxu0 %v769
      %v1049 = vpop.f32.mrf.mxu0
      %v1050 = vadd.f32 0.0, %v1049
      %v1051 = vpop.f32.mrf.mxu0
      %v1052 = vadd.f32 0.0, %v1051
      %1053 = vmatmul.bf16.gmra.mxu0 %v772
      %v1054 = vpop.f32.mrf.mxu0
      %v1055 = vadd.f32 0.0, %v1054
      %v1056 = vpop.f32.mrf.mxu0
      %v1057 = vadd.f32 0.0, %v1056
      %1058 = vmatmul.bf16.gmra.mxu0 %v775
      %v1059 = vpop.f32.mrf.mxu0
      %v1060 = vadd.f32 0.0, %v1059
      %v1061 = vpop.f32.mrf.mxu0
      %v1062 = vadd.f32 0.0, %v1061
      %1063 = vmatmul.bf16.gmra.mxu0 %v778
      %v1064 = vpop.f32.mrf.mxu0
      %v1065 = vadd.f32 0.0, %v1064
      %v1066 = vpop.f32.mrf.mxu0
      %v1067 = vadd.f32 0.0, %v1066
      %1068 = vmatmul.bf16.gmra.mxu0 %v781
      %v1069 = vpop.f32.mrf.mxu0
      %v1070 = vadd.f32 0.0, %v1069
      %v1071 = vpop.f32.mrf.mxu0
      %v1072 = vadd.f32 0.0, %v1071
      %1073 = vmatmul.bf16.gmra.mxu0 %v784
      %v1074 = vpop.f32.mrf.mxu0
      %v1075 = vadd.f32 0.0, %v1074
      %v1076 = vpop.f32.mrf.mxu0
      %v1077 = vadd.f32 0.0, %v1076
      %1078 = vmatmul.bf16.gmra.mxu0 %v787
      %v1079 = vpop.f32.mrf.mxu0
      %v1080 = vadd.f32 0.0, %v1079
      %v1081 = vpop.f32.mrf.mxu0
      %v1082 = vadd.f32 0.0, %v1081
      %1083 = vmatmul.bf16.gmra.mxu0 %v790
      %v1084 = vpop.f32.mrf.mxu0
      %v1085 = vadd.f32 0.0, %v1084
      %v1086 = vpop.f32.mrf.mxu0
      %v1087 = vadd.f32 0.0, %v1086
      %1088 = vmatmul.bf16.gmra.mxu0 %v793
      %v1089 = vpop.f32.mrf.mxu0
      %v1090 = vadd.f32 0.0, %v1089
      %v1091 = vpop.f32.mrf.mxu0
      %v1092 = vadd.f32 0.0, %v1091
      %1093 = vmatmul.bf16.gmra.mxu0 %v796
      %v1094 = vpop.f32.mrf.mxu0
      %v1095 = vadd.f32 0.0, %v1094
      %v1096 = vpop.f32.mrf.mxu0
      %v1097 = vadd.f32 0.0, %v1096
      %1098 = vmatmul.bf16.gmra.mxu0 %v799
      %v1099 = vpop.f32.mrf.mxu0
      %v1100 = vadd.f32 0.0, %v1099
      %v1101 = vpop.f32.mrf.mxu0
      %v1102 = vadd.f32 0.0, %v1101
      %1103 = vmatmul.bf16.gmra.mxu0 %v802
      %v1104 = vpop.f32.mrf.mxu0
      %v1105 = vadd.f32 0.0, %v1104
      %v1106 = vpop.f32.mrf.mxu0
      %v1107 = vadd.f32 0.0, %v1106
      %1108 = vmatmul.bf16.gmra.mxu0 %v805
      %v1109 = vpop.f32.mrf.mxu0
      %v1110 = vadd.f32 0.0, %v1109
      %v1111 = vpop.f32.mrf.mxu0
      %v1112 = vadd.f32 0.0, %v1111
      %1113 = vmatmul.bf16.gmra.mxu0 %v808
      %v1114 = vpop.f32.mrf.mxu0
      %v1115 = vadd.f32 0.0, %v1114
      %v1116 = vpop.f32.mrf.mxu0
      %v1117 = vadd.f32 0.0, %v1116
      %1118 = vmatmul.bf16.gmra.mxu0 %v811
      %v1119 = vpop.f32.mrf.mxu0
      %v1120 = vadd.f32 0.0, %v1119
      %v1121 = vpop.f32.mrf.mxu0
      %v1122 = vadd.f32 0.0, %v1121
      %1123 = vmatmul.bf16.gmra.mxu0 %v814
      %v1124 = vpop.f32.mrf.mxu0
      %v1125 = vadd.f32 0.0, %v1124
      %v1126 = vpop.f32.mrf.mxu0
      %v1127 = vadd.f32 0.0, %v1126
      %1128 = vmatmul.bf16.gmra.mxu0 %v817
      %v1129 = vpop.f32.mrf.mxu0
      %v1130 = vadd.f32 0.0, %v1129
      %v1131 = vpop.f32.mrf.mxu0
      %v1132 = vadd.f32 0.0, %v1131
      %1133 = vmatmul.bf16.gmra.mxu0 %v820
      %v1134 = vpop.f32.mrf.mxu0
      %v1135 = vadd.f32 0.0, %v1134
      %v1136 = vpop.f32.mrf.mxu0
      %v1137 = vadd.f32 0.0, %v1136
      %1138 = vmatmul.bf16.gmra.mxu0 %v823
      %v1139 = vpop.f32.mrf.mxu0
      %v1140 = vadd.f32 0.0, %v1139
      %v1141 = vpop.f32.mrf.mxu0
      %v1142 = vadd.f32 0.0, %v1141
      %1143 = vmatmul.bf16.gmra.mxu0 %v826
      %v1144 = vpop.f32.mrf.mxu0
      %v1145 = vadd.f32 0.0, %v1144
      %v1146 = vpop.f32.mrf.mxu0
      %v1147 = vadd.f32 0.0, %v1146
      %1148 = vmatmul.bf16.gmra.mxu0 %v829
      %v1149 = vpop.f32.mrf.mxu0
      %v1150 = vadd.f32 0.0, %v1149
      %v1151 = vpop.f32.mrf.mxu0
      %v1152 = vadd.f32 0.0, %v1151
      %1153 = vmatmul.bf16.gmra.mxu0 %v832
      %v1154 = vpop.f32.mrf.mxu0
      %v1155 = vadd.f32 0.0, %v1154
      %v1156 = vpop.f32.mrf.mxu0
      %v1157 = vadd.f32 0.0, %v1156
      %1158 = vmatmul.bf16.gmra.mxu0 %v835
      %v1159 = vpop.f32.mrf.mxu0
      %v1160 = vadd.f32 0.0, %v1159
      %v1161 = vpop.f32.mrf.mxu0
      %v1162 = vadd.f32 0.0, %v1161
      %1163 = vmatmul.bf16.gmra.mxu0 %v838
      %v1164 = vpop.f32.mrf.mxu0
      %v1165 = vadd.f32 0.0, %v1164
      %v1166 = vpop.f32.mrf.mxu0
      %v1167 = vadd.f32 0.0, %v1166
      %1168 = vdwg.mxu0
      %v1169 = vld [vmem:[%s2] sm:$0x1]
      %v1170 = vperm.slane %v1169, 0
      %v1171 = vmul.f32 %v850, %v1170
      %v1172 = vmul.f32 %v852, %v1170
      %v1173 = vmul.f32 %v855, %v1170
      %v1174 = vmul.f32 %v857, %v1170
      %v1175 = vmul.f32 %v860, %v1170
      %v1176 = vmul.f32 %v862, %v1170
      %v1177 = vmul.f32 %v865, %v1170
      %v1178 = vmul.f32 %v867, %v1170
      %v1179 = vmul.f32 %v870, %v1170
      %v1180 = vmul.f32 %v872, %v1170
      %v1181 = vmul.f32 %v875, %v1170
      %v1182 = vmul.f32 %v877, %v1170
      %v1183 = vmul.f32 %v880, %v1170
      %v1184 = vmul.f32 %v882, %v1170
      %v1185 = vmul.f32 %v885, %v1170
      %v1186 = vmul.f32 %v887, %v1170
      %v1187 = vmul.f32 %v890, %v1170
      %v1188 = vmul.f32 %v892, %v1170
      %v1189 = vmul.f32 %v895, %v1170
      %v1190 = vmul.f32 %v897, %v1170
      %v1191 = vmul.f32 %v900, %v1170
      %v1192 = vmul.f32 %v902, %v1170
      %v1193 = vmul.f32 %v905, %v1170
      %v1194 = vmul.f32 %v907, %v1170
      %v1195 = vmul.f32 %v910, %v1170
      %v1196 = vmul.f32 %v912, %v1170
      %v1197 = vmul.f32 %v915, %v1170
      %v1198 = vmul.f32 %v917, %v1170
      %v1199 = vmul.f32 %v920, %v1170
      %v1200 = vmul.f32 %v922, %v1170
      %v1201 = vmul.f32 %v925, %v1170
      %v1202 = vmul.f32 %v927, %v1170
      %v1203 = vmul.f32 %v930, %v1170
      %v1204 = vmul.f32 %v932, %v1170
      %v1205 = vmul.f32 %v935, %v1170
      %v1206 = vmul.f32 %v937, %v1170
      %v1207 = vmul.f32 %v940, %v1170
      %v1208 = vmul.f32 %v942, %v1170
      %v1209 = vmul.f32 %v945, %v1170
      %v1210 = vmul.f32 %v947, %v1170
      %v1211 = vmul.f32 %v950, %v1170
      %v1212 = vmul.f32 %v952, %v1170
      %v1213 = vmul.f32 %v955, %v1170
      %v1214 = vmul.f32 %v957, %v1170
      %v1215 = vmul.f32 %v960, %v1170
      %v1216 = vmul.f32 %v962, %v1170
      %v1217 = vmul.f32 %v965, %v1170
      %v1218 = vmul.f32 %v967, %v1170
      %v1219 = vmul.f32 %v970, %v1170
      %v1220 = vmul.f32 %v972, %v1170
      %v1221 = vmul.f32 %v975, %v1170
      %v1222 = vmul.f32 %v977, %v1170
      %v1223 = vmul.f32 %v980, %v1170
      %v1224 = vmul.f32 %v982, %v1170
      %v1225 = vmul.f32 %v985, %v1170
      %v1226 = vmul.f32 %v987, %v1170
      %v1227 = vmul.f32 %v990, %v1170
      %v1228 = vmul.f32 %v992, %v1170
      %v1229 = vmul.f32 %v995, %v1170
      %v1230 = vmul.f32 %v997, %v1170
      %v1231 = vmul.f32 %v1000, %v1170
      %v1232 = vmul.f32 %v1002, %v1170
      %v1233 = vmul.f32 %v1005, %v1170
      %v1234 = vmul.f32 %v1007, %v1170
      %v1235 = vmul.f32 %v1010, %v1170
      %v1236 = vmul.f32 %v1012, %v1170
      %v1237 = vmul.f32 %v1015, %v1170
      %v1238 = vmul.f32 %v1017, %v1170
      %v1239 = vmul.f32 %v1020, %v1170
      %v1240 = vmul.f32 %v1022, %v1170
      %v1241 = vmul.f32 %v1025, %v1170
      %v1242 = vmul.f32 %v1027, %v1170
      %v1243 = vmul.f32 %v1030, %v1170
      %v1244 = vmul.f32 %v1032, %v1170
      %v1245 = vmul.f32 %v1035, %v1170
      %v1246 = vmul.f32 %v1037, %v1170
      %v1247 = vmul.f32 %v1040, %v1170
      %v1248 = vmul.f32 %v1042, %v1170
      %v1249 = vmul.f32 %v1045, %v1170
      %v1250 = vmul.f32 %v1047, %v1170
      %v1251 = vmul.f32 %v1050, %v1170
      %v1252 = vmul.f32 %v1052, %v1170
      %v1253 = vmul.f32 %v1055, %v1170
      %v1254 = vmul.f32 %v1057, %v1170
      %v1255 = vmul.f32 %v1060, %v1170
      %v1256 = vmul.f32 %v1062, %v1170
      %v1257 = vmul.f32 %v1065, %v1170
      %v1258 = vmul.f32 %v1067, %v1170
      %v1259 = vmul.f32 %v1070, %v1170
      %v1260 = vmul.f32 %v1072, %v1170
      %v1261 = vmul.f32 %v1075, %v1170
      %v1262 = vmul.f32 %v1077, %v1170
      %v1263 = vmul.f32 %v1080, %v1170
      %v1264 = vmul.f32 %v1082, %v1170
      %v1265 = vmul.f32 %v1085, %v1170
      %v1266 = vmul.f32 %v1087, %v1170
      %v1267 = vmul.f32 %v1090, %v1170
      %v1268 = vmul.f32 %v1092, %v1170
      %v1269 = vmul.f32 %v1095, %v1170
      %v1270 = vmul.f32 %v1097, %v1170
      %v1271 = vmul.f32 %v1100, %v1170
      %v1272 = vmul.f32 %v1102, %v1170
      %v1273 = vmul.f32 %v1105, %v1170
      %v1274 = vmul.f32 %v1107, %v1170
      %v1275 = vmul.f32 %v1110, %v1170
      %v1276 = vmul.f32 %v1112, %v1170
      %v1277 = vmul.f32 %v1115, %v1170
      %v1278 = vmul.f32 %v1117, %v1170
      %v1279 = vmul.f32 %v1120, %v1170
      %v1280 = vmul.f32 %v1122, %v1170
      %v1281 = vmul.f32 %v1125, %v1170
      %v1282 = vmul.f32 %v1127, %v1170
      %v1283 = vmul.f32 %v1130, %v1170
      %v1284 = vmul.f32 %v1132, %v1170
      %v1285 = vmul.f32 %v1135, %v1170
      %v1286 = vmul.f32 %v1137, %v1170
      %v1287 = vmul.f32 %v1140, %v1170
      %v1288 = vmul.f32 %v1142, %v1170
      %v1289 = vmul.f32 %v1145, %v1170
      %v1290 = vmul.f32 %v1147, %v1170
      %v1291 = vmul.f32 %v1150, %v1170
      %v1292 = vmul.f32 %v1152, %v1170
      %v1293 = vmul.f32 %v1155, %v1170
      %v1294 = vmul.f32 %v1157, %v1170
      %v1295 = vmul.f32 %v1160, %v1170
      %v1296 = vmul.f32 %v1162, %v1170
      %v1297 = vmul.f32 %v1165, %v1170
      %v1298 = vmul.f32 %v1167, %v1170
      %v1299 = vld [vmem:[%s2 + $0x1] sm:$0x1]
      %v1300 = vperm.slane %v1299, 0
      %v1301 = vadd.f32 %v1171, %v1300
      %v1302 = vadd.f32 %v1172, %v1300
      %v1303 = vadd.f32 %v1173, %v1300
      %v1304 = vadd.f32 %v1174, %v1300
      %v1305 = vadd.f32 %v1175, %v1300
      %v1306 = vadd.f32 %v1176, %v1300
      %v1307 = vadd.f32 %v1177, %v1300
      %v1308 = vadd.f32 %v1178, %v1300
      %v1309 = vadd.f32 %v1179, %v1300
      %v1310 = vadd.f32 %v1180, %v1300
      %v1311 = vadd.f32 %v1181, %v1300
      %v1312 = vadd.f32 %v1182, %v1300
      %v1313 = vadd.f32 %v1183, %v1300
      %v1314 = vadd.f32 %v1184, %v1300
      %v1315 = vadd.f32 %v1185, %v1300
      %v1316 = vadd.f32 %v1186, %v1300
      %v1317 = vadd.f32 %v1187, %v1300
      %v1318 = vadd.f32 %v1188, %v1300
      %v1319 = vadd.f32 %v1189, %v1300
      %v1320 = vadd.f32 %v1190, %v1300
      %v1321 = vadd.f32 %v1191, %v1300
      %v1322 = vadd.f32 %v1192, %v1300
      %v1323 = vadd.f32 %v1193, %v1300
      %v1324 = vadd.f32 %v1194, %v1300
      %v1325 = vadd.f32 %v1195, %v1300
      %v1326 = vadd.f32 %v1196, %v1300
      %v1327 = vadd.f32 %v1197, %v1300
      %v1328 = vadd.f32 %v1198, %v1300
      %v1329 = vadd.f32 %v1199, %v1300
      %v1330 = vadd.f32 %v1200, %v1300
      %v1331 = vadd.f32 %v1201, %v1300
      %v1332 = vadd.f32 %v1202, %v1300
      %v1333 = vadd.f32 %v1203, %v1300
      %v1334 = vadd.f32 %v1204, %v1300
      %v1335 = vadd.f32 %v1205, %v1300
      %v1336 = vadd.f32 %v1206, %v1300
      %v1337 = vadd.f32 %v1207, %v1300
      %v1338 = vadd.f32 %v1208, %v1300
      %v1339 = vadd.f32 %v1209, %v1300
      %v1340 = vadd.f32 %v1210, %v1300
      %v1341 = vadd.f32 %v1211, %v1300
      %v1342 = vadd.f32 %v1212, %v1300
      %v1343 = vadd.f32 %v1213, %v1300
      %v1344 = vadd.f32 %v1214, %v1300
      %v1345 = vadd.f32 %v1215, %v1300
      %v1346 = vadd.f32 %v1216, %v1300
      %v1347 = vadd.f32 %v1217, %v1300
      %v1348 = vadd.f32 %v1218, %v1300
      %v1349 = vadd.f32 %v1219, %v1300
      %v1350 = vadd.f32 %v1220, %v1300
      %v1351 = vadd.f32 %v1221, %v1300
      %v1352 = vadd.f32 %v1222, %v1300
      %v1353 = vadd.f32 %v1223, %v1300
      %v1354 = vadd.f32 %v1224, %v1300
      %v1355 = vadd.f32 %v1225, %v1300
      %v1356 = vadd.f32 %v1226, %v1300
      %v1357 = vadd.f32 %v1227, %v1300
      %v1358 = vadd.f32 %v1228, %v1300
      %v1359 = vadd.f32 %v1229, %v1300
      %v1360 = vadd.f32 %v1230, %v1300
      %v1361 = vadd.f32 %v1231, %v1300
      %v1362 = vadd.f32 %v1232, %v1300
      %v1363 = vadd.f32 %v1233, %v1300
      %v1364 = vadd.f32 %v1234, %v1300
      %v1365 = vadd.f32 %v1235, %v1300
      %v1366 = vadd.f32 %v1236, %v1300
      %v1367 = vadd.f32 %v1237, %v1300
      %v1368 = vadd.f32 %v1238, %v1300
      %v1369 = vadd.f32 %v1239, %v1300
      %v1370 = vadd.f32 %v1240, %v1300
      %v1371 = vadd.f32 %v1241, %v1300
      %v1372 = vadd.f32 %v1242, %v1300
      %v1373 = vadd.f32 %v1243, %v1300
      %v1374 = vadd.f32 %v1244, %v1300
      %v1375 = vadd.f32 %v1245, %v1300
      %v1376 = vadd.f32 %v1246, %v1300
      %v1377 = vadd.f32 %v1247, %v1300
      %v1378 = vadd.f32 %v1248, %v1300
      %v1379 = vadd.f32 %v1249, %v1300
      %v1380 = vadd.f32 %v1250, %v1300
      %v1381 = vadd.f32 %v1251, %v1300
      %v1382 = vadd.f32 %v1252, %v1300
      %v1383 = vadd.f32 %v1253, %v1300
      %v1384 = vadd.f32 %v1254, %v1300
      %v1385 = vadd.f32 %v1255, %v1300
      %v1386 = vadd.f32 %v1256, %v1300
      %v1387 = vadd.f32 %v1257, %v1300
      %v1388 = vadd.f32 %v1258, %v1300
      %v1389 = vadd.f32 %v1259, %v1300
      %v1390 = vadd.f32 %v1260, %v1300
      %v1391 = vadd.f32 %v1261, %v1300
      %v1392 = vadd.f32 %v1262, %v1300
      %v1393 = vadd.f32 %v1263, %v1300
      %v1394 = vadd.f32 %v1264, %v1300
      %v1395 = vadd.f32 %v1265, %v1300
      %v1396 = vadd.f32 %v1266, %v1300
      %v1397 = vadd.f32 %v1267, %v1300
      %v1398 = vadd.f32 %v1268, %v1300
      %v1399 = vadd.f32 %v1269, %v1300
      %v1400 = vadd.f32 %v1270, %v1300
      %v1401 = vadd.f32 %v1271, %v1300
      %v1402 = vadd.f32 %v1272, %v1300
      %v1403 = vadd.f32 %v1273, %v1300
      %v1404 = vadd.f32 %v1274, %v1300
      %v1405 = vadd.f32 %v1275, %v1300
      %v1406 = vadd.f32 %v1276, %v1300
      %v1407 = vadd.f32 %v1277, %v1300
      %v1408 = vadd.f32 %v1278, %v1300
      %v1409 = vadd.f32 %v1279, %v1300
      %v1410 = vadd.f32 %v1280, %v1300
      %v1411 = vadd.f32 %v1281, %v1300
      %v1412 = vadd.f32 %v1282, %v1300
      %v1413 = vadd.f32 %v1283, %v1300
      %v1414 = vadd.f32 %v1284, %v1300
      %v1415 = vadd.f32 %v1285, %v1300
      %v1416 = vadd.f32 %v1286, %v1300
      %v1417 = vadd.f32 %v1287, %v1300
      %v1418 = vadd.f32 %v1288, %v1300
      %v1419 = vadd.f32 %v1289, %v1300
      %v1420 = vadd.f32 %v1290, %v1300
      %v1421 = vadd.f32 %v1291, %v1300
      %v1422 = vadd.f32 %v1292, %v1300
      %v1423 = vadd.f32 %v1293, %v1300
      %v1424 = vadd.f32 %v1294, %v1300
      %v1425 = vadd.f32 %v1295, %v1300
      %v1426 = vadd.f32 %v1296, %v1300
      %v1427 = vadd.f32 %v1297, %v1300
      %v1428 = vadd.f32 %v1298, %v1300
      %v1429 = vmul.f32 %v1301, 0.2
      %v1430 = vmul.f32 %v1302, 0.2
      %v1431 = vmul.f32 %v1303, 0.2
      %v1432 = vmul.f32 %v1304, 0.2
      %v1433 = vmul.f32 %v1305, 0.2
      %v1434 = vmul.f32 %v1306, 0.2
      %v1435 = vmul.f32 %v1307, 0.2
      %v1436 = vmul.f32 %v1308, 0.2
      %v1437 = vmul.f32 %v1309, 0.2
      %v1438 = vmul.f32 %v1310, 0.2
      %v1439 = vmul.f32 %v1311, 0.2
      %v1440 = vmul.f32 %v1312, 0.2
      %v1441 = vmul.f32 %v1313, 0.2
      %v1442 = vmul.f32 %v1314, 0.2
      %v1443 = vmul.f32 %v1315, 0.2
      %v1444 = vmul.f32 %v1316, 0.2
      %v1445 = vmul.f32 %v1317, 0.2
      %v1446 = vmul.f32 %v1318, 0.2
      %v1447 = vmul.f32 %v1319, 0.2
      %v1448 = vmul.f32 %v1320, 0.2
      %v1449 = vmul.f32 %v1321, 0.2
      %v1450 = vmul.f32 %v1322, 0.2
      %v1451 = vmul.f32 %v1323, 0.2
      %v1452 = vmul.f32 %v1324, 0.2
      %v1453 = vmul.f32 %v1325, 0.2
      %v1454 = vmul.f32 %v1326, 0.2
      %v1455 = vmul.f32 %v1327, 0.2
      %v1456 = vmul.f32 %v1328, 0.2
      %v1457 = vmul.f32 %v1329, 0.2
      %v1458 = vmul.f32 %v1330, 0.2
      %v1459 = vmul.f32 %v1331, 0.2
      %v1460 = vmul.f32 %v1332, 0.2
      %v1461 = vmul.f32 %v1333, 0.2
      %v1462 = vmul.f32 %v1334, 0.2
      %v1463 = vmul.f32 %v1335, 0.2
      %v1464 = vmul.f32 %v1336, 0.2
      %v1465 = vmul.f32 %v1337, 0.2
      %v1466 = vmul.f32 %v1338, 0.2
      %v1467 = vmul.f32 %v1339, 0.2
      %v1468 = vmul.f32 %v1340, 0.2
      %v1469 = vmul.f32 %v1341, 0.2
      %v1470 = vmul.f32 %v1342, 0.2
      %v1471 = vmul.f32 %v1343, 0.2
      %v1472 = vmul.f32 %v1344, 0.2
      %v1473 = vmul.f32 %v1345, 0.2
      %v1474 = vmul.f32 %v1346, 0.2
      %v1475 = vmul.f32 %v1347, 0.2
      %v1476 = vmul.f32 %v1348, 0.2
      %v1477 = vmul.f32 %v1349, 0.2
      %v1478 = vmul.f32 %v1350, 0.2
      %v1479 = vmul.f32 %v1351, 0.2
      %v1480 = vmul.f32 %v1352, 0.2
      %v1481 = vmul.f32 %v1353, 0.2
      %v1482 = vmul.f32 %v1354, 0.2
      %v1483 = vmul.f32 %v1355, 0.2
      %v1484 = vmul.f32 %v1356, 0.2
      %v1485 = vmul.f32 %v1357, 0.2
      %v1486 = vmul.f32 %v1358, 0.2
      %v1487 = vmul.f32 %v1359, 0.2
      %v1488 = vmul.f32 %v1360, 0.2
      %v1489 = vmul.f32 %v1361, 0.2
      %v1490 = vmul.f32 %v1362, 0.2
      %v1491 = vmul.f32 %v1363, 0.2
      %v1492 = vmul.f32 %v1364, 0.2
      %v1493 = vmul.f32 %v1365, 0.2
      %v1494 = vmul.f32 %v1366, 0.2
      %v1495 = vmul.f32 %v1367, 0.2
      %v1496 = vmul.f32 %v1368, 0.2
      %v1497 = vmul.f32 %v1369, 0.2
      %v1498 = vmul.f32 %v1370, 0.2
      %v1499 = vmul.f32 %v1371, 0.2
      %v1500 = vmul.f32 %v1372, 0.2
      %v1501 = vmul.f32 %v1373, 0.2
      %v1502 = vmul.f32 %v1374, 0.2
      %v1503 = vmul.f32 %v1375, 0.2
      %v1504 = vmul.f32 %v1376, 0.2
      %v1505 = vmul.f32 %v1377, 0.2
      %v1506 = vmul.f32 %v1378, 0.2
      %v1507 = vmul.f32 %v1379, 0.2
      %v1508 = vmul.f32 %v1380, 0.2
      %v1509 = vmul.f32 %v1381, 0.2
      %v1510 = vmul.f32 %v1382, 0.2
      %v1511 = vmul.f32 %v1383, 0.2
      %v1512 = vmul.f32 %v1384, 0.2
      %v1513 = vmul.f32 %v1385, 0.2
      %v1514 = vmul.f32 %v1386, 0.2
      %v1515 = vmul.f32 %v1387, 0.2
      %v1516 = vmul.f32 %v1388, 0.2
      %v1517 = vmul.f32 %v1389, 0.2
      %v1518 = vmul.f32 %v1390, 0.2
      %v1519 = vmul.f32 %v1391, 0.2
      %v1520 = vmul.f32 %v1392, 0.2
      %v1521 = vmul.f32 %v1393, 0.2
      %v1522 = vmul.f32 %v1394, 0.2
      %v1523 = vmul.f32 %v1395, 0.2
      %v1524 = vmul.f32 %v1396, 0.2
      %v1525 = vmul.f32 %v1397, 0.2
      %v1526 = vmul.f32 %v1398, 0.2
      %v1527 = vmul.f32 %v1399, 0.2
      %v1528 = vmul.f32 %v1400, 0.2
      %v1529 = vmul.f32 %v1401, 0.2
      %v1530 = vmul.f32 %v1402, 0.2
      %v1531 = vmul.f32 %v1403, 0.2
      %v1532 = vmul.f32 %v1404, 0.2
      %v1533 = vmul.f32 %v1405, 0.2
      %v1534 = vmul.f32 %v1406, 0.2
      %v1535 = vmul.f32 %v1407, 0.2
      %v1536 = vmul.f32 %v1408, 0.2
      %v1537 = vmul.f32 %v1409, 0.2
      %v1538 = vmul.f32 %v1410, 0.2
      %v1539 = vmul.f32 %v1411, 0.2
      %v1540 = vmul.f32 %v1412, 0.2
      %v1541 = vmul.f32 %v1413, 0.2
      %v1542 = vmul.f32 %v1414, 0.2
      %v1543 = vmul.f32 %v1415, 0.2
      %v1544 = vmul.f32 %v1416, 0.2
      %v1545 = vmul.f32 %v1417, 0.2
      %v1546 = vmul.f32 %v1418, 0.2
      %v1547 = vmul.f32 %v1419, 0.2
      %v1548 = vmul.f32 %v1420, 0.2
      %v1549 = vmul.f32 %v1421, 0.2
      %v1550 = vmul.f32 %v1422, 0.2
      %v1551 = vmul.f32 %v1423, 0.2
      %v1552 = vmul.f32 %v1424, 0.2
      %v1553 = vmul.f32 %v1425, 0.2
      %v1554 = vmul.f32 %v1426, 0.2
      %v1555 = vmul.f32 %v1427, 0.2
      %v1556 = vmul.f32 %v1428, 0.2
      %v1557 = vmax.f32 %v1301, %v1429
      %v1558 = vmax.f32 %v1302, %v1430
      %v1559 = vmax.f32 %v1303, %v1431
      %v1560 = vmax.f32 %v1304, %v1432
      %v1561 = vmax.f32 %v1305, %v1433
      %v1562 = vmax.f32 %v1306, %v1434
      %v1563 = vmax.f32 %v1307, %v1435
      %v1564 = vmax.f32 %v1308, %v1436
      %v1565 = vmax.f32 %v1309, %v1437
      %v1566 = vmax.f32 %v1310, %v1438
      %v1567 = vmax.f32 %v1311, %v1439
      %v1568 = vmax.f32 %v1312, %v1440
      %v1569 = vmax.f32 %v1313, %v1441
      %v1570 = vmax.f32 %v1314, %v1442
      %v1571 = vmax.f32 %v1315, %v1443
      %v1572 = vmax.f32 %v1316, %v1444
      %v1573 = vmax.f32 %v1317, %v1445
      %v1574 = vmax.f32 %v1318, %v1446
      %v1575 = vmax.f32 %v1319, %v1447
      %v1576 = vmax.f32 %v1320, %v1448
      %v1577 = vmax.f32 %v1321, %v1449
      %v1578 = vmax.f32 %v1322, %v1450
      %v1579 = vmax.f32 %v1323, %v1451
      %v1580 = vmax.f32 %v1324, %v1452
      %v1581 = vmax.f32 %v1325, %v1453
      %v1582 = vmax.f32 %v1326, %v1454
      %v1583 = vmax.f32 %v1327, %v1455
      %v1584 = vmax.f32 %v1328, %v1456
      %v1585 = vmax.f32 %v1329, %v1457
      %v1586 = vmax.f32 %v1330, %v1458
      %v1587 = vmax.f32 %v1331, %v1459
      %v1588 = vmax.f32 %v1332, %v1460
      %v1589 = vmax.f32 %v1333, %v1461
      %v1590 = vmax.f32 %v1334, %v1462
      %v1591 = vmax.f32 %v1335, %v1463
      %v1592 = vmax.f32 %v1336, %v1464
      %v1593 = vmax.f32 %v1337, %v1465
      %v1594 = vmax.f32 %v1338, %v1466
      %v1595 = vmax.f32 %v1339, %v1467
      %v1596 = vmax.f32 %v1340, %v1468
      %v1597 = vmax.f32 %v1341, %v1469
      %v1598 = vmax.f32 %v1342, %v1470
      %v1599 = vmax.f32 %v1343, %v1471
      %v1600 = vmax.f32 %v1344, %v1472
      %v1601 = vmax.f32 %v1345, %v1473
      %v1602 = vmax.f32 %v1346, %v1474
      %v1603 = vmax.f32 %v1347, %v1475
      %v1604 = vmax.f32 %v1348, %v1476
      %v1605 = vmax.f32 %v1349, %v1477
      %v1606 = vmax.f32 %v1350, %v1478
      %v1607 = vmax.f32 %v1351, %v1479
      %v1608 = vmax.f32 %v1352, %v1480
      %v1609 = vmax.f32 %v1353, %v1481
      %v1610 = vmax.f32 %v1354, %v1482
      %v1611 = vmax.f32 %v1355, %v1483
      %v1612 = vmax.f32 %v1356, %v1484
      %v1613 = vmax.f32 %v1357, %v1485
      %v1614 = vmax.f32 %v1358, %v1486
      %v1615 = vmax.f32 %v1359, %v1487
      %v1616 = vmax.f32 %v1360, %v1488
      %v1617 = vmax.f32 %v1361, %v1489
      %v1618 = vmax.f32 %v1362, %v1490
      %v1619 = vmax.f32 %v1363, %v1491
      %v1620 = vmax.f32 %v1364, %v1492
      %v1621 = vmax.f32 %v1365, %v1493
      %v1622 = vmax.f32 %v1366, %v1494
      %v1623 = vmax.f32 %v1367, %v1495
      %v1624 = vmax.f32 %v1368, %v1496
      %v1625 = vmax.f32 %v1369, %v1497
      %v1626 = vmax.f32 %v1370, %v1498
      %v1627 = vmax.f32 %v1371, %v1499
      %v1628 = vmax.f32 %v1372, %v1500
      %v1629 = vmax.f32 %v1373, %v1501
      %v1630 = vmax.f32 %v1374, %v1502
      %v1631 = vmax.f32 %v1375, %v1503
      %v1632 = vmax.f32 %v1376, %v1504
      %v1633 = vmax.f32 %v1377, %v1505
      %v1634 = vmax.f32 %v1378, %v1506
      %v1635 = vmax.f32 %v1379, %v1507
      %v1636 = vmax.f32 %v1380, %v1508
      %v1637 = vmax.f32 %v1381, %v1509
      %v1638 = vmax.f32 %v1382, %v1510
      %v1639 = vmax.f32 %v1383, %v1511
      %v1640 = vmax.f32 %v1384, %v1512
      %v1641 = vmax.f32 %v1385, %v1513
      %v1642 = vmax.f32 %v1386, %v1514
      %v1643 = vmax.f32 %v1387, %v1515
      %v1644 = vmax.f32 %v1388, %v1516
      %v1645 = vmax.f32 %v1389, %v1517
      %v1646 = vmax.f32 %v1390, %v1518
      %v1647 = vmax.f32 %v1391, %v1519
      %v1648 = vmax.f32 %v1392, %v1520
      %v1649 = vmax.f32 %v1393, %v1521
      %v1650 = vmax.f32 %v1394, %v1522
      %v1651 = vmax.f32 %v1395, %v1523
      %v1652 = vmax.f32 %v1396, %v1524
      %v1653 = vmax.f32 %v1397, %v1525
      %v1654 = vmax.f32 %v1398, %v1526
      %v1655 = vmax.f32 %v1399, %v1527
      %v1656 = vmax.f32 %v1400, %v1528
      %v1657 = vmax.f32 %v1401, %v1529
      %v1658 = vmax.f32 %v1402, %v1530
      %v1659 = vmax.f32 %v1403, %v1531
      %v1660 = vmax.f32 %v1404, %v1532
      %v1661 = vmax.f32 %v1405, %v1533
      %v1662 = vmax.f32 %v1406, %v1534
      %v1663 = vmax.f32 %v1407, %v1535
      %v1664 = vmax.f32 %v1408, %v1536
      %v1665 = vmax.f32 %v1409, %v1537
      %v1666 = vmax.f32 %v1410, %v1538
      %v1667 = vmax.f32 %v1411, %v1539
      %v1668 = vmax.f32 %v1412, %v1540
      %v1669 = vmax.f32 %v1413, %v1541
      %v1670 = vmax.f32 %v1414, %v1542
      %v1671 = vmax.f32 %v1415, %v1543
      %v1672 = vmax.f32 %v1416, %v1544
      %v1673 = vmax.f32 %v1417, %v1545
      %v1674 = vmax.f32 %v1418, %v1546
      %v1675 = vmax.f32 %v1419, %v1547
      %v1676 = vmax.f32 %v1420, %v1548
      %v1677 = vmax.f32 %v1421, %v1549
      %v1678 = vmax.f32 %v1422, %v1550
      %v1679 = vmax.f32 %v1423, %v1551
      %v1680 = vmax.f32 %v1424, %v1552
      %v1681 = vmax.f32 %v1425, %v1553
      %v1682 = vmax.f32 %v1426, %v1554
      %v1683 = vmax.f32 %v1427, %v1555
      %v1684 = vmax.f32 %v1428, %v1556
      %v1685 = vpack.c.bf16 %v1557, %v1557
      %v1686 = vpack.c.bf16 %v1558, %v1558
      %v1687 = vpack.c.bf16 %v1559, %v1559
      %v1688 = vpack.c.bf16 %v1560, %v1560
      %v1689 = vpack.c.bf16 %v1561, %v1561
      %v1690 = vpack.c.bf16 %v1562, %v1562
      %v1691 = vpack.c.bf16 %v1563, %v1563
      %v1692 = vpack.c.bf16 %v1564, %v1564
      %v1693 = vpack.c.bf16 %v1565, %v1565
      %v1694 = vpack.c.bf16 %v1566, %v1566
      %v1695 = vpack.c.bf16 %v1567, %v1567
      %v1696 = vpack.c.bf16 %v1568, %v1568
      %v1697 = vpack.c.bf16 %v1569, %v1569
      %v1698 = vpack.c.bf16 %v1570, %v1570
      %v1699 = vpack.c.bf16 %v1571, %v1571
      %v1700 = vpack.c.bf16 %v1572, %v1572
      %v1701 = vpack.c.bf16 %v1573, %v1573
      %v1702 = vpack.c.bf16 %v1574, %v1574
      %v1703 = vpack.c.bf16 %v1575, %v1575
      %v1704 = vpack.c.bf16 %v1576, %v1576
      %v1705 = vpack.c.bf16 %v1577, %v1577
      %v1706 = vpack.c.bf16 %v1578, %v1578
      %v1707 = vpack.c.bf16 %v1579, %v1579
      %v1708 = vpack.c.bf16 %v1580, %v1580
      %v1709 = vpack.c.bf16 %v1581, %v1581
      %v1710 = vpack.c.bf16 %v1582, %v1582
      %v1711 = vpack.c.bf16 %v1583, %v1583
      %v1712 = vpack.c.bf16 %v1584, %v1584
      %v1713 = vpack.c.bf16 %v1585, %v1585
      %v1714 = vpack.c.bf16 %v1586, %v1586
      %v1715 = vpack.c.bf16 %v1587, %v1587
      %v1716 = vpack.c.bf16 %v1588, %v1588
      %v1717 = vpack.c.bf16 %v1589, %v1589
      %v1718 = vpack.c.bf16 %v1590, %v1590
      %v1719 = vpack.c.bf16 %v1591, %v1591
      %v1720 = vpack.c.bf16 %v1592, %v1592
      %v1721 = vpack.c.bf16 %v1593, %v1593
      %v1722 = vpack.c.bf16 %v1594, %v1594
      %v1723 = vpack.c.bf16 %v1595, %v1595
      %v1724 = vpack.c.bf16 %v1596, %v1596
      %v1725 = vpack.c.bf16 %v1597, %v1597
      %v1726 = vpack.c.bf16 %v1598, %v1598
      %v1727 = vpack.c.bf16 %v1599, %v1599
      %v1728 = vpack.c.bf16 %v1600, %v1600
      %v1729 = vpack.c.bf16 %v1601, %v1601
      %v1730 = vpack.c.bf16 %v1602, %v1602
      %v1731 = vpack.c.bf16 %v1603, %v1603
      %v1732 = vpack.c.bf16 %v1604, %v1604
      %v1733 = vpack.c.bf16 %v1605, %v1605
      %v1734 = vpack.c.bf16 %v1606, %v1606
      %v1735 = vpack.c.bf16 %v1607, %v1607
      %v1736 = vpack.c.bf16 %v1608, %v1608
      %v1737 = vpack.c.bf16 %v1609, %v1609
      %v1738 = vpack.c.bf16 %v1610, %v1610
      %v1739 = vpack.c.bf16 %v1611, %v1611
      %v1740 = vpack.c.bf16 %v1612, %v1612
      %v1741 = vpack.c.bf16 %v1613, %v1613
      %v1742 = vpack.c.bf16 %v1614, %v1614
      %v1743 = vpack.c.bf16 %v1615, %v1615
      %v1744 = vpack.c.bf16 %v1616, %v1616
      %v1745 = vpack.c.bf16 %v1617, %v1617
      %v1746 = vpack.c.bf16 %v1618, %v1618
      %v1747 = vpack.c.bf16 %v1619, %v1619
      %v1748 = vpack.c.bf16 %v1620, %v1620
      %v1749 = vpack.c.bf16 %v1621, %v1621
      %v1750 = vpack.c.bf16 %v1622, %v1622
      %v1751 = vpack.c.bf16 %v1623, %v1623
      %v1752 = vpack.c.bf16 %v1624, %v1624
      %v1753 = vpack.c.bf16 %v1625, %v1625
      %v1754 = vpack.c.bf16 %v1626, %v1626
      %v1755 = vpack.c.bf16 %v1627, %v1627
      %v1756 = vpack.c.bf16 %v1628, %v1628
      %v1757 = vpack.c.bf16 %v1629, %v1629
      %v1758 = vpack.c.bf16 %v1630, %v1630
      %v1759 = vpack.c.bf16 %v1631, %v1631
      %v1760 = vpack.c.bf16 %v1632, %v1632
      %v1761 = vpack.c.bf16 %v1633, %v1633
      %v1762 = vpack.c.bf16 %v1634, %v1634
      %v1763 = vpack.c.bf16 %v1635, %v1635
      %v1764 = vpack.c.bf16 %v1636, %v1636
      %v1765 = vpack.c.bf16 %v1637, %v1637
      %v1766 = vpack.c.bf16 %v1638, %v1638
      %v1767 = vpack.c.bf16 %v1639, %v1639
      %v1768 = vpack.c.bf16 %v1640, %v1640
      %v1769 = vpack.c.bf16 %v1641, %v1641
      %v1770 = vpack.c.bf16 %v1642, %v1642
      %v1771 = vpack.c.bf16 %v1643, %v1643
      %v1772 = vpack.c.bf16 %v1644, %v1644
      %v1773 = vpack.c.bf16 %v1645, %v1645
      %v1774 = vpack.c.bf16 %v1646, %v1646
      %v1775 = vpack.c.bf16 %v1647, %v1647
      %v1776 = vpack.c.bf16 %v1648, %v1648
      %v1777 = vpack.c.bf16 %v1649, %v1649
      %v1778 = vpack.c.bf16 %v1650, %v1650
      %v1779 = vpack.c.bf16 %v1651, %v1651
      %v1780 = vpack.c.bf16 %v1652, %v1652
      %v1781 = vpack.c.bf16 %v1653, %v1653
      %v1782 = vpack.c.bf16 %v1654, %v1654
      %v1783 = vpack.c.bf16 %v1655, %v1655
      %v1784 = vpack.c.bf16 %v1656, %v1656
      %v1785 = vpack.c.bf16 %v1657, %v1657
      %v1786 = vpack.c.bf16 %v1658, %v1658
      %v1787 = vpack.c.bf16 %v1659, %v1659
      %v1788 = vpack.c.bf16 %v1660, %v1660
      %v1789 = vpack.c.bf16 %v1661, %v1661
      %v1790 = vpack.c.bf16 %v1662, %v1662
      %v1791 = vpack.c.bf16 %v1663, %v1663
      %v1792 = vpack.c.bf16 %v1664, %v1664
      %v1793 = vpack.c.bf16 %v1665, %v1665
      %v1794 = vpack.c.bf16 %v1666, %v1666
      %v1795 = vpack.c.bf16 %v1667, %v1667
      %v1796 = vpack.c.bf16 %v1668, %v1668
      %v1797 = vpack.c.bf16 %v1669, %v1669
      %v1798 = vpack.c.bf16 %v1670, %v1670
      %v1799 = vpack.c.bf16 %v1671, %v1671
      %v1800 = vpack.c.bf16 %v1672, %v1672
      %v1801 = vpack.c.bf16 %v1673, %v1673
      %v1802 = vpack.c.bf16 %v1674, %v1674
      %v1803 = vpack.c.bf16 %v1675, %v1675
      %v1804 = vpack.c.bf16 %v1676, %v1676
      %v1805 = vpack.c.bf16 %v1677, %v1677
      %v1806 = vpack.c.bf16 %v1678, %v1678
      %v1807 = vpack.c.bf16 %v1679, %v1679
      %v1808 = vpack.c.bf16 %v1680, %v1680
      %v1809 = vpack.c.bf16 %v1681, %v1681
      %v1810 = vpack.c.bf16 %v1682, %v1682
      %v1811 = vpack.c.bf16 %v1683, %v1683
      %v1812 = vpack.c.bf16 %v1684, %v1684
      %1813 = vst [vmem:[%s172] sm:$0xf] %v1685
      %1814 = vst [vmem:[%s172 + $0x4] sm:$0xf] %v1686
      %1815 = vst [vmem:[%s172 + $0x8] sm:$0xf] %v1687
      %1816 = vst [vmem:[%s172 + $0xc] sm:$0xf] %v1688
      %1817 = vst [vmem:[%s172 + $0x10] sm:$0xf] %v1689
      %1818 = vst [vmem:[%s172 + $0x14] sm:$0xf] %v1690
      %1819 = vst [vmem:[%s172 + $0x18] sm:$0xf] %v1691
      %1820 = vst [vmem:[%s172 + $0x1c] sm:$0xf] %v1692
      %1821 = vst [vmem:[%s172 + $0x20] sm:$0xf] %v1693
      %1822 = vst [vmem:[%s172 + $0x24] sm:$0xf] %v1694
      %1823 = vst [vmem:[%s172 + $0x28] sm:$0xf] %v1695
      %1824 = vst [vmem:[%s172 + $0x2c] sm:$0xf] %v1696
      %1825 = vst [vmem:[%s172 + $0x30] sm:$0xf] %v1697
      %1826 = vst [vmem:[%s172 + $0x34] sm:$0xf] %v1698
      %1827 = vst [vmem:[%s172 + $0x38] sm:$0xf] %v1699
      %1828 = vst [vmem:[%s172 + $0x3c] sm:$0xf] %v1700
      %1829 = vst [vmem:[%s172 + $0x40] sm:$0xf] %v1701
      %1830 = vst [vmem:[%s172 + $0x44] sm:$0xf] %v1702
      %1831 = vst [vmem:[%s172 + $0x48] sm:$0xf] %v1703
      %1832 = vst [vmem:[%s172 + $0x4c] sm:$0xf] %v1704
      %1833 = vst [vmem:[%s172 + $0x50] sm:$0xf] %v1705
      %1834 = vst [vmem:[%s172 + $0x54] sm:$0xf] %v1706
      %1835 = vst [vmem:[%s172 + $0x58] sm:$0xf] %v1707
      %1836 = vst [vmem:[%s172 + $0x5c] sm:$0xf] %v1708
      %1837 = vst [vmem:[%s172 + $0x60] sm:$0xf] %v1709
      %1838 = vst [vmem:[%s172 + $0x64] sm:$0xf] %v1710
      %1839 = vst [vmem:[%s172 + $0x68] sm:$0xf] %v1711
      %1840 = vst [vmem:[%s172 + $0x6c] sm:$0xf] %v1712
      %1841 = vst [vmem:[%s172 + $0x70] sm:$0xf] %v1713
      %1842 = vst [vmem:[%s172 + $0x74] sm:$0xf] %v1714
      %1843 = vst [vmem:[%s172 + $0x78] sm:$0xf] %v1715
      %1844 = vst [vmem:[%s172 + $0x7c] sm:$0xf] %v1716
      %1845 = vst [vmem:[%s172 + $0x80] sm:$0xf] %v1717
      %1846 = vst [vmem:[%s172 + $0x84] sm:$0xf] %v1718
      %1847 = vst [vmem:[%s172 + $0x88] sm:$0xf] %v1719
      %1848 = vst [vmem:[%s172 + $0x8c] sm:$0xf] %v1720
      %1849 = vst [vmem:[%s172 + $0x90] sm:$0xf] %v1721
      %1850 = vst [vmem:[%s172 + $0x94] sm:$0xf] %v1722
      %1851 = vst [vmem:[%s172 + $0x98] sm:$0xf] %v1723
      %1852 = vst [vmem:[%s172 + $0x9c] sm:$0xf] %v1724
      %1853 = vst [vmem:[%s172 + $0xa0] sm:$0xf] %v1725
      %1854 = vst [vmem:[%s172 + $0xa4] sm:$0xf] %v1726
      %1855 = vst [vmem:[%s172 + $0xa8] sm:$0xf] %v1727
      %1856 = vst [vmem:[%s172 + $0xac] sm:$0xf] %v1728
      %1857 = vst [vmem:[%s172 + $0xb0] sm:$0xf] %v1729
      %1858 = vst [vmem:[%s172 + $0xb4] sm:$0xf] %v1730
      %1859 = vst [vmem:[%s172 + $0xb8] sm:$0xf] %v1731
      %1860 = vst [vmem:[%s172 + $0xbc] sm:$0xf] %v1732
      %1861 = vst [vmem:[%s172 + $0xc0] sm:$0xf] %v1733
      %1862 = vst [vmem:[%s172 + $0xc4] sm:$0xf] %v1734
      %1863 = vst [vmem:[%s172 + $0xc8] sm:$0xf] %v1735
      %1864 = vst [vmem:[%s172 + $0xcc] sm:$0xf] %v1736
      %1865 = vst [vmem:[%s172 + $0xd0] sm:$0xf] %v1737
      %1866 = vst [vmem:[%s172 + $0xd4] sm:$0xf] %v1738
      %1867 = vst [vmem:[%s172 + $0xd8] sm:$0xf] %v1739
      %1868 = vst [vmem:[%s172 + $0xdc] sm:$0xf] %v1740
      %1869 = vst [vmem:[%s172 + $0xe0] sm:$0xf] %v1741
      %1870 = vst [vmem:[%s172 + $0xe4] sm:$0xf] %v1742
      %1871 = vst [vmem:[%s172 + $0xe8] sm:$0xf] %v1743
      %1872 = vst [vmem:[%s172 + $0xec] sm:$0xf] %v1744
      %1873 = vst [vmem:[%s172 + $0xf0] sm:$0xf] %v1745
      %1874 = vst [vmem:[%s172 + $0xf4] sm:$0xf] %v1746
      %1875 = vst [vmem:[%s172 + $0xf8] sm:$0xf] %v1747
      %1876 = vst [vmem:[%s172 + $0xfc] sm:$0xf] %v1748
      %1877 = vst [vmem:[%s172 + $0x100] sm:$0xf] %v1749
      %1878 = vst [vmem:[%s172 + $0x104] sm:$0xf] %v1750
      %1879 = vst [vmem:[%s172 + $0x108] sm:$0xf] %v1751
      %1880 = vst [vmem:[%s172 + $0x10c] sm:$0xf] %v1752
      %1881 = vst [vmem:[%s172 + $0x110] sm:$0xf] %v1753
      %1882 = vst [vmem:[%s172 + $0x114] sm:$0xf] %v1754
      %1883 = vst [vmem:[%s172 + $0x118] sm:$0xf] %v1755
      %1884 = vst [vmem:[%s172 + $0x11c] sm:$0xf] %v1756
      %1885 = vst [vmem:[%s172 + $0x120] sm:$0xf] %v1757
      %1886 = vst [vmem:[%s172 + $0x124] sm:$0xf] %v1758
      %1887 = vst [vmem:[%s172 + $0x128] sm:$0xf] %v1759
      %1888 = vst [vmem:[%s172 + $0x12c] sm:$0xf] %v1760
      %1889 = vst [vmem:[%s172 + $0x130] sm:$0xf] %v1761
      %1890 = vst [vmem:[%s172 + $0x134] sm:$0xf] %v1762
      %1891 = vst [vmem:[%s172 + $0x138] sm:$0xf] %v1763
      %1892 = vst [vmem:[%s172 + $0x13c] sm:$0xf] %v1764
      %1893 = vst [vmem:[%s172 + $0x140] sm:$0xf] %v1765
      %1894 = vst [vmem:[%s172 + $0x144] sm:$0xf] %v1766
      %1895 = vst [vmem:[%s172 + $0x148] sm:$0xf] %v1767
      %1896 = vst [vmem:[%s172 + $0x14c] sm:$0xf] %v1768
      %1897 = vst [vmem:[%s172 + $0x150] sm:$0xf] %v1769
      %1898 = vst [vmem:[%s172 + $0x154] sm:$0xf] %v1770
      %1899 = vst [vmem:[%s172 + $0x158] sm:$0xf] %v1771
      %1900 = vst [vmem:[%s172 + $0x15c] sm:$0xf] %v1772
      %1901 = vst [vmem:[%s172 + $0x160] sm:$0xf] %v1773
      %1902 = vst [vmem:[%s172 + $0x164] sm:$0xf] %v1774
      %1903 = vst [vmem:[%s172 + $0x168] sm:$0xf] %v1775
      %1904 = vst [vmem:[%s172 + $0x16c] sm:$0xf] %v1776
      %1905 = vst [vmem:[%s172 + $0x170] sm:$0xf] %v1777
      %1906 = vst [vmem:[%s172 + $0x174] sm:$0xf] %v1778
      %1907 = vst [vmem:[%s172 + $0x178] sm:$0xf] %v1779
      %1908 = vst [vmem:[%s172 + $0x17c] sm:$0xf] %v1780
      %1909 = vst [vmem:[%s172 + $0x180] sm:$0xf] %v1781
      %1910 = vst [vmem:[%s172 + $0x184] sm:$0xf] %v1782
      %1911 = vst [vmem:[%s172 + $0x188] sm:$0xf] %v1783
      %1912 = vst [vmem:[%s172 + $0x18c] sm:$0xf] %v1784
      %1913 = vst [vmem:[%s172 + $0x190] sm:$0xf] %v1785
      %1914 = vst [vmem:[%s172 + $0x194] sm:$0xf] %v1786
      %1915 = vst [vmem:[%s172 + $0x198] sm:$0xf] %v1787
      %1916 = vst [vmem:[%s172 + $0x19c] sm:$0xf] %v1788
      %1917 = vst [vmem:[%s172 + $0x1a0] sm:$0xf] %v1789
      %1918 = vst [vmem:[%s172 + $0x1a4] sm:$0xf] %v1790
      %1919 = vst [vmem:[%s172 + $0x1a8] sm:$0xf] %v1791
      %1920 = vst [vmem:[%s172 + $0x1ac] sm:$0xf] %v1792
      %1921 = vst [vmem:[%s172 + $0x1b0] sm:$0xf] %v1793
      %1922 = vst [vmem:[%s172 + $0x1b4] sm:$0xf] %v1794
      %1923 = vst [vmem:[%s172 + $0x1b8] sm:$0xf] %v1795
      %1924 = vst [vmem:[%s172 + $0x1bc] sm:$0xf] %v1796
      %1925 = vst [vmem:[%s172 + $0x1c0] sm:$0xf] %v1797
      %1926 = vst [vmem:[%s172 + $0x1c4] sm:$0xf] %v1798
      %1927 = vst [vmem:[%s172 + $0x1c8] sm:$0xf] %v1799
      %1928 = vst [vmem:[%s172 + $0x1cc] sm:$0xf] %v1800
      %1929 = vst [vmem:[%s172 + $0x1d0] sm:$0xf] %v1801
      %1930 = vst [vmem:[%s172 + $0x1d4] sm:$0xf] %v1802
      %1931 = vst [vmem:[%s172 + $0x1d8] sm:$0xf] %v1803
      %1932 = vst [vmem:[%s172 + $0x1dc] sm:$0xf] %v1804
      %1933 = vst [vmem:[%s172 + $0x1e0] sm:$0xf] %v1805
      %1934 = vst [vmem:[%s172 + $0x1e4] sm:$0xf] %v1806
      %1935 = vst [vmem:[%s172 + $0x1e8] sm:$0xf] %v1807
      %1936 = vst [vmem:[%s172 + $0x1ec] sm:$0xf] %v1808
      %1937 = vst [vmem:[%s172 + $0x1f0] sm:$0xf] %v1809
      %1938 = vst [vmem:[%s172 + $0x1f4] sm:$0xf] %v1810
      %1939 = vst [vmem:[%s172 + $0x1f8] sm:$0xf] %v1811
      %1940 = vst [vmem:[%s172 + $0x1fc] sm:$0xf] %v1812
      %s1941 = smul.u32 128, %s14
      %p1942 = scmp.lt.s32.totalorder %s1941, 255
      %s1943 = scalar_select %p1942, %s1941, 255
      %s1944 = smul.addr %s1943, 4
      %s1945 = scalar_lea.vmem %s3, %s1944
      // Predicated region
      $region33: #{discriminator_wgan_forward.5} parent=31 // pred_check
        %p1946 = pneg %p100
      $region34: #{discriminator_wgan_forward.5} parent=31 // pred_check_branch
        %1948 = sbr.rel (%p1946) target = $region36
      $region35: #{discriminator_wgan_forward.5} parent=31 // pred_region
        %s1949 = smul.u32 128, %s14
      $region36: #{discriminator_wgan_forward.5} parent=31 // pred_fallthru
        _
    $region32: #{discriminator_wgan_forward.5} parent=5 // pred_fallthru
      _
    %p1950 = scmp.le.s32.totalorder 2, %s9
    // Predicated region
    $region37: #{discriminator_wgan_forward.5} parent=5 // pred_check
      %p1951 = pneg %p1950
    $region38: #{discriminator_wgan_forward.5} parent=5 // pred_check_branch
      %1953 = sbr.rel (%p1951) target = $region40
    $region39: #{discriminator_wgan_forward.5} parent=5 // pred_region
      %s1954 = ssub.s32 %s9, 2
      // Predicated region
      $region41: #{discriminator_wgan_forward.5} parent=39 // pred_check
        %p1955 = pneg %p106
      $region42: #{discriminator_wgan_forward.5} parent=39 // pred_check_branch
        %1957 = sbr.rel (%p1955) target = $region44
      $region43: #{discriminator_wgan_forward.5} parent=39 // pred_region
        %s1958 = smul.u32 128, %s15
        %p1959 = scmp.lt.s32.totalorder %s1958, 255
        %s1960 = scalar_select %p1959, %s1958, 255
        %s1961 = smul.addr %s1960, 4
        %s1962 = scalar_lea.vmem %s3, %s1961
      $region44: #{discriminator_wgan_forward.5} parent=39 // pred_fallthru
        _
    $region40: #{discriminator_wgan_forward.5} parent=5 // pred_fallthru
      _
  $region6: #{discriminator_wgan_forward.5} parent=0 // loop_footer
    %s13 = sadd.s32 1, %s9
  $region7: #{discriminator_wgan_forward.5} parent=0 // loop_footer_branch
    %8 = sbr.rel target = $region3
  $region8: #{discriminator_wgan_forward.5} parent=0 // loop_exit
    _

// kernel: discriminator_wgan_forward.6
$region0: #{discriminator_wgan_forward.6}
  #allocation0 [shape = 'u32[]', space=smem, size = 0x4, offset = 0x4, fixed_abs, tag = 'smem constant byte address 0x4 - core index']
  #allocation1 [shape = 'u32[72,128]{1,0:T(1,128)}', space=vmem, size = 0x9000, scoped, tag = 'internal scratch']
  %s0 = inlined_call_operand.vmem [shape: bf16[592,32], index: 0, kind: input, shape index: {}]
  %s1 = inlined_call_operand.vmem [shape: bf16[4,32,128], index: 1, kind: input, shape index: {}]
  %s2 = inlined_call_operand.vmem [shape: f32[2,128], index: 2, kind: input, shape index: {}]
  %s3 = inlined_call_operand.vmem [shape: bf16[544,128], index: 3, kind: output, shape index: {}]
  %s4 = sld [smem:[#allocation0]]
  $region45: #{discriminator_wgan_forward.6} parent=0
    _
  %s6 = ssub.s32 1, %s4
  %s7 = scalar_select 0, %s6, %s4
  loop: start=0, step=1, limit=4
  $region2: #{discriminator_wgan_forward.6} parent=0 // loop_pre_header
    _
  $region3: #{discriminator_wgan_forward.6} parent=0 // loop_header
    %s9 = sphi 0, %s13
    %p10 = scmp.ge.s32.totalorder %s9, 4
    %s19 = sphi 0, %s21
    %s22 = sphi 0, %s19
    %s23 = sphi 0, %s22
    %s39 = sphi 0, %s23
    %s43 = sphi 0, %s43
    %s45 = sphi 0, %s43
    %s46 = sphi 0, %s45
    %s60 = sphi 0, %s46
    %s64 = sphi 0, %s64
    %s66 = sphi 0, %s64
    %s67 = sphi 0, %s66
    %s81 = sphi 0, %s67
    %s87 = sphi 0, %s89
    %s90 = sphi 0, %s87
    %s91 = sphi 0, %s90
    %s107 = sphi 0, %s91
  $region4: #{discriminator_wgan_forward.6} parent=0 // loop_header_branch
    %12 = sbr.rel (%p10) target = $region8
  $region5: #{discriminator_wgan_forward.6} parent=0 // loop_body
    %s14 = ssub.s32 %s9, 1
    %s15 = ssub.s32 %s9, 2
    %s16 = sadd.s32 %s9, 1
    %s17 = ssub.s32 %s9, %s16
    %p18 = scmp.eq.s32.totalorder %s17, 0
    %s20 = sadd.s32 %s19, 1
    %s21 = scalar_select %p18, %s19, %s20
    %p24 = pneg %p18
    %p25 = scmp.eq.s32.totalorder %s9, 1
    %p26 = por %p24, %p25
    %p27 = scmp.ne.s32.totalorder %s19, %s22
    %p28 = scmp.eq.s32.totalorder %s9, 0
    %p29 = por %p27, %p28
    %p30 = scmp.ne.s32.totalorder %s19, %s22
    %p31 = scmp.eq.s32.totalorder %s14, 1
    %p32 = por %p30, %p31
    %p33 = scmp.ne.s32.totalorder %s22, %s23
    %p34 = scmp.eq.s32.totalorder %s14, 0
    %p35 = por %p33, %p34
    %p36 = scmp.ne.s32.totalorder %s22, %s23
    %p37 = scmp.eq.s32.totalorder %s15, 1
    %p38 = por %p36, %p37
    %p40 = scmp.ne.s32.totalorder %s23, %s39
    %p41 = scmp.eq.s32.totalorder %s15, 0
    %p42 = por %p40, %p41
    %s44 = sadd.s32 %s43, 1
    %p47 = scmp.eq.s32.totalorder %s9, 1
    %p48 = scmp.ne.s32.totalorder %s43, %s45
    %p49 = scmp.eq.s32.totalorder %s9, 0
    %p50 = por %p48, %p49
    %p51 = scmp.ne.s32.totalorder %s43, %s45
    %p52 = scmp.eq.s32.totalorder %s14, 1
    %p53 = por %p51, %p52
    %p54 = scmp.ne.s32.totalorder %s45, %s46
    %p55 = scmp.eq.s32.totalorder %s14, 0
    %p56 = por %p54, %p55
    %p57 = scmp.ne.s32.totalorder %s45, %s46
    %p58 = scmp.eq.s32.totalorder %s15, 1
    %p59 = por %p57, %p58
    %p61 = scmp.ne.s32.totalorder %s46, %s60
    %p62 = scmp.eq.s32.totalorder %s15, 0
    %p63 = por %p61, %p62
    %s65 = sadd.s32 %s64, 1
    %p68 = scmp.eq.s32.totalorder %s9, 1
    %p69 = scmp.ne.s32.totalorder %s64, %s66
    %p70 = scmp.eq.s32.totalorder %s9, 0
    %p71 = por %p69, %p70
    %p72 = scmp.ne.s32.totalorder %s64, %s66
    %p73 = scmp.eq.s32.totalorder %s14, 1
    %p74 = por %p72, %p73
    %p75 = scmp.ne.s32.totalorder %s66, %s67
    %p76 = scmp.eq.s32.totalorder %s14, 0
    %p77 = por %p75, %p76
    %p78 = scmp.ne.s32.totalorder %s66, %s67
    %p79 = scmp.eq.s32.totalorder %s15, 1
    %p80 = por %p78, %p79
    %p82 = scmp.ne.s32.totalorder %s67, %s81
    %p83 = scmp.eq.s32.totalorder %s15, 0
    %p84 = por %p82, %p83
    %s85 = ssub.s32 %s9, %s16
    %p86 = scmp.eq.s32.totalorder %s85, 0
    %s88 = sadd.s32 %s87, 1
    %s89 = scalar_select %p86, %s87, %s88
    %p92 = pneg %p86
    %p93 = scmp.eq.s32.totalorder %s9, 1
    %p94 = por %p92, %p93
    %p95 = scmp.ne.s32.totalorder %s87, %s90
    %p96 = scmp.eq.s32.totalorder %s9, 0
    %p97 = por %p95, %p96
    %p98 = scmp.ne.s32.totalorder %s87, %s90
    %p99 = scmp.eq.s32.totalorder %s14, 1
    %p100 = por %p98, %p99
    %p101 = scmp.ne.s32.totalorder %s90, %s91
    %p102 = scmp.eq.s32.totalorder %s14, 0
    %p103 = por %p101, %p102
    %p104 = scmp.ne.s32.totalorder %s90, %s91
    %p105 = scmp.eq.s32.totalorder %s15, 1
    %p106 = por %p104, %p105
    %p108 = scmp.ne.s32.totalorder %s91, %s107
    %p109 = scmp.eq.s32.totalorder %s15, 0
    %p110 = por %p108, %p109
    %p111 = scmp.le.s32.totalorder 1, %s9
    %p112 = scmp.lt.s32.totalorder %s9, 3
    %p113 = pnand %p111, %p112
    %p114 = pneg %p113
    // Predicated region
    $region9: #{discriminator_wgan_forward.6} parent=5 // pred_check
      _
    $region10: #{discriminator_wgan_forward.6} parent=5 // pred_check_branch
      %116 = sbr.rel (%p113) target = $region12
    $region11: #{discriminator_wgan_forward.6} parent=5 // pred_region
      %s117 = ssub.s32 %s9, 1
      // Predicated region
      $region13: #{discriminator_wgan_forward.6} parent=11 // pred_check
        %p118 = pneg %p56
      $region14: #{discriminator_wgan_forward.6} parent=11 // pred_check_branch
        %120 = sbr.rel (%p118) target = $region16
      $region15: #{discriminator_wgan_forward.6} parent=11 // pred_region
        _
      $region16: #{discriminator_wgan_forward.6} parent=11 // pred_fallthru
        _
      // Predicated region
      $region17: #{discriminator_wgan_forward.6} parent=11 // pred_check
        %p121 = pneg %p77
      $region18: #{discriminator_wgan_forward.6} parent=11 // pred_check_branch
        %123 = sbr.rel (%p121) target = $region20
      $region19: #{discriminator_wgan_forward.6} parent=11 // pred_region
        _
      $region20: #{discriminator_wgan_forward.6} parent=11 // pred_fallthru
        _
    $region12: #{discriminator_wgan_forward.6} parent=5 // pred_fallthru
      _
    %p124 = scmp.lt.s32.totalorder %s9, 2
    // Predicated region
    $region21: #{discriminator_wgan_forward.6} parent=5 // pred_check
      %p125 = pneg %p124
    $region22: #{discriminator_wgan_forward.6} parent=5 // pred_check_branch
      %127 = sbr.rel (%p125) target = $region24
    $region23: #{discriminator_wgan_forward.6} parent=5 // pred_region
      // Predicated region
      $region25: #{discriminator_wgan_forward.6} parent=23 // pred_check
        %p128 = pneg %p29
      $region26: #{discriminator_wgan_forward.6} parent=23 // pred_check_branch
        %130 = sbr.rel (%p128) target = $region28
      $region27: #{discriminator_wgan_forward.6} parent=23 // pred_region
        %s131 = smul.u32 37, %s9
        %p132 = scmp.lt.s32.totalorder %s131, 73
        %s133 = scalar_select %p132, %s131, 73
        %s134 = smul.addr %s133, 4
        %s135 = scalar_lea.vmem %s0, %s134
        %s136 = smul.u32 37, %s9
      $region28: #{discriminator_wgan_forward.6} parent=23 // pred_fallthru
        _
    $region24: #{discriminator_wgan_forward.6} parent=5 // pred_fallthru
      _
    %p137 = scmp.le.s32.totalorder 1, %s9
    %p138 = scmp.lt.s32.totalorder %s9, 3
    %p139 = pnand %p137, %p138
    %p140 = pneg %p139
    // Predicated region
    $region29: #{discriminator_wgan_forward.6} parent=5 // pred_check
      _
    $region30: #{discriminator_wgan_forward.6} parent=5 // pred_check_branch
      %142 = sbr.rel (%p139) target = $region32
    $region31: #{discriminator_wgan_forward.6} parent=5 // pred_region
      %s143 = ssub.s32 %s9, 1
      %s144 = smul.u32 37, %s14
      %p145 = scmp.lt.s32.totalorder %s144, 73
      %s146 = scalar_select %p145, %s144, 73
      %s147 = smul.addr %s146, 4
      %s148 = scalar_lea.vmem %s0, %s147
      %p149 = pneg %p35
      %p150 = pneg %p32
      %p151 = pneg %p56
      %p152 = pneg %p53
      %p153 = pneg %p77
      %p154 = pneg %p74
      %p155 = pneg %p103
      %p156 = pneg %p100
      %s157 = smul.u32 34, %s14
      %p158 = scmp.lt.s32.totalorder %s157, 67
      %s159 = scalar_select %p158, %s157, 67
      %s160 = smul.addr %s159, 4
      %s161 = scalar_lea.vmem %s3, %s160
      %s162 = smul.u32 37, %s14
      %p163 = scmp.lt.s32.totalorder %s162, 73
      %s164 = scalar_select %p163, %s162, 73
      %s165 = smul.addr %s164, 4
      %s166 = scalar_lea.vmem %s0, %s165
      %s167 = smul.u32 37, %s14
      %s168 = smul.u32 34, %s14
      %p169 = scmp.lt.s32.totalorder %s168, 67
      %s170 = scalar_select %p169, %s168, 67
      %s171 = smul.addr %s170, 4
      %s172 = scalar_lea.vmem %s3, %s171
      %s173 = smul.u32 34, %s14
      %v175 = vld [vmem:[%s166] sm:$0xf]
      %v176 = vld [vmem:[%s166 + $0x4] sm:$0xf]
      %v177 = vld [vmem:[%s166 + $0x8] sm:$0xf]
      %v178 = vld [vmem:[%s166 + $0xc] sm:$0xf]
      %v179 = vld [vmem:[%s166 + $0x10] sm:$0xf]
      %v180 = vld [vmem:[%s166 + $0x14] sm:$0xf]
      %v181 = vld [vmem:[%s166 + $0x18] sm:$0xf]
      %v182 = vld [vmem:[%s166 + $0x1c] sm:$0xf]
      %v183 = vld [vmem:[%s166 + $0x20] sm:$0xf]
      %v184 = vld [vmem:[%s166 + $0x24] sm:$0xf]
      %v185 = vld [vmem:[%s166 + $0x28] sm:$0xf]
      %v186 = vld [vmem:[%s166 + $0x2c] sm:$0xf]
      %v187 = vld [vmem:[%s166 + $0x30] sm:$0xf]
      %v188 = vld [vmem:[%s166 + $0x34] sm:$0xf]
      %v189 = vld [vmem:[%s166 + $0x38] sm:$0xf]
      %v190 = vld [vmem:[%s166 + $0x3c] sm:$0xf]
      %v191 = vld [vmem:[%s166 + $0x40] sm:$0xf]
      %v192 = vld [vmem:[%s166 + $0x44] sm:$0xf]
      %v193 = vld [vmem:[%s166 + $0x48] sm:$0xf]
      %v194 = vld [vmem:[%s166 + $0x4c] sm:$0xf]
      %v195 = vld [vmem:[%s166 + $0x50] sm:$0xf]
      %v196 = vld [vmem:[%s166 + $0x54] sm:$0xf]
      %v197 = vld [vmem:[%s166 + $0x58] sm:$0xf]
      %v198 = vld [vmem:[%s166 + $0x5c] sm:$0xf]
      %v199 = vld [vmem:[%s166 + $0x60] sm:$0xf]
      %v200 = vld [vmem:[%s166 + $0x64] sm:$0xf]
      %v201 = vld [vmem:[%s166 + $0x68] sm:$0xf]
      %v202 = vld [vmem:[%s166 + $0x6c] sm:$0xf]
      %v203 = vld [vmem:[%s166 + $0x70] sm:$0xf]
      %v204 = vld [vmem:[%s166 + $0x74] sm:$0xf]
      %v205 = vld [vmem:[%s166 + $0x78] sm:$0xf]
      %v206 = vld [vmem:[%s166 + $0x7c] sm:$0xf]
      %v207 = vld [vmem:[%s166 + $0x80] sm:$0xf]
      %v208 = vld [vmem:[%s166 + $0x84] sm:$0xf]
      %v209 = vld [vmem:[%s1] sm:$0xf]
      %v210 = vld [vmem:[%s1 + $0x4] sm:$0xf]
      %v211 = vld [vmem:[%s1 + $0x8] sm:$0xf]
      %v212 = vld [vmem:[%s1 + $0xc] sm:$0xf]
      %v213 = vld [vmem:[%s166 + $0x88] sm:$0x1]
      %s214 = scalar_lea.vmem %s1, 16
      %v215 = vld [vmem:[%s214] sm:$0xf]
      %v216 = vld [vmem:[%s214 + $0x4] sm:$0xf]
      %v217 = vld [vmem:[%s214 + $0x8] sm:$0xf]
      %v218 = vld [vmem:[%s214 + $0xc] sm:$0xf]
      %v254 = vunpack.c.l.b16 %v175
      %v255 = vunpack.c.l.b16 %v176
      %v256 = vunpack.c.l.b16 %v177
      %v257 = vunpack.c.l.b16 %v178
      %v258 = vunpack.c.l.b16 %v179
      %v259 = vunpack.c.l.b16 %v180
      %v260 = vunpack.c.l.b16 %v181
      %v261 = vunpack.c.l.b16 %v182
      %v262 = vunpack.c.l.b16 %v183
      %v263 = vunpack.c.l.b16 %v184
      %v264 = vunpack.c.l.b16 %v185
      %v265 = vunpack.c.l.b16 %v186
      %v266 = vunpack.c.l.b16 %v187
      %v267 = vunpack.c.l.b16 %v188
      %v268 = vunpack.c.l.b16 %v189
      %v269 = vunpack.c.l.b16 %v190
      %v270 = vunpack.c.l.b16 %v191
      %v271 = vunpack.c.l.b16 %v192
      %v272 = vunpack.c.l.b16 %v193
      %v273 = vunpack.c.l.b16 %v194
      %v274 = vunpack.c.l.b16 %v195
      %v275 = vunpack.c.l.b16 %v196
      %v276 = vunpack.c.l.b16 %v197
      %v277 = vunpack.c.l.b16 %v198
      %v278 = vunpack.c.l.b16 %v199
      %v279 = vunpack.c.l.b16 %v200
      %v280 = vunpack.c.l.b16 %v201
      %v281 = vunpack.c.l.b16 %v202
      %v282 = vunpack.c.l.b16 %v203
      %v283 = vunpack.c.l.b16 %v204
      %v284 = vunpack.c.l.b16 %v205
      %v285 = vunpack.c.l.b16 %v206
      %v286 = vunpack.c.l.b16 %v207
      %v287 = vunpack.c.l.b16 %v208
      %v288 = vunpack.c.l.b16 %v213
      %v289 = vpack.c.b16 %v255, %v254
      %v290 = vpack.c.b16 %v257, %v256
      %v291 = vpack.c.b16 %v259, %v258
      %v292 = vpack.c.b16 %v261, %v260
      %v293 = vpack.c.b16 %v263, %v262
      %v294 = vpack.c.b16 %v265, %v264
      %v295 = vpack.c.b16 %v267, %v266
      %v296 = vpack.c.b16 %v269, %v268
      %v297 = vpack.c.b16 %v271, %v270
      %v298 = vpack.c.b16 %v273, %v272
      %v299 = vpack.c.b16 %v275, %v274
      %v300 = vpack.c.b16 %v277, %v276
      %v301 = vpack.c.b16 %v279, %v278
      %v302 = vpack.c.b16 %v281, %v280
      %v303 = vpack.c.b16 %v283, %v282
      %v304 = vpack.c.b16 %v285, %v284
      %v305 = vpack.c.b16 %v287, %v286
      %v306 = vpack.c.b16 %v288, %v288
      %vm307 = vsmask.f32 7424
      %v309 = vshrl.u32 %v289, 16
      %v311 = vshll.u32 %v289, 16
      %v313 = vrot.slane %v311, 1
      %v314 = vor.u32 %v309, %v313
      %v316 = vshll.u32 %v290, 16
      %v318 = vrot.slane %v316, 1
      %v319 = vsel %vm307, %v314, %v318
      %v320 = vshrl.u32 %v290, 16
      %v322 = vor.u32 %v320, %v318
      %v324 = vshll.u32 %v291, 16
      %v326 = vrot.slane %v324, 1
      %v327 = vsel %vm307, %v322, %v326
      %v328 = vshrl.u32 %v291, 16
      %v330 = vor.u32 %v328, %v326
      %v332 = vshll.u32 %v292, 16
      %v334 = vrot.slane %v332, 1
      %v335 = vsel %vm307, %v330, %v334
      %v336 = vshrl.u32 %v292, 16
      %v338 = vor.u32 %v336, %v334
      %v340 = vshll.u32 %v293, 16
      %v342 = vrot.slane %v340, 1
      %v343 = vsel %vm307, %v338, %v342
      %v344 = vshrl.u32 %v293, 16
      %v346 = vor.u32 %v344, %v342
      %v348 = vshll.u32 %v294, 16
      %v350 = vrot.slane %v348, 1
      %v351 = vsel %vm307, %v346, %v350
      %v352 = vshrl.u32 %v294, 16
      %v354 = vor.u32 %v352, %v350
      %v356 = vshll.u32 %v295, 16
      %v358 = vrot.slane %v356, 1
      %v359 = vsel %vm307, %v354, %v358
      %v360 = vshrl.u32 %v295, 16
      %v362 = vor.u32 %v360, %v358
      %v364 = vshll.u32 %v296, 16
      %v366 = vrot.slane %v364, 1
      %v367 = vsel %vm307, %v362, %v366
      %v368 = vshrl.u32 %v296, 16
      %v370 = vor.u32 %v368, %v366
      %v372 = vshll.u32 %v297, 16
      %v374 = vrot.slane %v372, 1
      %v375 = vsel %vm307, %v370, %v374
      %v376 = vshrl.u32 %v297, 16
      %v378 = vor.u32 %v376, %v374
      %v380 = vshll.u32 %v298, 16
      %v382 = vrot.slane %v380, 1
      %v383 = vsel %vm307, %v378, %v382
      %v384 = vshrl.u32 %v298, 16
      %v386 = vor.u32 %v384, %v382
      %v388 = vshll.u32 %v299, 16
      %v390 = vrot.slane %v388, 1
      %v391 = vsel %vm307, %v386, %v390
      %v392 = vshrl.u32 %v299, 16
      %v394 = vor.u32 %v392, %v390
      %v396 = vshll.u32 %v300, 16
      %v398 = vrot.slane %v396, 1
      %v399 = vsel %vm307, %v394, %v398
      %v400 = vshrl.u32 %v300, 16
      %v402 = vor.u32 %v400, %v398
      %v404 = vshll.u32 %v301, 16
      %v406 = vrot.slane %v404, 1
      %v407 = vsel %vm307, %v402, %v406
      %v408 = vshrl.u32 %v301, 16
      %v410 = vor.u32 %v408, %v406
      %v412 = vshll.u32 %v302, 16
      %v414 = vrot.slane %v412, 1
      %v415 = vsel %vm307, %v410, %v414
      %v416 = vshrl.u32 %v302, 16
      %v418 = vor.u32 %v416, %v414
      %v420 = vshll.u32 %v303, 16
      %v422 = vrot.slane %v420, 1
      %v423 = vsel %vm307, %v418, %v422
      %v424 = vshrl.u32 %v303, 16
      %v426 = vor.u32 %v424, %v422
      %v428 = vshll.u32 %v304, 16
      %v430 = vrot.slane %v428, 1
      %v431 = vsel %vm307, %v426, %v430
      %v432 = vshrl.u32 %v304, 16
      %v434 = vor.u32 %v432, %v430
      %v436 = vshll.u32 %v305, 16
      %v438 = vrot.slane %v436, 1
      %v439 = vsel %vm307, %v434, %v438
      %v440 = vshrl.u32 %v305, 16
      %v442 = vor.u32 %v440, %v438
      %v444 = vshll.u32 %v306, 16
      %v446 = vrot.slane %v444, 1
      %v447 = vsel %vm307, %v442, %v446
      %v452 = vunpack.c.l.b16 %v215
      %v453 = vunpack.c.l.b16 %v216
      %v454 = vunpack.c.l.b16 %v217
      %v455 = vunpack.c.l.b16 %v218
      %v456 = vpack.c.b16 %v453, %v452
      %v457 = vpack.c.b16 %v455, %v454
      %vm460 = vcmask 261120
      %v462 = vsel %vm460, %v319, 0
      %v465 = vsel %vm460, %v327, 0
      %v468 = vsel %vm460, %v335, 0
      %v471 = vsel %vm460, %v343, 0
      %v474 = vsel %vm460, %v351, 0
      %v477 = vsel %vm460, %v359, 0
      %v480 = vsel %vm460, %v367, 0
      %v483 = vsel %vm460, %v375, 0
      %v486 = vsel %vm460, %v383, 0
      %v489 = vsel %vm460, %v391, 0
      %v492 = vsel %vm460, %v399, 0
      %v495 = vsel %vm460, %v407, 0
      %v498 = vsel %vm460, %v415, 0
      %v501 = vsel %vm460, %v423, 0
      %v504 = vsel %vm460, %v431, 0
      %v507 = vsel %vm460, %v439, 0
      %v510 = vsel %vm460, %v447, 0
      %512 = vmatpush.bf16.msra.mxu0 0
      %513 = vmatpush.bf16.msra.mxu0 0
      %514 = vmatpush.bf16.msra.mxu0 0
      %515 = vmatpush.bf16.msra.mxu0 0
      %516 = vmatpush.bf16.msra.mxu0 0
      %517 = vmatpush.bf16.msra.mxu0 0
      %518 = vmatpush.bf16.msra.mxu0 %v457
      %519 = vmatpush.bf16.msra.mxu0 %v456
      %520 = vmatmul.bf16.gmra.mxu0 %v462
      %v521 = vpop.f32.mrf.mxu0
      %v522 = vadd.f32 0.0, %v521
      %v523 = vpop.f32.mrf.mxu0
      %v524 = vadd.f32 0.0, %v523
      %525 = vmatmul.bf16.gmra.mxu0 %v465
      %v526 = vpop.f32.mrf.mxu0
      %v527 = vadd.f32 0.0, %v526
      %v528 = vpop.f32.mrf.mxu0
      %v529 = vadd.f32 0.0, %v528
      %530 = vmatmul.bf16.gmra.mxu0 %v468
      %v531 = vpop.f32.mrf.mxu0
      %v532 = vadd.f32 0.0, %v531
      %v533 = vpop.f32.mrf.mxu0
      %v534 = vadd.f32 0.0, %v533
      %535 = vmatmul.bf16.gmra.mxu0 %v471
      %v536 = vpop.f32.mrf.mxu0
      %v537 = vadd.f32 0.0, %v536
      %v538 = vpop.f32.mrf.mxu0
      %v539 = vadd.f32 0.0, %v538
      %540 = vmatmul.bf16.gmra.mxu0 %v474
      %v541 = vpop.f32.mrf.mxu0
      %v542 = vadd.f32 0.0, %v541
      %v543 = vpop.f32.mrf.mxu0
      %v544 = vadd.f32 0.0, %v543
      %545 = vmatmul.bf16.gmra.mxu0 %v477
      %v546 = vpop.f32.mrf.mxu0
      %v547 = vadd.f32 0.0, %v546
      %v548 = vpop.f32.mrf.mxu0
      %v549 = vadd.f32 0.0, %v548
      %550 = vmatmul.bf16.gmra.mxu0 %v480
      %v551 = vpop.f32.mrf.mxu0
      %v552 = vadd.f32 0.0, %v551
      %v553 = vpop.f32.mrf.mxu0
      %v554 = vadd.f32 0.0, %v553
      %555 = vmatmul.bf16.gmra.mxu0 %v483
      %v556 = vpop.f32.mrf.mxu0
      %v557 = vadd.f32 0.0, %v556
      %v558 = vpop.f32.mrf.mxu0
      %v559 = vadd.f32 0.0, %v558
      %560 = vmatmul.bf16.gmra.mxu0 %v486
      %v561 = vpop.f32.mrf.mxu0
      %v562 = vadd.f32 0.0, %v561
      %v563 = vpop.f32.mrf.mxu0
      %v564 = vadd.f32 0.0, %v563
      %565 = vmatmul.bf16.gmra.mxu0 %v489
      %v566 = vpop.f32.mrf.mxu0
      %v567 = vadd.f32 0.0, %v566
      %v568 = vpop.f32.mrf.mxu0
      %v569 = vadd.f32 0.0, %v568
      %570 = vmatmul.bf16.gmra.mxu0 %v492
      %v571 = vpop.f32.mrf.mxu0
      %v572 = vadd.f32 0.0, %v571
      %v573 = vpop.f32.mrf.mxu0
      %v574 = vadd.f32 0.0, %v573
      %575 = vmatmul.bf16.gmra.mxu0 %v495
      %v576 = vpop.f32.mrf.mxu0
      %v577 = vadd.f32 0.0, %v576
      %v578 = vpop.f32.mrf.mxu0
      %v579 = vadd.f32 0.0, %v578
      %580 = vmatmul.bf16.gmra.mxu0 %v498
      %v581 = vpop.f32.mrf.mxu0
      %v582 = vadd.f32 0.0, %v581
      %v583 = vpop.f32.mrf.mxu0
      %v584 = vadd.f32 0.0, %v583
      %585 = vmatmul.bf16.gmra.mxu0 %v501
      %v586 = vpop.f32.mrf.mxu0
      %v587 = vadd.f32 0.0, %v586
      %v588 = vpop.f32.mrf.mxu0
      %v589 = vadd.f32 0.0, %v588
      %590 = vmatmul.bf16.gmra.mxu0 %v504
      %v591 = vpop.f32.mrf.mxu0
      %v592 = vadd.f32 0.0, %v591
      %v593 = vpop.f32.mrf.mxu0
      %v594 = vadd.f32 0.0, %v593
      %595 = vmatmul.bf16.gmra.mxu0 %v507
      %v596 = vpop.f32.mrf.mxu0
      %v597 = vadd.f32 0.0, %v596
      %v598 = vpop.f32.mrf.mxu0
      %v599 = vadd.f32 0.0, %v598
      %600 = vmatmul.bf16.gmra.mxu0 %v510
      %v601 = vpop.f32.mrf.mxu0
      %v602 = vadd.f32 0.0, %v601
      %v603 = vpop.f32.mrf.mxu0
      %v604 = vadd.f32 0.0, %v603
      %605 = vdwg.mxu0
      %v610 = vunpack.c.l.b16 %v209
      %v611 = vunpack.c.l.b16 %v210
      %v612 = vunpack.c.l.b16 %v211
      %v613 = vunpack.c.l.b16 %v212
      %v614 = vpack.c.b16 %v611, %v610
      %v615 = vpack.c.b16 %v613, %v612
      %v618 = vsel %vm460, %v289, 0
      %v620 = vsel %vm460, %v290, 0
      %v622 = vsel %vm460, %v291, 0
      %v624 = vsel %vm460, %v292, 0
      %v626 = vsel %vm460, %v293, 0
      %v628 = vsel %vm460, %v294, 0
      %v630 = vsel %vm460, %v295, 0
      %v632 = vsel %vm460, %v296, 0
      %v634 = vsel %vm460, %v297, 0
      %v636 = vsel %vm460, %v298, 0
      %v638 = vsel %vm460, %v299, 0
      %v640 = vsel %vm460, %v300, 0
      %v642 = vsel %vm460, %v301, 0
      %v644 = vsel %vm460, %v302, 0
      %v646 = vsel %vm460, %v303, 0
      %v648 = vsel %vm460, %v304, 0
      %v650 = vsel %vm460, %v305, 0
      %652 = vmatpush.bf16.msra.mxu0 0
      %653 = vmatpush.bf16.msra.mxu0 0
      %654 = vmatpush.bf16.msra.mxu0 0
      %655 = vmatpush.bf16.msra.mxu0 0
      %656 = vmatpush.bf16.msra.mxu0 0
      %657 = vmatpush.bf16.msra.mxu0 0
      %658 = vmatpush.bf16.msra.mxu0 %v615
      %659 = vmatpush.bf16.msra.mxu0 %v614
      %660 = vmatmul.bf16.gmra.mxu0 %v618
      %v661 = vpop.f32.mrf.mxu0
      %v662 = vadd.f32 %v522, %v661
      %v663 = vpop.f32.mrf.mxu0
      %v664 = vadd.f32 %v524, %v663
      %665 = vmatmul.bf16.gmra.mxu0 %v620
      %v666 = vpop.f32.mrf.mxu0
      %v667 = vadd.f32 %v527, %v666
      %v668 = vpop.f32.mrf.mxu0
      %v669 = vadd.f32 %v529, %v668
      %670 = vmatmul.bf16.gmra.mxu0 %v622
      %v671 = vpop.f32.mrf.mxu0
      %v672 = vadd.f32 %v532, %v671
      %v673 = vpop.f32.mrf.mxu0
      %v674 = vadd.f32 %v534, %v673
      %675 = vmatmul.bf16.gmra.mxu0 %v624
      %v676 = vpop.f32.mrf.mxu0
      %v677 = vadd.f32 %v537, %v676
      %v678 = vpop.f32.mrf.mxu0
      %v679 = vadd.f32 %v539, %v678
      %680 = vmatmul.bf16.gmra.mxu0 %v626
      %v681 = vpop.f32.mrf.mxu0
      %v682 = vadd.f32 %v542, %v681
      %v683 = vpop.f32.mrf.mxu0
      %v684 = vadd.f32 %v544, %v683
      %685 = vmatmul.bf16.gmra.mxu0 %v628
      %v686 = vpop.f32.mrf.mxu0
      %v687 = vadd.f32 %v547, %v686
      %v688 = vpop.f32.mrf.mxu0
      %v689 = vadd.f32 %v549, %v688
      %690 = vmatmul.bf16.gmra.mxu0 %v630
      %v691 = vpop.f32.mrf.mxu0
      %v692 = vadd.f32 %v552, %v691
      %v693 = vpop.f32.mrf.mxu0
      %v694 = vadd.f32 %v554, %v693
      %695 = vmatmul.bf16.gmra.mxu0 %v632
      %v696 = vpop.f32.mrf.mxu0
      %v697 = vadd.f32 %v557, %v696
      %v698 = vpop.f32.mrf.mxu0
      %v699 = vadd.f32 %v559, %v698
      %700 = vmatmul.bf16.gmra.mxu0 %v634
      %v701 = vpop.f32.mrf.mxu0
      %v702 = vadd.f32 %v562, %v701
      %v703 = vpop.f32.mrf.mxu0
      %v704 = vadd.f32 %v564, %v703
      %705 = vmatmul.bf16.gmra.mxu0 %v636
      %v706 = vpop.f32.mrf.mxu0
      %v707 = vadd.f32 %v567, %v706
      %v708 = vpop.f32.mrf.mxu0
      %v709 = vadd.f32 %v569, %v708
      %710 = vmatmul.bf16.gmra.mxu0 %v638
      %v711 = vpop.f32.mrf.mxu0
      %v712 = vadd.f32 %v572, %v711
      %v713 = vpop.f32.mrf.mxu0
      %v714 = vadd.f32 %v574, %v713
      %715 = vmatmul.bf16.gmra.mxu0 %v640
      %v716 = vpop.f32.mrf.mxu0
      %v717 = vadd.f32 %v577, %v716
      %v718 = vpop.f32.mrf.mxu0
      %v719 = vadd.f32 %v579, %v718
      %720 = vmatmul.bf16.gmra.mxu0 %v642
      %v721 = vpop.f32.mrf.mxu0
      %v722 = vadd.f32 %v582, %v721
      %v723 = vpop.f32.mrf.mxu0
      %v724 = vadd.f32 %v584, %v723
      %725 = vmatmul.bf16.gmra.mxu0 %v644
      %v726 = vpop.f32.mrf.mxu0
      %v727 = vadd.f32 %v587, %v726
      %v728 = vpop.f32.mrf.mxu0
      %v729 = vadd.f32 %v589, %v728
      %730 = vmatmul.bf16.gmra.mxu0 %v646
      %v731 = vpop.f32.mrf.mxu0
      %v732 = vadd.f32 %v592, %v731
      %v733 = vpop.f32.mrf.mxu0
      %v734 = vadd.f32 %v594, %v733
      %735 = vmatmul.bf16.gmra.mxu0 %v648
      %v736 = vpop.f32.mrf.mxu0
      %v737 = vadd.f32 %v597, %v736
      %v738 = vpop.f32.mrf.mxu0
      %v739 = vadd.f32 %v599, %v738
      %740 = vmatmul.bf16.gmra.mxu0 %v650
      %v741 = vpop.f32.mrf.mxu0
      %v742 = vadd.f32 %v602, %v741
      %v743 = vpop.f32.mrf.mxu0
      %v744 = vadd.f32 %v604, %v743
      %745 = vdwg.mxu0
      %v746 = vld [vmem:[%s166 + $0x8] sm:$0xf]
      %v747 = vld [vmem:[%s166 + $0xc] sm:$0xf]
      %v748 = vld [vmem:[%s166 + $0x10] sm:$0xf]
      %v749 = vld [vmem:[%s166 + $0x14] sm:$0xf]
      %v750 = vld [vmem:[%s166 + $0x18] sm:$0xf]
      %v751 = vld [vmem:[%s166 + $0x1c] sm:$0xf]
      %v752 = vld [vmem:[%s166 + $0x20] sm:$0xf]
      %v753 = vld [vmem:[%s166 + $0x24] sm:$0xf]
      %v754 = vld [vmem:[%s166 + $0x28] sm:$0xf]
      %v755 = vld [vmem:[%s166 + $0x2c] sm:$0xf]
      %v756 = vld [vmem:[%s166 + $0x30] sm:$0xf]
      %v757 = vld [vmem:[%s166 + $0x34] sm:$0xf]
      %v758 = vld [vmem:[%s166 + $0x38] sm:$0xf]
      %v759 = vld [vmem:[%s166 + $0x3c] sm:$0xf]
      %v760 = vld [vmem:[%s166 + $0x40] sm:$0xf]
      %v761 = vld [vmem:[%s166 + $0x44] sm:$0xf]
      %v762 = vld [vmem:[%s166 + $0x48] sm:$0xf]
      %v763 = vld [vmem:[%s166 + $0x4c] sm:$0xf]
      %v764 = vld [vmem:[%s166 + $0x50] sm:$0xf]
      %v765 = vld [vmem:[%s166 + $0x54] sm:$0xf]
      %v766 = vld [vmem:[%s166 + $0x58] sm:$0xf]
      %v767 = vld [vmem:[%s166 + $0x5c] sm:$0xf]
      %v768 = vld [vmem:[%s166 + $0x60] sm:$0xf]
      %v769 = vld [vmem:[%s166 + $0x64] sm:$0xf]
      %v770 = vld [vmem:[%s166 + $0x68] sm:$0xf]
      %v771 = vld [vmem:[%s166 + $0x6c] sm:$0xf]
      %v772 = vld [vmem:[%s166 + $0x70] sm:$0xf]
      %v773 = vld [vmem:[%s166 + $0x74] sm:$0xf]
      %v774 = vld [vmem:[%s166 + $0x78] sm:$0xf]
      %v775 = vld [vmem:[%s166 + $0x7c] sm:$0xf]
      %v776 = vld [vmem:[%s166 + $0x80] sm:$0xf]
      %v777 = vld [vmem:[%s166 + $0x84] sm:$0xf]
      %v778 = vld [vmem:[%s166 + $0x88] sm:$0xf]
      %v779 = vld [vmem:[%s166 + $0x8c] sm:$0xf]
      %v780 = vld [vmem:[%s166 + $0x90] sm:$0x1]
      %s781 = scalar_lea.vmem %s1, 32
      %v782 = vld [vmem:[%s781] sm:$0xf]
      %v783 = vld [vmem:[%s781 + $0x4] sm:$0xf]
      %v784 = vld [vmem:[%s781 + $0x8] sm:$0xf]
      %v785 = vld [vmem:[%s781 + $0xc] sm:$0xf]
      %v821 = vunpack.c.l.b16 %v746
      %v822 = vunpack.c.l.b16 %v747
      %v823 = vunpack.c.l.b16 %v748
      %v824 = vunpack.c.l.b16 %v749
      %v825 = vunpack.c.l.b16 %v750
      %v826 = vunpack.c.l.b16 %v751
      %v827 = vunpack.c.l.b16 %v752
      %v828 = vunpack.c.l.b16 %v753
      %v829 = vunpack.c.l.b16 %v754
      %v830 = vunpack.c.l.b16 %v755
      %v831 = vunpack.c.l.b16 %v756
      %v832 = vunpack.c.l.b16 %v757
      %v833 = vunpack.c.l.b16 %v758
      %v834 = vunpack.c.l.b16 %v759
      %v835 = vunpack.c.l.b16 %v760
      %v836 = vunpack.c.l.b16 %v761
      %v837 = vunpack.c.l.b16 %v762
      %v838 = vunpack.c.l.b16 %v763
      %v839 = vunpack.c.l.b16 %v764
      %v840 = vunpack.c.l.b16 %v765
      %v841 = vunpack.c.l.b16 %v766
      %v842 = vunpack.c.l.b16 %v767
      %v843 = vunpack.c.l.b16 %v768
      %v844 = vunpack.c.l.b16 %v769
      %v845 = vunpack.c.l.b16 %v770
      %v846 = vunpack.c.l.b16 %v771
      %v847 = vunpack.c.l.b16 %v772
      %v848 = vunpack.c.l.b16 %v773
      %v849 = vunpack.c.l.b16 %v774
      %v850 = vunpack.c.l.b16 %v775
      %v851 = vunpack.c.l.b16 %v776
      %v852 = vunpack.c.l.b16 %v777
      %v853 = vunpack.c.l.b16 %v778
      %v854 = vunpack.c.l.b16 %v779
      %v855 = vunpack.c.l.b16 %v780
      %v856 = vpack.c.b16 %v822, %v821
      %v857 = vpack.c.b16 %v824, %v823
      %v858 = vpack.c.b16 %v826, %v825
      %v859 = vpack.c.b16 %v828, %v827
      %v860 = vpack.c.b16 %v830, %v829
      %v861 = vpack.c.b16 %v832, %v831
      %v862 = vpack.c.b16 %v834, %v833
      %v863 = vpack.c.b16 %v836, %v835
      %v864 = vpack.c.b16 %v838, %v837
      %v865 = vpack.c.b16 %v840, %v839
      %v866 = vpack.c.b16 %v842, %v841
      %v867 = vpack.c.b16 %v844, %v843
      %v868 = vpack.c.b16 %v846, %v845
      %v869 = vpack.c.b16 %v848, %v847
      %v870 = vpack.c.b16 %v850, %v849
      %v871 = vpack.c.b16 %v852, %v851
      %v872 = vpack.c.b16 %v854, %v853
      %v873 = vpack.c.b16 %v855, %v855
      %v875 = vshrl.u32 %v856, 16
      %v877 = vshll.u32 %v856, 16
      %v879 = vrot.slane %v877, 1
      %v880 = vor.u32 %v875, %v879
      %v882 = vshll.u32 %v857, 16
      %v884 = vrot.slane %v882, 1
      %v885 = vsel %vm307, %v880, %v884
      %v886 = vshrl.u32 %v857, 16
      %v888 = vor.u32 %v886, %v884
      %v890 = vshll.u32 %v858, 16
      %v892 = vrot.slane %v890, 1
      %v893 = vsel %vm307, %v888, %v892
      %v894 = vshrl.u32 %v858, 16
      %v896 = vor.u32 %v894, %v892
      %v898 = vshll.u32 %v859, 16
      %v900 = vrot.slane %v898, 1
      %v901 = vsel %vm307, %v896, %v900
      %v902 = vshrl.u32 %v859, 16
      %v904 = vor.u32 %v902, %v900
      %v906 = vshll.u32 %v860, 16
      %v908 = vrot.slane %v906, 1
      %v909 = vsel %vm307, %v904, %v908
      %v910 = vshrl.u32 %v860, 16
      %v912 = vor.u32 %v910, %v908
      %v914 = vshll.u32 %v861, 16
      %v916 = vrot.slane %v914, 1
      %v917 = vsel %vm307, %v912, %v916
      %v918 = vshrl.u32 %v861, 16
      %v920 = vor.u32 %v918, %v916
      %v922 = vshll.u32 %v862, 16
      %v924 = vrot.slane %v922, 1
      %v925 = vsel %vm307, %v920, %v924
      %v926 = vshrl.u32 %v862, 16
      %v928 = vor.u32 %v926, %v924
      %v930 = vshll.u32 %v863, 16
      %v932 = vrot.slane %v930, 1
      %v933 = vsel %vm307, %v928, %v932
      %v934 = vshrl.u32 %v863, 16
      %v936 = vor.u32 %v934, %v932
      %v938 = vshll.u32 %v864, 16
      %v940 = vrot.slane %v938, 1
      %v941 = vsel %vm307, %v936, %v940
      %v942 = vshrl.u32 %v864, 16
      %v944 = vor.u32 %v942, %v940
      %v946 = vshll.u32 %v865, 16
      %v948 = vrot.slane %v946, 1
      %v949 = vsel %vm307, %v944, %v948
      %v950 = vshrl.u32 %v865, 16
      %v952 = vor.u32 %v950, %v948
      %v954 = vshll.u32 %v866, 16
      %v956 = vrot.slane %v954, 1
      %v957 = vsel %vm307, %v952, %v956
      %v958 = vshrl.u32 %v866, 16
      %v960 = vor.u32 %v958, %v956
      %v962 = vshll.u32 %v867, 16
      %v964 = vrot.slane %v962, 1
      %v965 = vsel %vm307, %v960, %v964
      %v966 = vshrl.u32 %v867, 16
      %v968 = vor.u32 %v966, %v964
      %v970 = vshll.u32 %v868, 16
      %v972 = vrot.slane %v970, 1
      %v973 = vsel %vm307, %v968, %v972
      %v974 = vshrl.u32 %v868, 16
      %v976 = vor.u32 %v974, %v972
      %v978 = vshll.u32 %v869, 16
      %v980 = vrot.slane %v978, 1
      %v981 = vsel %vm307, %v976, %v980
      %v982 = vshrl.u32 %v869, 16
      %v984 = vor.u32 %v982, %v980
      %v986 = vshll.u32 %v870, 16
      %v988 = vrot.slane %v986, 1
      %v989 = vsel %vm307, %v984, %v988
      %v990 = vshrl.u32 %v870, 16
      %v992 = vor.u32 %v990, %v988
      %v994 = vshll.u32 %v871, 16
      %v996 = vrot.slane %v994, 1
      %v997 = vsel %vm307, %v992, %v996
      %v998 = vshrl.u32 %v871, 16
      %v1000 = vor.u32 %v998, %v996
      %v1002 = vshll.u32 %v872, 16
      %v1004 = vrot.slane %v1002, 1
      %v1005 = vsel %vm307, %v1000, %v1004
      %v1006 = vshrl.u32 %v872, 16
      %v1008 = vor.u32 %v1006, %v1004
      %v1010 = vshll.u32 %v873, 16
      %v1012 = vrot.slane %v1010, 1
      %v1013 = vsel %vm307, %v1008, %v1012
      %v1018 = vunpack.c.l.b16 %v782
      %v1019 = vunpack.c.l.b16 %v783
      %v1020 = vunpack.c.l.b16 %v784
      %v1021 = vunpack.c.l.b16 %v785
      %v1022 = vpack.c.b16 %v1019, %v1018
      %v1023 = vpack.c.b16 %v1021, %v1020
      %v1027 = vsel %vm460, %v885, 0
      %v1030 = vsel %vm460, %v893, 0
      %v1033 = vsel %vm460, %v901, 0
      %v1036 = vsel %vm460, %v909, 0
      %v1039 = vsel %vm460, %v917, 0
      %v1042 = vsel %vm460, %v925, 0
      %v1045 = vsel %vm460, %v933, 0
      %v1048 = vsel %vm460, %v941, 0
      %v1051 = vsel %vm460, %v949, 0
      %v1054 = vsel %vm460, %v957, 0
      %v1057 = vsel %vm460, %v965, 0
      %v1060 = vsel %vm460, %v973, 0
      %v1063 = vsel %vm460, %v981, 0
      %v1066 = vsel %vm460, %v989, 0
      %v1069 = vsel %vm460, %v997, 0
      %v1072 = vsel %vm460, %v1005, 0
      %v1075 = vsel %vm460, %v1013, 0
      %1077 = vmatpush.bf16.msra.mxu0 0
      %1078 = vmatpush.bf16.msra.mxu0 0
      %1079 = vmatpush.bf16.msra.mxu0 0
      %1080 = vmatpush.bf16.msra.mxu0 0
      %1081 = vmatpush.bf16.msra.mxu0 0
      %1082 = vmatpush.bf16.msra.mxu0 0
      %1083 = vmatpush.bf16.msra.mxu0 %v1023
      %1084 = vmatpush.bf16.msra.mxu0 %v1022
      %1085 = vmatmul.bf16.gmra.mxu0 %v1027
      %v1086 = vpop.f32.mrf.mxu0
      %v1087 = vadd.f32 0.0, %v1086
      %v1088 = vpop.f32.mrf.mxu0
      %v1089 = vadd.f32 0.0, %v1088
      %1090 = vmatmul.bf16.gmra.mxu0 %v1030
      %v1091 = vpop.f32.mrf.mxu0
      %v1092 = vadd.f32 0.0, %v1091
      %v1093 = vpop.f32.mrf.mxu0
      %v1094 = vadd.f32 0.0, %v1093
      %1095 = vmatmul.bf16.gmra.mxu0 %v1033
      %v1096 = vpop.f32.mrf.mxu0
      %v1097 = vadd.f32 0.0, %v1096
      %v1098 = vpop.f32.mrf.mxu0
      %v1099 = vadd.f32 0.0, %v1098
      %1100 = vmatmul.bf16.gmra.mxu0 %v1036
      %v1101 = vpop.f32.mrf.mxu0
      %v1102 = vadd.f32 0.0, %v1101
      %v1103 = vpop.f32.mrf.mxu0
      %v1104 = vadd.f32 0.0, %v1103
      %1105 = vmatmul.bf16.gmra.mxu0 %v1039
      %v1106 = vpop.f32.mrf.mxu0
      %v1107 = vadd.f32 0.0, %v1106
      %v1108 = vpop.f32.mrf.mxu0
      %v1109 = vadd.f32 0.0, %v1108
      %1110 = vmatmul.bf16.gmra.mxu0 %v1042
      %v1111 = vpop.f32.mrf.mxu0
      %v1112 = vadd.f32 0.0, %v1111
      %v1113 = vpop.f32.mrf.mxu0
      %v1114 = vadd.f32 0.0, %v1113
      %1115 = vmatmul.bf16.gmra.mxu0 %v1045
      %v1116 = vpop.f32.mrf.mxu0
      %v1117 = vadd.f32 0.0, %v1116
      %v1118 = vpop.f32.mrf.mxu0
      %v1119 = vadd.f32 0.0, %v1118
      %1120 = vmatmul.bf16.gmra.mxu0 %v1048
      %v1121 = vpop.f32.mrf.mxu0
      %v1122 = vadd.f32 0.0, %v1121
      %v1123 = vpop.f32.mrf.mxu0
      %v1124 = vadd.f32 0.0, %v1123
      %1125 = vmatmul.bf16.gmra.mxu0 %v1051
      %v1126 = vpop.f32.mrf.mxu0
      %v1127 = vadd.f32 0.0, %v1126
      %v1128 = vpop.f32.mrf.mxu0
      %v1129 = vadd.f32 0.0, %v1128
      %1130 = vmatmul.bf16.gmra.mxu0 %v1054
      %v1131 = vpop.f32.mrf.mxu0
      %v1132 = vadd.f32 0.0, %v1131
      %v1133 = vpop.f32.mrf.mxu0
      %v1134 = vadd.f32 0.0, %v1133
      %1135 = vmatmul.bf16.gmra.mxu0 %v1057
      %v1136 = vpop.f32.mrf.mxu0
      %v1137 = vadd.f32 0.0, %v1136
      %v1138 = vpop.f32.mrf.mxu0
      %v1139 = vadd.f32 0.0, %v1138
      %1140 = vmatmul.bf16.gmra.mxu0 %v1060
      %v1141 = vpop.f32.mrf.mxu0
      %v1142 = vadd.f32 0.0, %v1141
      %v1143 = vpop.f32.mrf.mxu0
      %v1144 = vadd.f32 0.0, %v1143
      %1145 = vmatmul.bf16.gmra.mxu0 %v1063
      %v1146 = vpop.f32.mrf.mxu0
      %v1147 = vadd.f32 0.0, %v1146
      %v1148 = vpop.f32.mrf.mxu0
      %v1149 = vadd.f32 0.0, %v1148
      %1150 = vmatmul.bf16.gmra.mxu0 %v1066
      %v1151 = vpop.f32.mrf.mxu0
      %v1152 = vadd.f32 0.0, %v1151
      %v1153 = vpop.f32.mrf.mxu0
      %v1154 = vadd.f32 0.0, %v1153
      %1155 = vmatmul.bf16.gmra.mxu0 %v1069
      %v1156 = vpop.f32.mrf.mxu0
      %v1157 = vadd.f32 0.0, %v1156
      %v1158 = vpop.f32.mrf.mxu0
      %v1159 = vadd.f32 0.0, %v1158
      %1160 = vmatmul.bf16.gmra.mxu0 %v1072
      %v1161 = vpop.f32.mrf.mxu0
      %v1162 = vadd.f32 0.0, %v1161
      %v1163 = vpop.f32.mrf.mxu0
      %v1164 = vadd.f32 0.0, %v1163
      %1165 = vmatmul.bf16.gmra.mxu0 %v1075
      %v1166 = vpop.f32.mrf.mxu0
      %v1167 = vadd.f32 0.0, %v1166
      %v1168 = vpop.f32.mrf.mxu0
      %v1169 = vadd.f32 0.0, %v1168
      %1170 = vdwg.mxu0
      %v1171 = vadd.f32 %v662, %v1087
      %v1172 = vadd.f32 %v664, %v1089
      %v1173 = vadd.f32 %v667, %v1092
      %v1174 = vadd.f32 %v669, %v1094
      %v1175 = vadd.f32 %v672, %v1097
      %v1176 = vadd.f32 %v674, %v1099
      %v1177 = vadd.f32 %v677, %v1102
      %v1178 = vadd.f32 %v679, %v1104
      %v1179 = vadd.f32 %v682, %v1107
      %v1180 = vadd.f32 %v684, %v1109
      %v1181 = vadd.f32 %v687, %v1112
      %v1182 = vadd.f32 %v689, %v1114
      %v1183 = vadd.f32 %v692, %v1117
      %v1184 = vadd.f32 %v694, %v1119
      %v1185 = vadd.f32 %v697, %v1122
      %v1186 = vadd.f32 %v699, %v1124
      %v1187 = vadd.f32 %v702, %v1127
      %v1188 = vadd.f32 %v704, %v1129
      %v1189 = vadd.f32 %v707, %v1132
      %v1190 = vadd.f32 %v709, %v1134
      %v1191 = vadd.f32 %v712, %v1137
      %v1192 = vadd.f32 %v714, %v1139
      %v1193 = vadd.f32 %v717, %v1142
      %v1194 = vadd.f32 %v719, %v1144
      %v1195 = vadd.f32 %v722, %v1147
      %v1196 = vadd.f32 %v724, %v1149
      %v1197 = vadd.f32 %v727, %v1152
      %v1198 = vadd.f32 %v729, %v1154
      %v1199 = vadd.f32 %v732, %v1157
      %v1200 = vadd.f32 %v734, %v1159
      %v1201 = vadd.f32 %v737, %v1162
      %v1202 = vadd.f32 %v739, %v1164
      %v1203 = vadd.f32 %v742, %v1167
      %v1204 = vadd.f32 %v744, %v1169
      %v1205 = vld [vmem:[%s166 + $0x8] sm:$0xe]
      %s1206 = scalar_lea.vmem %s1, 48
      %v1207 = vld [vmem:[%s1206] sm:$0xf]
      %v1208 = vld [vmem:[%s1206 + $0x4] sm:$0xf]
      %v1209 = vld [vmem:[%s1206 + $0x8] sm:$0xf]
      %v1210 = vld [vmem:[%s1206 + $0xc] sm:$0xf]
      %v1212 = vunpack.c.l.b16 %v1205
      %v1213 = vpack.c.b16 %v822, %v1212
      %vm1214 = vcmask 1046528
      %v1215 = vrot.slane %v1213, 1
      %v1216 = vrot.slane %v857, 1
      %v1217 = vsel %vm1214, %v1215, %v1216
      %v1218 = vrot.slane %v858, 1
      %v1219 = vsel %vm1214, %v1216, %v1218
      %v1220 = vrot.slane %v859, 1
      %v1221 = vsel %vm1214, %v1218, %v1220
      %v1222 = vrot.slane %v860, 1
      %v1223 = vsel %vm1214, %v1220, %v1222
      %v1224 = vrot.slane %v861, 1
      %v1225 = vsel %vm1214, %v1222, %v1224
      %v1226 = vrot.slane %v862, 1
      %v1227 = vsel %vm1214, %v1224, %v1226
      %v1228 = vrot.slane %v863, 1
      %v1229 = vsel %vm1214, %v1226, %v1228
      %v1230 = vrot.slane %v864, 1
      %v1231 = vsel %vm1214, %v1228, %v1230
      %v1232 = vrot.slane %v865, 1
      %v1233 = vsel %vm1214, %v1230, %v1232
      %v1234 = vrot.slane %v866, 1
      %v1235 = vsel %vm1214, %v1232, %v1234
      %v1236 = vrot.slane %v867, 1
      %v1237 = vsel %vm1214, %v1234, %v1236
      %v1238 = vrot.slane %v868, 1
      %v1239 = vsel %vm1214, %v1236, %v1238
      %v1240 = vrot.slane %v869, 1
      %v1241 = vsel %vm1214, %v1238, %v1240
      %v1242 = vrot.slane %v870, 1
      %v1243 = vsel %vm1214, %v1240, %v1242
      %v1244 = vrot.slane %v871, 1
      %v1245 = vsel %vm1214, %v1242, %v1244
      %v1246 = vrot.slane %v872, 1
      %v1247 = vsel %vm1214, %v1244, %v1246
      %v1248 = vrot.slane %v873, 1
      %v1249 = vsel %vm1214, %v1246, %v1248
      %v1254 = vunpack.c.l.b16 %v1207
      %v1255 = vunpack.c.l.b16 %v1208
      %v1256 = vunpack.c.l.b16 %v1209
      %v1257 = vunpack.c.l.b16 %v1210
      %v1258 = vpack.c.b16 %v1255, %v1254
      %v1259 = vpack.c.b16 %v1257, %v1256
      %v1263 = vsel %vm460, %v1217, 0
      %v1266 = vsel %vm460, %v1219, 0
      %v1269 = vsel %vm460, %v1221, 0
      %v1272 = vsel %vm460, %v1223, 0
      %v1275 = vsel %vm460, %v1225, 0
      %v1278 = vsel %vm460, %v1227, 0
      %v1281 = vsel %vm460, %v1229, 0
      %v1284 = vsel %vm460, %v1231, 0
      %v1287 = vsel %vm460, %v1233, 0
      %v1290 = vsel %vm460, %v1235, 0
      %v1293 = vsel %vm460, %v1237, 0
      %v1296 = vsel %vm460, %v1239, 0
      %v1299 = vsel %vm460, %v1241, 0
      %v1302 = vsel %vm460, %v1243, 0
      %v1305 = vsel %vm460, %v1245, 0
      %v1308 = vsel %vm460, %v1247, 0
      %v1311 = vsel %vm460, %v1249, 0
      %1313 = vmatpush.bf16.msra.mxu0 0
      %1314 = vmatpush.bf16.msra.mxu0 0
      %1315 = vmatpush.bf16.msra.mxu0 0
      %1316 = vmatpush.bf16.msra.mxu0 0
      %1317 = vmatpush.bf16.msra.mxu0 0
      %1318 = vmatpush.bf16.msra.mxu0 0
      %1319 = vmatpush.bf16.msra.mxu0 %v1259
      %1320 = vmatpush.bf16.msra.mxu0 %v1258
      %1321 = vmatmul.bf16.gmra.mxu0 %v1263
      %v1322 = vpop.f32.mrf.mxu0
      %v1323 = vadd.f32 0.0, %v1322
      %v1324 = vpop.f32.mrf.mxu0
      %v1325 = vadd.f32 0.0, %v1324
      %1326 = vmatmul.bf16.gmra.mxu0 %v1266
      %v1327 = vpop.f32.mrf.mxu0
      %v1328 = vadd.f32 0.0, %v1327
      %v1329 = vpop.f32.mrf.mxu0
      %v1330 = vadd.f32 0.0, %v1329
      %1331 = vmatmul.bf16.gmra.mxu0 %v1269
      %v1332 = vpop.f32.mrf.mxu0
      %v1333 = vadd.f32 0.0, %v1332
      %v1334 = vpop.f32.mrf.mxu0
      %v1335 = vadd.f32 0.0, %v1334
      %1336 = vmatmul.bf16.gmra.mxu0 %v1272
      %v1337 = vpop.f32.mrf.mxu0
      %v1338 = vadd.f32 0.0, %v1337
      %v1339 = vpop.f32.mrf.mxu0
      %v1340 = vadd.f32 0.0, %v1339
      %1341 = vmatmul.bf16.gmra.mxu0 %v1275
      %v1342 = vpop.f32.mrf.mxu0
      %v1343 = vadd.f32 0.0, %v1342
      %v1344 = vpop.f32.mrf.mxu0
      %v1345 = vadd.f32 0.0, %v1344
      %1346 = vmatmul.bf16.gmra.mxu0 %v1278
      %v1347 = vpop.f32.mrf.mxu0
      %v1348 = vadd.f32 0.0, %v1347
      %v1349 = vpop.f32.mrf.mxu0
      %v1350 = vadd.f32 0.0, %v1349
      %1351 = vmatmul.bf16.gmra.mxu0 %v1281
      %v1352 = vpop.f32.mrf.mxu0
      %v1353 = vadd.f32 0.0, %v1352
      %v1354 = vpop.f32.mrf.mxu0
      %v1355 = vadd.f32 0.0, %v1354
      %1356 = vmatmul.bf16.gmra.mxu0 %v1284
      %v1357 = vpop.f32.mrf.mxu0
      %v1358 = vadd.f32 0.0, %v1357
      %v1359 = vpop.f32.mrf.mxu0
      %v1360 = vadd.f32 0.0, %v1359
      %1361 = vmatmul.bf16.gmra.mxu0 %v1287
      %v1362 = vpop.f32.mrf.mxu0
      %v1363 = vadd.f32 0.0, %v1362
      %v1364 = vpop.f32.mrf.mxu0
      %v1365 = vadd.f32 0.0, %v1364
      %1366 = vmatmul.bf16.gmra.mxu0 %v1290
      %v1367 = vpop.f32.mrf.mxu0
      %v1368 = vadd.f32 0.0, %v1367
      %v1369 = vpop.f32.mrf.mxu0
      %v1370 = vadd.f32 0.0, %v1369
      %1371 = vmatmul.bf16.gmra.mxu0 %v1293
      %v1372 = vpop.f32.mrf.mxu0
      %v1373 = vadd.f32 0.0, %v1372
      %v1374 = vpop.f32.mrf.mxu0
      %v1375 = vadd.f32 0.0, %v1374
      %1376 = vmatmul.bf16.gmra.mxu0 %v1296
      %v1377 = vpop.f32.mrf.mxu0
      %v1378 = vadd.f32 0.0, %v1377
      %v1379 = vpop.f32.mrf.mxu0
      %v1380 = vadd.f32 0.0, %v1379
      %1381 = vmatmul.bf16.gmra.mxu0 %v1299
      %v1382 = vpop.f32.mrf.mxu0
      %v1383 = vadd.f32 0.0, %v1382
      %v1384 = vpop.f32.mrf.mxu0
      %v1385 = vadd.f32 0.0, %v1384
      %1386 = vmatmul.bf16.gmra.mxu0 %v1302
      %v1387 = vpop.f32.mrf.mxu0
      %v1388 = vadd.f32 0.0, %v1387
      %v1389 = vpop.f32.mrf.mxu0
      %v1390 = vadd.f32 0.0, %v1389
      %1391 = vmatmul.bf16.gmra.mxu0 %v1305
      %v1392 = vpop.f32.mrf.mxu0
      %v1393 = vadd.f32 0.0, %v1392
      %v1394 = vpop.f32.mrf.mxu0
      %v1395 = vadd.f32 0.0, %v1394
      %1396 = vmatmul.bf16.gmra.mxu0 %v1308
      %v1397 = vpop.f32.mrf.mxu0
      %v1398 = vadd.f32 0.0, %v1397
      %v1399 = vpop.f32.mrf.mxu0
      %v1400 = vadd.f32 0.0, %v1399
      %1401 = vmatmul.bf16.gmra.mxu0 %v1311
      %v1402 = vpop.f32.mrf.mxu0
      %v1403 = vadd.f32 0.0, %v1402
      %v1404 = vpop.f32.mrf.mxu0
      %v1405 = vadd.f32 0.0, %v1404
      %1406 = vdwg.mxu0
      %v1407 = vadd.f32 %v1171, %v1323
      %v1408 = vadd.f32 %v1172, %v1325
      %v1409 = vadd.f32 %v1173, %v1328
      %v1410 = vadd.f32 %v1174, %v1330
      %v1411 = vadd.f32 %v1175, %v1333
      %v1412 = vadd.f32 %v1176, %v1335
      %v1413 = vadd.f32 %v1177, %v1338
      %v1414 = vadd.f32 %v1178, %v1340
      %v1415 = vadd.f32 %v1179, %v1343
      %v1416 = vadd.f32 %v1180, %v1345
      %v1417 = vadd.f32 %v1181, %v1348
      %v1418 = vadd.f32 %v1182, %v1350
      %v1419 = vadd.f32 %v1183, %v1353
      %v1420 = vadd.f32 %v1184, %v1355
      %v1421 = vadd.f32 %v1185, %v1358
      %v1422 = vadd.f32 %v1186, %v1360
      %v1423 = vadd.f32 %v1187, %v1363
      %v1424 = vadd.f32 %v1188, %v1365
      %v1425 = vadd.f32 %v1189, %v1368
      %v1426 = vadd.f32 %v1190, %v1370
      %v1427 = vadd.f32 %v1191, %v1373
      %v1428 = vadd.f32 %v1192, %v1375
      %v1429 = vadd.f32 %v1193, %v1378
      %v1430 = vadd.f32 %v1194, %v1380
      %v1431 = vadd.f32 %v1195, %v1383
      %v1432 = vadd.f32 %v1196, %v1385
      %v1433 = vadd.f32 %v1197, %v1388
      %v1434 = vadd.f32 %v1198, %v1390
      %v1435 = vadd.f32 %v1199, %v1393
      %v1436 = vadd.f32 %v1200, %v1395
      %v1437 = vadd.f32 %v1201, %v1398
      %v1438 = vadd.f32 %v1202, %v1400
      %v1439 = vadd.f32 %v1203, %v1403
      %v1440 = vadd.f32 %v1204, %v1405
      %v1441 = vld [vmem:[%s2] sm:$0x1]
      %v1442 = vperm.slane %v1441, 0
      %v1443 = vmul.f32 %v1407, %v1442
      %v1444 = vmul.f32 %v1408, %v1442
      %v1445 = vmul.f32 %v1409, %v1442
      %v1446 = vmul.f32 %v1410, %v1442
      %v1447 = vmul.f32 %v1411, %v1442
      %v1448 = vmul.f32 %v1412, %v1442
      %v1449 = vmul.f32 %v1413, %v1442
      %v1450 = vmul.f32 %v1414, %v1442
      %v1451 = vmul.f32 %v1415, %v1442
      %v1452 = vmul.f32 %v1416, %v1442
      %v1453 = vmul.f32 %v1417, %v1442
      %v1454 = vmul.f32 %v1418, %v1442
      %v1455 = vmul.f32 %v1419, %v1442
      %v1456 = vmul.f32 %v1420, %v1442
      %v1457 = vmul.f32 %v1421, %v1442
      %v1458 = vmul.f32 %v1422, %v1442
      %v1459 = vmul.f32 %v1423, %v1442
      %v1460 = vmul.f32 %v1424, %v1442
      %v1461 = vmul.f32 %v1425, %v1442
      %v1462 = vmul.f32 %v1426, %v1442
      %v1463 = vmul.f32 %v1427, %v1442
      %v1464 = vmul.f32 %v1428, %v1442
      %v1465 = vmul.f32 %v1429, %v1442
      %v1466 = vmul.f32 %v1430, %v1442
      %v1467 = vmul.f32 %v1431, %v1442
      %v1468 = vmul.f32 %v1432, %v1442
      %v1469 = vmul.f32 %v1433, %v1442
      %v1470 = vmul.f32 %v1434, %v1442
      %v1471 = vmul.f32 %v1435, %v1442
      %v1472 = vmul.f32 %v1436, %v1442
      %v1473 = vmul.f32 %v1437, %v1442
      %v1474 = vmul.f32 %v1438, %v1442
      %v1475 = vmul.f32 %v1439, %v1442
      %v1476 = vmul.f32 %v1440, %v1442
      %v1477 = vld [vmem:[%s2 + $0x1] sm:$0x1]
      %v1478 = vperm.slane %v1477, 0
      %v1479 = vadd.f32 %v1443, %v1478
      %v1480 = vadd.f32 %v1444, %v1478
      %v1481 = vadd.f32 %v1445, %v1478
      %v1482 = vadd.f32 %v1446, %v1478
      %v1483 = vadd.f32 %v1447, %v1478
      %v1484 = vadd.f32 %v1448, %v1478
      %v1485 = vadd.f32 %v1449, %v1478
      %v1486 = vadd.f32 %v1450, %v1478
      %v1487 = vadd.f32 %v1451, %v1478
      %v1488 = vadd.f32 %v1452, %v1478
      %v1489 = vadd.f32 %v1453, %v1478
      %v1490 = vadd.f32 %v1454, %v1478
      %v1491 = vadd.f32 %v1455, %v1478
      %v1492 = vadd.f32 %v1456, %v1478
      %v1493 = vadd.f32 %v1457, %v1478
      %v1494 = vadd.f32 %v1458, %v1478
      %v1495 = vadd.f32 %v1459, %v1478
      %v1496 = vadd.f32 %v1460, %v1478
      %v1497 = vadd.f32 %v1461, %v1478
      %v1498 = vadd.f32 %v1462, %v1478
      %v1499 = vadd.f32 %v1463, %v1478
      %v1500 = vadd.f32 %v1464, %v1478
      %v1501 = vadd.f32 %v1465, %v1478
      %v1502 = vadd.f32 %v1466, %v1478
      %v1503 = vadd.f32 %v1467, %v1478
      %v1504 = vadd.f32 %v1468, %v1478
      %v1505 = vadd.f32 %v1469, %v1478
      %v1506 = vadd.f32 %v1470, %v1478
      %v1507 = vadd.f32 %v1471, %v1478
      %v1508 = vadd.f32 %v1472, %v1478
      %v1509 = vadd.f32 %v1473, %v1478
      %v1510 = vadd.f32 %v1474, %v1478
      %v1511 = vadd.f32 %v1475, %v1478
      %v1512 = vadd.f32 %v1476, %v1478
      %v1513 = vmul.f32 %v1479, 0.2
      %v1514 = vmul.f32 %v1480, 0.2
      %v1515 = vmul.f32 %v1481, 0.2
      %v1516 = vmul.f32 %v1482, 0.2
      %v1517 = vmul.f32 %v1483, 0.2
      %v1518 = vmul.f32 %v1484, 0.2
      %v1519 = vmul.f32 %v1485, 0.2
      %v1520 = vmul.f32 %v1486, 0.2
      %v1521 = vmul.f32 %v1487, 0.2
      %v1522 = vmul.f32 %v1488, 0.2
      %v1523 = vmul.f32 %v1489, 0.2
      %v1524 = vmul.f32 %v1490, 0.2
      %v1525 = vmul.f32 %v1491, 0.2
      %v1526 = vmul.f32 %v1492, 0.2
      %v1527 = vmul.f32 %v1493, 0.2
      %v1528 = vmul.f32 %v1494, 0.2
      %v1529 = vmul.f32 %v1495, 0.2
      %v1530 = vmul.f32 %v1496, 0.2
      %v1531 = vmul.f32 %v1497, 0.2
      %v1532 = vmul.f32 %v1498, 0.2
      %v1533 = vmul.f32 %v1499, 0.2
      %v1534 = vmul.f32 %v1500, 0.2
      %v1535 = vmul.f32 %v1501, 0.2
      %v1536 = vmul.f32 %v1502, 0.2
      %v1537 = vmul.f32 %v1503, 0.2
      %v1538 = vmul.f32 %v1504, 0.2
      %v1539 = vmul.f32 %v1505, 0.2
      %v1540 = vmul.f32 %v1506, 0.2
      %v1541 = vmul.f32 %v1507, 0.2
      %v1542 = vmul.f32 %v1508, 0.2
      %v1543 = vmul.f32 %v1509, 0.2
      %v1544 = vmul.f32 %v1510, 0.2
      %v1545 = vmul.f32 %v1511, 0.2
      %v1546 = vmul.f32 %v1512, 0.2
      %v1547 = vmax.f32 %v1479, %v1513
      %v1548 = vmax.f32 %v1480, %v1514
      %v1549 = vmax.f32 %v1481, %v1515
      %v1550 = vmax.f32 %v1482, %v1516
      %v1551 = vmax.f32 %v1483, %v1517
      %v1552 = vmax.f32 %v1484, %v1518
      %v1553 = vmax.f32 %v1485, %v1519
      %v1554 = vmax.f32 %v1486, %v1520
      %v1555 = vmax.f32 %v1487, %v1521
      %v1556 = vmax.f32 %v1488, %v1522
      %v1557 = vmax.f32 %v1489, %v1523
      %v1558 = vmax.f32 %v1490, %v1524
      %v1559 = vmax.f32 %v1491, %v1525
      %v1560 = vmax.f32 %v1492, %v1526
      %v1561 = vmax.f32 %v1493, %v1527
      %v1562 = vmax.f32 %v1494, %v1528
      %v1563 = vmax.f32 %v1495, %v1529
      %v1564 = vmax.f32 %v1496, %v1530
      %v1565 = vmax.f32 %v1497, %v1531
      %v1566 = vmax.f32 %v1498, %v1532
      %v1567 = vmax.f32 %v1499, %v1533
      %v1568 = vmax.f32 %v1500, %v1534
      %v1569 = vmax.f32 %v1501, %v1535
      %v1570 = vmax.f32 %v1502, %v1536
      %v1571 = vmax.f32 %v1503, %v1537
      %v1572 = vmax.f32 %v1504, %v1538
      %v1573 = vmax.f32 %v1505, %v1539
      %v1574 = vmax.f32 %v1506, %v1540
      %v1575 = vmax.f32 %v1507, %v1541
      %v1576 = vmax.f32 %v1508, %v1542
      %v1577 = vmax.f32 %v1509, %v1543
      %v1578 = vmax.f32 %v1510, %v1544
      %v1579 = vmax.f32 %v1511, %v1545
      %v1580 = vmax.f32 %v1512, %v1546
      %v1581 = vpack.c.bf16 %v1547, %v1547
      %v1582 = vpack.c.bf16 %v1548, %v1548
      %v1583 = vpack.c.bf16 %v1549, %v1549
      %v1584 = vpack.c.bf16 %v1550, %v1550
      %v1585 = vpack.c.bf16 %v1551, %v1551
      %v1586 = vpack.c.bf16 %v1552, %v1552
      %v1587 = vpack.c.bf16 %v1553, %v1553
      %v1588 = vpack.c.bf16 %v1554, %v1554
      %v1589 = vpack.c.bf16 %v1555, %v1555
      %v1590 = vpack.c.bf16 %v1556, %v1556
      %v1591 = vpack.c.bf16 %v1557, %v1557
      %v1592 = vpack.c.bf16 %v1558, %v1558
      %v1593 = vpack.c.bf16 %v1559, %v1559
      %v1594 = vpack.c.bf16 %v1560, %v1560
      %v1595 = vpack.c.bf16 %v1561, %v1561
      %v1596 = vpack.c.bf16 %v1562, %v1562
      %v1597 = vpack.c.bf16 %v1563, %v1563
      %v1598 = vpack.c.bf16 %v1564, %v1564
      %v1599 = vpack.c.bf16 %v1565, %v1565
      %v1600 = vpack.c.bf16 %v1566, %v1566
      %v1601 = vpack.c.bf16 %v1567, %v1567
      %v1602 = vpack.c.bf16 %v1568, %v1568
      %v1603 = vpack.c.bf16 %v1569, %v1569
      %v1604 = vpack.c.bf16 %v1570, %v1570
      %v1605 = vpack.c.bf16 %v1571, %v1571
      %v1606 = vpack.c.bf16 %v1572, %v1572
      %v1607 = vpack.c.bf16 %v1573, %v1573
      %v1608 = vpack.c.bf16 %v1574, %v1574
      %v1609 = vpack.c.bf16 %v1575, %v1575
      %v1610 = vpack.c.bf16 %v1576, %v1576
      %v1611 = vpack.c.bf16 %v1577, %v1577
      %v1612 = vpack.c.bf16 %v1578, %v1578
      %v1613 = vpack.c.bf16 %v1579, %v1579
      %v1614 = vpack.c.bf16 %v1580, %v1580
      %1615 = vst [vmem:[%s172] sm:$0xf] %v1581
      %1616 = vst [vmem:[%s172 + $0x4] sm:$0xf] %v1582
      %1617 = vst [vmem:[%s172 + $0x8] sm:$0xf] %v1583
      %1618 = vst [vmem:[%s172 + $0xc] sm:$0xf] %v1584
      %1619 = vst [vmem:[%s172 + $0x10] sm:$0xf] %v1585
      %1620 = vst [vmem:[%s172 + $0x14] sm:$0xf] %v1586
      %1621 = vst [vmem:[%s172 + $0x18] sm:$0xf] %v1587
      %1622 = vst [vmem:[%s172 + $0x1c] sm:$0xf] %v1588
      %1623 = vst [vmem:[%s172 + $0x20] sm:$0xf] %v1589
      %1624 = vst [vmem:[%s172 + $0x24] sm:$0xf] %v1590
      %1625 = vst [vmem:[%s172 + $0x28] sm:$0xf] %v1591
      %1626 = vst [vmem:[%s172 + $0x2c] sm:$0xf] %v1592
      %1627 = vst [vmem:[%s172 + $0x30] sm:$0xf] %v1593
      %1628 = vst [vmem:[%s172 + $0x34] sm:$0xf] %v1594
      %1629 = vst [vmem:[%s172 + $0x38] sm:$0xf] %v1595
      %1630 = vst [vmem:[%s172 + $0x3c] sm:$0xf] %v1596
      %1631 = vst [vmem:[%s172 + $0x40] sm:$0xf] %v1597
      %1632 = vst [vmem:[%s172 + $0x44] sm:$0xf] %v1598
      %1633 = vst [vmem:[%s172 + $0x48] sm:$0xf] %v1599
      %1634 = vst [vmem:[%s172 + $0x4c] sm:$0xf] %v1600
      %1635 = vst [vmem:[%s172 + $0x50] sm:$0xf] %v1601
      %1636 = vst [vmem:[%s172 + $0x54] sm:$0xf] %v1602
      %1637 = vst [vmem:[%s172 + $0x58] sm:$0xf] %v1603
      %1638 = vst [vmem:[%s172 + $0x5c] sm:$0xf] %v1604
      %1639 = vst [vmem:[%s172 + $0x60] sm:$0xf] %v1605
      %1640 = vst [vmem:[%s172 + $0x64] sm:$0xf] %v1606
      %1641 = vst [vmem:[%s172 + $0x68] sm:$0xf] %v1607
      %1642 = vst [vmem:[%s172 + $0x6c] sm:$0xf] %v1608
      %1643 = vst [vmem:[%s172 + $0x70] sm:$0xf] %v1609
      %1644 = vst [vmem:[%s172 + $0x74] sm:$0xf] %v1610
      %1645 = vst [vmem:[%s172 + $0x78] sm:$0xf] %v1611
      %1646 = vst [vmem:[%s172 + $0x7c] sm:$0xf] %v1612
      %1647 = vst [vmem:[%s172 + $0x80] sm:$0xf] %v1613
      %1648 = vst [vmem:[%s172 + $0x84] sm:$0xf] %v1614
      %s1649 = smul.u32 34, %s14
      %p1650 = scmp.lt.s32.totalorder %s1649, 67
      %s1651 = scalar_select %p1650, %s1649, 67
      %s1652 = smul.addr %s1651, 4
      %s1653 = scalar_lea.vmem %s3, %s1652
      // Predicated region
      $region33: #{discriminator_wgan_forward.6} parent=31 // pred_check
        %p1654 = pneg %p100
      $region34: #{discriminator_wgan_forward.6} parent=31 // pred_check_branch
        %1656 = sbr.rel (%p1654) target = $region36
      $region35: #{discriminator_wgan_forward.6} parent=31 // pred_region
        %s1657 = smul.u32 34, %s14
      $region36: #{discriminator_wgan_forward.6} parent=31 // pred_fallthru
        _
    $region32: #{discriminator_wgan_forward.6} parent=5 // pred_fallthru
      _
    %p1658 = scmp.le.s32.totalorder 2, %s9
    // Predicated region
    $region37: #{discriminator_wgan_forward.6} parent=5 // pred_check
      %p1659 = pneg %p1658
    $region38: #{discriminator_wgan_forward.6} parent=5 // pred_check_branch
      %1661 = sbr.rel (%p1659) target = $region40
    $region39: #{discriminator_wgan_forward.6} parent=5 // pred_region
      %s1662 = ssub.s32 %s9, 2
      // Predicated region
      $region41: #{discriminator_wgan_forward.6} parent=39 // pred_check
        %p1663 = pneg %p106
      $region42: #{discriminator_wgan_forward.6} parent=39 // pred_check_branch
        %1665 = sbr.rel (%p1663) target = $region44
      $region43: #{discriminator_wgan_forward.6} parent=39 // pred_region
        %s1666 = smul.u32 34, %s15
        %p1667 = scmp.lt.s32.totalorder %s1666, 67
        %s1668 = scalar_select %p1667, %s1666, 67
        %s1669 = smul.addr %s1668, 4
        %s1670 = scalar_lea.vmem %s3, %s1669
      $region44: #{discriminator_wgan_forward.6} parent=39 // pred_fallthru
        _
    $region40: #{discriminator_wgan_forward.6} parent=5 // pred_fallthru
      _
  $region6: #{discriminator_wgan_forward.6} parent=0 // loop_footer
    %s13 = sadd.s32 1, %s9
  $region7: #{discriminator_wgan_forward.6} parent=0 // loop_footer_branch
    %8 = sbr.rel target = $region3
  $region8: #{discriminator_wgan_forward.6} parent=0 // loop_exit
    _

// kernel: discriminator_wgan_forward.7
$region0: #{discriminator_wgan_forward.7}
  #allocation0 [shape = 'u32[]', space=smem, size = 0x4, offset = 0x4, fixed_abs, tag = 'smem constant byte address 0x4 - core index']
  #allocation1 [shape = 'u32[72,128]{1,0:T(1,128)}', space=vmem, size = 0x9000, scoped, tag = 'internal scratch']
  %s0 = inlined_call_operand.vmem [shape: bf16[176,64], index: 0, kind: input, shape index: {}]
  %s1 = inlined_call_operand.vmem [shape: bf16[4,64,128], index: 1, kind: input, shape index: {}]
  %s2 = inlined_call_operand.vmem [shape: f32[2,128], index: 2, kind: input, shape index: {}]
  %s3 = inlined_call_operand.vmem [shape: bf16[144,128], index: 3, kind: output, shape index: {}]
  %s4 = sld [smem:[#allocation0]]
  $region45: #{discriminator_wgan_forward.7} parent=0
    _
  %s6 = ssub.s32 1, %s4
  %s7 = scalar_select 0, %s6, %s4
  loop: start=0, step=1, limit=4
  $region2: #{discriminator_wgan_forward.7} parent=0 // loop_pre_header
    _
  $region3: #{discriminator_wgan_forward.7} parent=0 // loop_header
    %s9 = sphi 0, %s13
    %p10 = scmp.ge.s32.totalorder %s9, 4
    %s19 = sphi 0, %s21
    %s22 = sphi 0, %s19
    %s23 = sphi 0, %s22
    %s39 = sphi 0, %s23
    %s43 = sphi 0, %s43
    %s45 = sphi 0, %s43
    %s46 = sphi 0, %s45
    %s60 = sphi 0, %s46
    %s64 = sphi 0, %s64
    %s66 = sphi 0, %s64
    %s67 = sphi 0, %s66
    %s81 = sphi 0, %s67
    %s87 = sphi 0, %s89
    %s90 = sphi 0, %s87
    %s91 = sphi 0, %s90
    %s107 = sphi 0, %s91
  $region4: #{discriminator_wgan_forward.7} parent=0 // loop_header_branch
    %12 = sbr.rel (%p10) target = $region8
  $region5: #{discriminator_wgan_forward.7} parent=0 // loop_body
    %s14 = ssub.s32 %s9, 1
    %s15 = ssub.s32 %s9, 2
    %s16 = sadd.s32 %s9, 1
    %s17 = ssub.s32 %s9, %s16
    %p18 = scmp.eq.s32.totalorder %s17, 0
    %s20 = sadd.s32 %s19, 1
    %s21 = scalar_select %p18, %s19, %s20
    %p24 = pneg %p18
    %p25 = scmp.eq.s32.totalorder %s9, 1
    %p26 = por %p24, %p25
    %p27 = scmp.ne.s32.totalorder %s19, %s22
    %p28 = scmp.eq.s32.totalorder %s9, 0
    %p29 = por %p27, %p28
    %p30 = scmp.ne.s32.totalorder %s19, %s22
    %p31 = scmp.eq.s32.totalorder %s14, 1
    %p32 = por %p30, %p31
    %p33 = scmp.ne.s32.totalorder %s22, %s23
    %p34 = scmp.eq.s32.totalorder %s14, 0
    %p35 = por %p33, %p34
    %p36 = scmp.ne.s32.totalorder %s22, %s23
    %p37 = scmp.eq.s32.totalorder %s15, 1
    %p38 = por %p36, %p37
    %p40 = scmp.ne.s32.totalorder %s23, %s39
    %p41 = scmp.eq.s32.totalorder %s15, 0
    %p42 = por %p40, %p41
    %s44 = sadd.s32 %s43, 1
    %p47 = scmp.eq.s32.totalorder %s9, 1
    %p48 = scmp.ne.s32.totalorder %s43, %s45
    %p49 = scmp.eq.s32.totalorder %s9, 0
    %p50 = por %p48, %p49
    %p51 = scmp.ne.s32.totalorder %s43, %s45
    %p52 = scmp.eq.s32.totalorder %s14, 1
    %p53 = por %p51, %p52
    %p54 = scmp.ne.s32.totalorder %s45, %s46
    %p55 = scmp.eq.s32.totalorder %s14, 0
    %p56 = por %p54, %p55
    %p57 = scmp.ne.s32.totalorder %s45, %s46
    %p58 = scmp.eq.s32.totalorder %s15, 1
    %p59 = por %p57, %p58
    %p61 = scmp.ne.s32.totalorder %s46, %s60
    %p62 = scmp.eq.s32.totalorder %s15, 0
    %p63 = por %p61, %p62
    %s65 = sadd.s32 %s64, 1
    %p68 = scmp.eq.s32.totalorder %s9, 1
    %p69 = scmp.ne.s32.totalorder %s64, %s66
    %p70 = scmp.eq.s32.totalorder %s9, 0
    %p71 = por %p69, %p70
    %p72 = scmp.ne.s32.totalorder %s64, %s66
    %p73 = scmp.eq.s32.totalorder %s14, 1
    %p74 = por %p72, %p73
    %p75 = scmp.ne.s32.totalorder %s66, %s67
    %p76 = scmp.eq.s32.totalorder %s14, 0
    %p77 = por %p75, %p76
    %p78 = scmp.ne.s32.totalorder %s66, %s67
    %p79 = scmp.eq.s32.totalorder %s15, 1
    %p80 = por %p78, %p79
    %p82 = scmp.ne.s32.totalorder %s67, %s81
    %p83 = scmp.eq.s32.totalorder %s15, 0
    %p84 = por %p82, %p83
    %s85 = ssub.s32 %s9, %s16
    %p86 = scmp.eq.s32.totalorder %s85, 0
    %s88 = sadd.s32 %s87, 1
    %s89 = scalar_select %p86, %s87, %s88
    %p92 = pneg %p86
    %p93 = scmp.eq.s32.totalorder %s9, 1
    %p94 = por %p92, %p93
    %p95 = scmp.ne.s32.totalorder %s87, %s90
    %p96 = scmp.eq.s32.totalorder %s9, 0
    %p97 = por %p95, %p96
    %p98 = scmp.ne.s32.totalorder %s87, %s90
    %p99 = scmp.eq.s32.totalorder %s14, 1
    %p100 = por %p98, %p99
    %p101 = scmp.ne.s32.totalorder %s90, %s91
    %p102 = scmp.eq.s32.totalorder %s14, 0
    %p103 = por %p101, %p102
    %p104 = scmp.ne.s32.totalorder %s90, %s91
    %p105 = scmp.eq.s32.totalorder %s15, 1
    %p106 = por %p104, %p105
    %p108 = scmp.ne.s32.totalorder %s91, %s107
    %p109 = scmp.eq.s32.totalorder %s15, 0
    %p110 = por %p108, %p109
    %p111 = scmp.le.s32.totalorder 1, %s9
    %p112 = scmp.lt.s32.totalorder %s9, 3
    %p113 = pnand %p111, %p112
    %p114 = pneg %p113
    // Predicated region
    $region9: #{discriminator_wgan_forward.7} parent=5 // pred_check
      _
    $region10: #{discriminator_wgan_forward.7} parent=5 // pred_check_branch
      %116 = sbr.rel (%p113) target = $region12
    $region11: #{discriminator_wgan_forward.7} parent=5 // pred_region
      %s117 = ssub.s32 %s9, 1
      // Predicated region
      $region13: #{discriminator_wgan_forward.7} parent=11 // pred_check
        %p118 = pneg %p56
      $region14: #{discriminator_wgan_forward.7} parent=11 // pred_check_branch
        %120 = sbr.rel (%p118) target = $region16
      $region15: #{discriminator_wgan_forward.7} parent=11 // pred_region
        _
      $region16: #{discriminator_wgan_forward.7} parent=11 // pred_fallthru
        _
      // Predicated region
      $region17: #{discriminator_wgan_forward.7} parent=11 // pred_check
        %p121 = pneg %p77
      $region18: #{discriminator_wgan_forward.7} parent=11 // pred_check_branch
        %123 = sbr.rel (%p121) target = $region20
      $region19: #{discriminator_wgan_forward.7} parent=11 // pred_region
        _
      $region20: #{discriminator_wgan_forward.7} parent=11 // pred_fallthru
        _
    $region12: #{discriminator_wgan_forward.7} parent=5 // pred_fallthru
      _
    %p124 = scmp.lt.s32.totalorder %s9, 2
    // Predicated region
    $region21: #{discriminator_wgan_forward.7} parent=5 // pred_check
      %p125 = pneg %p124
    $region22: #{discriminator_wgan_forward.7} parent=5 // pred_check_branch
      %127 = sbr.rel (%p125) target = $region24
    $region23: #{discriminator_wgan_forward.7} parent=5 // pred_region
      // Predicated region
      $region25: #{discriminator_wgan_forward.7} parent=23 // pred_check
        %p128 = pneg %p29
      $region26: #{discriminator_wgan_forward.7} parent=23 // pred_check_branch
        %130 = sbr.rel (%p128) target = $region28
      $region27: #{discriminator_wgan_forward.7} parent=23 // pred_region
        %s131 = smul.u32 11, %s9
        %p132 = scmp.lt.s32.totalorder %s131, 21
        %s133 = scalar_select %p132, %s131, 21
        %s134 = smul.addr %s133, 4
        %s135 = scalar_lea.vmem %s0, %s134
        %s136 = smul.u32 11, %s9
      $region28: #{discriminator_wgan_forward.7} parent=23 // pred_fallthru
        _
    $region24: #{discriminator_wgan_forward.7} parent=5 // pred_fallthru
      _
    %p137 = scmp.le.s32.totalorder 1, %s9
    %p138 = scmp.lt.s32.totalorder %s9, 3
    %p139 = pnand %p137, %p138
    %p140 = pneg %p139
    // Predicated region
    $region29: #{discriminator_wgan_forward.7} parent=5 // pred_check
      _
    $region30: #{discriminator_wgan_forward.7} parent=5 // pred_check_branch
      %142 = sbr.rel (%p139) target = $region32
    $region31: #{discriminator_wgan_forward.7} parent=5 // pred_region
      %s143 = ssub.s32 %s9, 1
      %s144 = smul.u32 11, %s14
      %p145 = scmp.lt.s32.totalorder %s144, 21
      %s146 = scalar_select %p145, %s144, 21
      %s147 = smul.addr %s146, 4
      %s148 = scalar_lea.vmem %s0, %s147
      %p149 = pneg %p35
      %p150 = pneg %p32
      %p151 = pneg %p56
      %p152 = pneg %p53
      %p153 = pneg %p77
      %p154 = pneg %p74
      %p155 = pneg %p103
      %p156 = pneg %p100
      %s157 = smul.u32 9, %s14
      %p158 = scmp.lt.s32.totalorder %s157, 17
      %s159 = scalar_select %p158, %s157, 17
      %s160 = smul.addr %s159, 4
      %s161 = scalar_lea.vmem %s3, %s160
      %s162 = smul.u32 11, %s14
      %p163 = scmp.lt.s32.totalorder %s162, 21
      %s164 = scalar_select %p163, %s162, 21
      %s165 = smul.addr %s164, 4
      %s166 = scalar_lea.vmem %s0, %s165
      %s167 = smul.u32 11, %s14
      %s168 = smul.u32 9, %s14
      %p169 = scmp.lt.s32.totalorder %s168, 17
      %s170 = scalar_select %p169, %s168, 17
      %s171 = smul.addr %s170, 4
      %s172 = scalar_lea.vmem %s3, %s171
      %s173 = smul.u32 9, %s14
      %v175 = vld [vmem:[%s166] sm:$0xf]
      %v176 = vld [vmem:[%s166 + $0x4] sm:$0xf]
      %v177 = vld [vmem:[%s166 + $0x8] sm:$0xf]
      %v178 = vld [vmem:[%s166 + $0xc] sm:$0xf]
      %v179 = vld [vmem:[%s166 + $0x10] sm:$0xf]
      %v180 = vld [vmem:[%s166 + $0x14] sm:$0xf]
      %v181 = vld [vmem:[%s166 + $0x18] sm:$0xf]
      %v182 = vld [vmem:[%s166 + $0x1c] sm:$0xf]
      %v183 = vld [vmem:[%s166 + $0x20] sm:$0xf]
      %v184 = vld [vmem:[%s1] sm:$0xf]
      %v185 = vld [vmem:[%s1 + $0x4] sm:$0xf]
      %v186 = vld [vmem:[%s1 + $0x8] sm:$0xf]
      %v187 = vld [vmem:[%s1 + $0xc] sm:$0xf]
      %v188 = vld [vmem:[%s1 + $0x10] sm:$0xf]
      %v189 = vld [vmem:[%s1 + $0x14] sm:$0xf]
      %v190 = vld [vmem:[%s1 + $0x18] sm:$0xf]
      %v191 = vld [vmem:[%s1 + $0x1c] sm:$0xf]
      %v192 = vld [vmem:[%s166 + $0x24] sm:$0x1]
      %s193 = scalar_lea.vmem %s1, 32
      %v194 = vld [vmem:[%s193] sm:$0xf]
      %v195 = vld [vmem:[%s193 + $0x4] sm:$0xf]
      %v196 = vld [vmem:[%s193 + $0x8] sm:$0xf]
      %v197 = vld [vmem:[%s193 + $0xc] sm:$0xf]
      %v198 = vld [vmem:[%s193 + $0x10] sm:$0xf]
      %v199 = vld [vmem:[%s193 + $0x14] sm:$0xf]
      %v200 = vld [vmem:[%s193 + $0x18] sm:$0xf]
      %v201 = vld [vmem:[%s193 + $0x1c] sm:$0xf]
      %v212 = vunpack.c.l.b16 %v175
      %v213 = vunpack.c.l.b16 %v176
      %v214 = vunpack.c.l.b16 %v177
      %v215 = vunpack.c.l.b16 %v178
      %v216 = vunpack.c.l.b16 %v179
      %v217 = vunpack.c.l.b16 %v180
      %v218 = vunpack.c.l.b16 %v181
      %v219 = vunpack.c.l.b16 %v182
      %v220 = vunpack.c.l.b16 %v183
      %v221 = vunpack.c.l.b16 %v192
      %v222 = vpack.c.b16 %v213, %v212
      %v223 = vpack.c.b16 %v215, %v214
      %v224 = vpack.c.b16 %v217, %v216
      %v225 = vpack.c.b16 %v219, %v218
      %v226 = vpack.c.b16 %v221, %v220
      %vm227 = vsmask.f32 7424
      %v229 = vshrl.u32 %v222, 16
      %v231 = vshll.u32 %v222, 16
      %v233 = vrot.slane %v231, 1
      %v234 = vor.u32 %v229, %v233
      %v236 = vshll.u32 %v223, 16
      %v238 = vrot.slane %v236, 1
      %v239 = vsel %vm227, %v234, %v238
      %v240 = vshrl.u32 %v223, 16
      %v242 = vor.u32 %v240, %v238
      %v244 = vshll.u32 %v224, 16
      %v246 = vrot.slane %v244, 1
      %v247 = vsel %vm227, %v242, %v246
      %v248 = vshrl.u32 %v224, 16
      %v250 = vor.u32 %v248, %v246
      %v252 = vshll.u32 %v225, 16
      %v254 = vrot.slane %v252, 1
      %v255 = vsel %vm227, %v250, %v254
      %v256 = vshrl.u32 %v225, 16
      %v258 = vor.u32 %v256, %v254
      %v260 = vshll.u32 %v226, 16
      %v262 = vrot.slane %v260, 1
      %v263 = vsel %vm227, %v258, %v262
      %v264 = vshrl.u32 %v226, 16
      %v266 = vor.u32 %v264, %v262
      %v275 = vunpack.c.l.b16 %v194
      %v276 = vunpack.c.l.b16 %v195
      %v277 = vunpack.c.l.b16 %v196
      %v278 = vunpack.c.l.b16 %v197
      %v279 = vunpack.c.l.b16 %v198
      %v280 = vunpack.c.l.b16 %v199
      %v281 = vunpack.c.l.b16 %v200
      %v282 = vunpack.c.l.b16 %v201
      %v283 = vpack.c.b16 %v276, %v275
      %v284 = vpack.c.b16 %v278, %v277
      %v285 = vpack.c.b16 %v280, %v279
      %v286 = vpack.c.b16 %v282, %v281
      %vm291 = vcmask 523264
      %v293 = vsel %vm291, %v239, 0
      %v296 = vsel %vm291, %v247, 0
      %v299 = vsel %vm291, %v255, 0
      %v302 = vsel %vm291, %v263, 0
      %v305 = vsel %vm291, %v266, 0
      %307 = vmatpush.bf16.msra.mxu0 0
      %308 = vmatpush.bf16.msra.mxu0 0
      %309 = vmatpush.bf16.msra.mxu0 0
      %310 = vmatpush.bf16.msra.mxu0 0
      %311 = vmatpush.bf16.msra.mxu0 %v286
      %312 = vmatpush.bf16.msra.mxu0 %v285
      %313 = vmatpush.bf16.msra.mxu0 %v284
      %314 = vmatpush.bf16.msra.mxu0 %v283
      %315 = vmatmul.bf16.gmra.mxu0 %v293
      %v316 = vpop.f32.mrf.mxu0
      %v317 = vadd.f32 0.0, %v316
      %v318 = vpop.f32.mrf.mxu0
      %v319 = vadd.f32 0.0, %v318
      %320 = vmatmul.bf16.gmra.mxu0 %v296
      %v321 = vpop.f32.mrf.mxu0
      %v322 = vadd.f32 0.0, %v321
      %v323 = vpop.f32.mrf.mxu0
      %v324 = vadd.f32 0.0, %v323
      %325 = vmatmul.bf16.gmra.mxu0 %v299
      %v326 = vpop.f32.mrf.mxu0
      %v327 = vadd.f32 0.0, %v326
      %v328 = vpop.f32.mrf.mxu0
      %v329 = vadd.f32 0.0, %v328
      %330 = vmatmul.bf16.gmra.mxu0 %v302
      %v331 = vpop.f32.mrf.mxu0
      %v332 = vadd.f32 0.0, %v331
      %v333 = vpop.f32.mrf.mxu0
      %v334 = vadd.f32 0.0, %v333
      %335 = vmatmul.bf16.gmra.mxu0 %v305
      %v336 = vpop.f32.mrf.mxu0
      %v337 = vadd.f32 0.0, %v336
      %v338 = vpop.f32.mrf.mxu0
      %339 = vdwg.mxu0
      %v340 = vpack.c.b16 %v220, %v220
      %v349 = vunpack.c.l.b16 %v184
      %v350 = vunpack.c.l.b16 %v185
      %v351 = vunpack.c.l.b16 %v186
      %v352 = vunpack.c.l.b16 %v187
      %v353 = vunpack.c.l.b16 %v188
      %v354 = vunpack.c.l.b16 %v189
      %v355 = vunpack.c.l.b16 %v190
      %v356 = vunpack.c.l.b16 %v191
      %v357 = vpack.c.b16 %v350, %v349
      %v358 = vpack.c.b16 %v352, %v351
      %v359 = vpack.c.b16 %v354, %v353
      %v360 = vpack.c.b16 %v356, %v355
      %v365 = vsel %vm291, %v222, 0
      %v367 = vsel %vm291, %v223, 0
      %v369 = vsel %vm291, %v224, 0
      %v371 = vsel %vm291, %v225, 0
      %v374 = vsel %vm291, %v340, 0
      %376 = vmatpush.bf16.msra.mxu0 0
      %377 = vmatpush.bf16.msra.mxu0 0
      %378 = vmatpush.bf16.msra.mxu0 0
      %379 = vmatpush.bf16.msra.mxu0 0
      %380 = vmatpush.bf16.msra.mxu0 %v360
      %381 = vmatpush.bf16.msra.mxu0 %v359
      %382 = vmatpush.bf16.msra.mxu0 %v358
      %383 = vmatpush.bf16.msra.mxu0 %v357
      %384 = vmatmul.bf16.gmra.mxu0 %v365
      %v385 = vpop.f32.mrf.mxu0
      %v386 = vadd.f32 %v317, %v385
      %v387 = vpop.f32.mrf.mxu0
      %v388 = vadd.f32 %v319, %v387
      %389 = vmatmul.bf16.gmra.mxu0 %v367
      %v390 = vpop.f32.mrf.mxu0
      %v391 = vadd.f32 %v322, %v390
      %v392 = vpop.f32.mrf.mxu0
      %v393 = vadd.f32 %v324, %v392
      %394 = vmatmul.bf16.gmra.mxu0 %v369
      %v395 = vpop.f32.mrf.mxu0
      %v396 = vadd.f32 %v327, %v395
      %v397 = vpop.f32.mrf.mxu0
      %v398 = vadd.f32 %v329, %v397
      %399 = vmatmul.bf16.gmra.mxu0 %v371
      %v400 = vpop.f32.mrf.mxu0
      %v401 = vadd.f32 %v332, %v400
      %v402 = vpop.f32.mrf.mxu0
      %v403 = vadd.f32 %v334, %v402
      %404 = vmatmul.bf16.gmra.mxu0 %v374
      %v405 = vpop.f32.mrf.mxu0
      %v406 = vadd.f32 %v337, %v405
      %v407 = vpop.f32.mrf.mxu0
      %408 = vdwg.mxu0
      %v409 = vld [vmem:[%s166 + $0x4] sm:$0xf]
      %v410 = vld [vmem:[%s166 + $0x8] sm:$0xf]
      %v411 = vld [vmem:[%s166 + $0xc] sm:$0xf]
      %v412 = vld [vmem:[%s166 + $0x10] sm:$0xf]
      %v413 = vld [vmem:[%s166 + $0x14] sm:$0xf]
      %v414 = vld [vmem:[%s166 + $0x18] sm:$0xf]
      %v415 = vld [vmem:[%s166 + $0x1c] sm:$0xf]
      %v416 = vld [vmem:[%s166 + $0x20] sm:$0xf]
      %v417 = vld [vmem:[%s166 + $0x24] sm:$0xf]
      %v418 = vld [vmem:[%s166 + $0x28] sm:$0x1]
      %s419 = scalar_lea.vmem %s1, 64
      %v420 = vld [vmem:[%s419] sm:$0xf]
      %v421 = vld [vmem:[%s419 + $0x4] sm:$0xf]
      %v422 = vld [vmem:[%s419 + $0x8] sm:$0xf]
      %v423 = vld [vmem:[%s419 + $0xc] sm:$0xf]
      %v424 = vld [vmem:[%s419 + $0x10] sm:$0xf]
      %v425 = vld [vmem:[%s419 + $0x14] sm:$0xf]
      %v426 = vld [vmem:[%s419 + $0x18] sm:$0xf]
      %v427 = vld [vmem:[%s419 + $0x1c] sm:$0xf]
      %v438 = vunpack.c.l.b16 %v409
      %v439 = vunpack.c.l.b16 %v410
      %v440 = vunpack.c.l.b16 %v411
      %v441 = vunpack.c.l.b16 %v412
      %v442 = vunpack.c.l.b16 %v413
      %v443 = vunpack.c.l.b16 %v414
      %v444 = vunpack.c.l.b16 %v415
      %v445 = vunpack.c.l.b16 %v416
      %v446 = vunpack.c.l.b16 %v417
      %v447 = vunpack.c.l.b16 %v418
      %v448 = vpack.c.b16 %v439, %v438
      %v449 = vpack.c.b16 %v441, %v440
      %v450 = vpack.c.b16 %v443, %v442
      %v451 = vpack.c.b16 %v445, %v444
      %v452 = vpack.c.b16 %v447, %v446
      %v454 = vshrl.u32 %v448, 16
      %v456 = vshll.u32 %v448, 16
      %v458 = vrot.slane %v456, 1
      %v459 = vor.u32 %v454, %v458
      %v461 = vshll.u32 %v449, 16
      %v463 = vrot.slane %v461, 1
      %v464 = vsel %vm227, %v459, %v463
      %v465 = vshrl.u32 %v449, 16
      %v467 = vor.u32 %v465, %v463
      %v469 = vshll.u32 %v450, 16
      %v471 = vrot.slane %v469, 1
      %v472 = vsel %vm227, %v467, %v471
      %v473 = vshrl.u32 %v450, 16
      %v475 = vor.u32 %v473, %v471
      %v477 = vshll.u32 %v451, 16
      %v479 = vrot.slane %v477, 1
      %v480 = vsel %vm227, %v475, %v479
      %v481 = vshrl.u32 %v451, 16
      %v483 = vor.u32 %v481, %v479
      %v485 = vshll.u32 %v452, 16
      %v487 = vrot.slane %v485, 1
      %v488 = vsel %vm227, %v483, %v487
      %v489 = vshrl.u32 %v452, 16
      %v491 = vor.u32 %v489, %v487
      %v500 = vunpack.c.l.b16 %v420
      %v501 = vunpack.c.l.b16 %v421
      %v502 = vunpack.c.l.b16 %v422
      %v503 = vunpack.c.l.b16 %v423
      %v504 = vunpack.c.l.b16 %v424
      %v505 = vunpack.c.l.b16 %v425
      %v506 = vunpack.c.l.b16 %v426
      %v507 = vunpack.c.l.b16 %v427
      %v508 = vpack.c.b16 %v501, %v500
      %v509 = vpack.c.b16 %v503, %v502
      %v510 = vpack.c.b16 %v505, %v504
      %v511 = vpack.c.b16 %v507, %v506
      %v517 = vsel %vm291, %v464, 0
      %v520 = vsel %vm291, %v472, 0
      %v523 = vsel %vm291, %v480, 0
      %v526 = vsel %vm291, %v488, 0
      %v529 = vsel %vm291, %v491, 0
      %531 = vmatpush.bf16.msra.mxu0 0
      %532 = vmatpush.bf16.msra.mxu0 0
      %533 = vmatpush.bf16.msra.mxu0 0
      %534 = vmatpush.bf16.msra.mxu0 0
      %535 = vmatpush.bf16.msra.mxu0 %v511
      %536 = vmatpush.bf16.msra.mxu0 %v510
      %537 = vmatpush.bf16.msra.mxu0 %v509
      %538 = vmatpush.bf16.msra.mxu0 %v508
      %539 = vmatmul.bf16.gmra.mxu0 %v517
      %v540 = vpop.f32.mrf.mxu0
      %v541 = vadd.f32 0.0, %v540
      %v542 = vpop.f32.mrf.mxu0
      %v543 = vadd.f32 0.0, %v542
      %544 = vmatmul.bf16.gmra.mxu0 %v520
      %v545 = vpop.f32.mrf.mxu0
      %v546 = vadd.f32 0.0, %v545
      %v547 = vpop.f32.mrf.mxu0
      %v548 = vadd.f32 0.0, %v547
      %549 = vmatmul.bf16.gmra.mxu0 %v523
      %v550 = vpop.f32.mrf.mxu0
      %v551 = vadd.f32 0.0, %v550
      %v552 = vpop.f32.mrf.mxu0
      %v553 = vadd.f32 0.0, %v552
      %554 = vmatmul.bf16.gmra.mxu0 %v526
      %v555 = vpop.f32.mrf.mxu0
      %v556 = vadd.f32 0.0, %v555
      %v557 = vpop.f32.mrf.mxu0
      %v558 = vadd.f32 0.0, %v557
      %559 = vmatmul.bf16.gmra.mxu0 %v529
      %v560 = vpop.f32.mrf.mxu0
      %v561 = vadd.f32 0.0, %v560
      %v562 = vpop.f32.mrf.mxu0
      %563 = vdwg.mxu0
      %v564 = vadd.f32 %v386, %v541
      %v565 = vadd.f32 %v388, %v543
      %v566 = vadd.f32 %v391, %v546
      %v567 = vadd.f32 %v393, %v548
      %v568 = vadd.f32 %v396, %v551
      %v569 = vadd.f32 %v398, %v553
      %v570 = vadd.f32 %v401, %v556
      %v571 = vadd.f32 %v403, %v558
      %v572 = vadd.f32 %v406, %v561
      %v573 = vld [vmem:[%s166 + $0x4] sm:$0xe]
      %s574 = scalar_lea.vmem %s1, 96
      %v575 = vld [vmem:[%s574] sm:$0xf]
      %v576 = vld [vmem:[%s574 + $0x4] sm:$0xf]
      %v577 = vld [vmem:[%s574 + $0x8] sm:$0xf]
      %v578 = vld [vmem:[%s574 + $0xc] sm:$0xf]
      %v579 = vld [vmem:[%s574 + $0x10] sm:$0xf]
      %v580 = vld [vmem:[%s574 + $0x14] sm:$0xf]
      %v581 = vld [vmem:[%s574 + $0x18] sm:$0xf]
      %v582 = vld [vmem:[%s574 + $0x1c] sm:$0xf]
      %v584 = vunpack.c.l.b16 %v573
      %v585 = vpack.c.b16 %v439, %v584
      %vm586 = vcmask 1046528
      %v587 = vrot.slane %v585, 1
      %v588 = vrot.slane %v449, 1
      %v589 = vsel %vm586, %v587, %v588
      %v590 = vrot.slane %v450, 1
      %v591 = vsel %vm586, %v588, %v590
      %v592 = vrot.slane %v451, 1
      %v593 = vsel %vm586, %v590, %v592
      %v594 = vrot.slane %v452, 1
      %v595 = vsel %vm586, %v592, %v594
      %v604 = vunpack.c.l.b16 %v575
      %v605 = vunpack.c.l.b16 %v576
      %v606 = vunpack.c.l.b16 %v577
      %v607 = vunpack.c.l.b16 %v578
      %v608 = vunpack.c.l.b16 %v579
      %v609 = vunpack.c.l.b16 %v580
      %v610 = vunpack.c.l.b16 %v581
      %v611 = vunpack.c.l.b16 %v582
      %v612 = vpack.c.b16 %v605, %v604
      %v613 = vpack.c.b16 %v607, %v606
      %v614 = vpack.c.b16 %v609, %v608
      %v615 = vpack.c.b16 %v611, %v610
      %v621 = vsel %vm291, %v589, 0
      %v624 = vsel %vm291, %v591, 0
      %v627 = vsel %vm291, %v593, 0
      %v630 = vsel %vm291, %v595, 0
      %v633 = vsel %vm291, %v594, 0
      %635 = vmatpush.bf16.msra.mxu0 0
      %636 = vmatpush.bf16.msra.mxu0 0
      %637 = vmatpush.bf16.msra.mxu0 0
      %638 = vmatpush.bf16.msra.mxu0 0
      %639 = vmatpush.bf16.msra.mxu0 %v615
      %640 = vmatpush.bf16.msra.mxu0 %v614
      %641 = vmatpush.bf16.msra.mxu0 %v613
      %642 = vmatpush.bf16.msra.mxu0 %v612
      %643 = vmatmul.bf16.gmra.mxu0 %v621
      %v644 = vpop.f32.mrf.mxu0
      %v645 = vadd.f32 0.0, %v644
      %v646 = vpop.f32.mrf.mxu0
      %v647 = vadd.f32 0.0, %v646
      %648 = vmatmul.bf16.gmra.mxu0 %v624
      %v649 = vpop.f32.mrf.mxu0
      %v650 = vadd.f32 0.0, %v649
      %v651 = vpop.f32.mrf.mxu0
      %v652 = vadd.f32 0.0, %v651
      %653 = vmatmul.bf16.gmra.mxu0 %v627
      %v654 = vpop.f32.mrf.mxu0
      %v655 = vadd.f32 0.0, %v654
      %v656 = vpop.f32.mrf.mxu0
      %v657 = vadd.f32 0.0, %v656
      %658 = vmatmul.bf16.gmra.mxu0 %v630
      %v659 = vpop.f32.mrf.mxu0
      %v660 = vadd.f32 0.0, %v659
      %v661 = vpop.f32.mrf.mxu0
      %v662 = vadd.f32 0.0, %v661
      %663 = vmatmul.bf16.gmra.mxu0 %v633
      %v664 = vpop.f32.mrf.mxu0
      %v665 = vadd.f32 0.0, %v664
      %v666 = vpop.f32.mrf.mxu0
      %667 = vdwg.mxu0
      %v668 = vadd.f32 %v564, %v645
      %v669 = vadd.f32 %v565, %v647
      %v670 = vadd.f32 %v566, %v650
      %v671 = vadd.f32 %v567, %v652
      %v672 = vadd.f32 %v568, %v655
      %v673 = vadd.f32 %v569, %v657
      %v674 = vadd.f32 %v570, %v660
      %v675 = vadd.f32 %v571, %v662
      %v676 = vadd.f32 %v572, %v665
      %v677 = vld [vmem:[%s2] sm:$0x1]
      %v678 = vperm.slane %v677, 0
      %v679 = vmul.f32 %v668, %v678
      %v680 = vmul.f32 %v669, %v678
      %v681 = vmul.f32 %v670, %v678
      %v682 = vmul.f32 %v671, %v678
      %v683 = vmul.f32 %v672, %v678
      %v684 = vmul.f32 %v673, %v678
      %v685 = vmul.f32 %v674, %v678
      %v686 = vmul.f32 %v675, %v678
      %v687 = vmul.f32 %v676, %v678
      %v688 = vld [vmem:[%s2 + $0x1] sm:$0x1]
      %v689 = vperm.slane %v688, 0
      %v690 = vadd.f32 %v679, %v689
      %v691 = vadd.f32 %v680, %v689
      %v692 = vadd.f32 %v681, %v689
      %v693 = vadd.f32 %v682, %v689
      %v694 = vadd.f32 %v683, %v689
      %v695 = vadd.f32 %v684, %v689
      %v696 = vadd.f32 %v685, %v689
      %v697 = vadd.f32 %v686, %v689
      %v698 = vadd.f32 %v687, %v689
      %v699 = vmul.f32 %v690, 0.2
      %v700 = vmul.f32 %v691, 0.2
      %v701 = vmul.f32 %v692, 0.2
      %v702 = vmul.f32 %v693, 0.2
      %v703 = vmul.f32 %v694, 0.2
      %v704 = vmul.f32 %v695, 0.2
      %v705 = vmul.f32 %v696, 0.2
      %v706 = vmul.f32 %v697, 0.2
      %v707 = vmul.f32 %v698, 0.2
      %v708 = vmax.f32 %v690, %v699
      %v709 = vmax.f32 %v691, %v700
      %v710 = vmax.f32 %v692, %v701
      %v711 = vmax.f32 %v693, %v702
      %v712 = vmax.f32 %v694, %v703
      %v713 = vmax.f32 %v695, %v704
      %v714 = vmax.f32 %v696, %v705
      %v715 = vmax.f32 %v697, %v706
      %v716 = vmax.f32 %v698, %v707
      %v717 = vpack.c.bf16 %v708, %v708
      %v718 = vpack.c.bf16 %v709, %v709
      %v719 = vpack.c.bf16 %v710, %v710
      %v720 = vpack.c.bf16 %v711, %v711
      %v721 = vpack.c.bf16 %v712, %v712
      %v722 = vpack.c.bf16 %v713, %v713
      %v723 = vpack.c.bf16 %v714, %v714
      %v724 = vpack.c.bf16 %v715, %v715
      %v725 = vpack.c.bf16 %v716, %v716
      %726 = vst [vmem:[%s172] sm:$0xf] %v717
      %727 = vst [vmem:[%s172 + $0x4] sm:$0xf] %v718
      %728 = vst [vmem:[%s172 + $0x8] sm:$0xf] %v719
      %729 = vst [vmem:[%s172 + $0xc] sm:$0xf] %v720
      %730 = vst [vmem:[%s172 + $0x10] sm:$0xf] %v721
      %731 = vst [vmem:[%s172 + $0x14] sm:$0xf] %v722
      %732 = vst [vmem:[%s172 + $0x18] sm:$0xf] %v723
      %733 = vst [vmem:[%s172 + $0x1c] sm:$0xf] %v724
      %734 = vst [vmem:[%s172 + $0x20] sm:$0xf] %v725
      %s735 = smul.u32 9, %s14
      %p736 = scmp.lt.s32.totalorder %s735, 17
      %s737 = scalar_select %p736, %s735, 17
      %s738 = smul.addr %s737, 4
      %s739 = scalar_lea.vmem %s3, %s738
      // Predicated region
      $region33: #{discriminator_wgan_forward.7} parent=31 // pred_check
        %p740 = pneg %p100
      $region34: #{discriminator_wgan_forward.7} parent=31 // pred_check_branch
        %742 = sbr.rel (%p740) target = $region36
      $region35: #{discriminator_wgan_forward.7} parent=31 // pred_region
        %s743 = smul.u32 9, %s14
      $region36: #{discriminator_wgan_forward.7} parent=31 // pred_fallthru
        _
    $region32: #{discriminator_wgan_forward.7} parent=5 // pred_fallthru
      _
    %p744 = scmp.le.s32.totalorder 2, %s9
    // Predicated region
    $region37: #{discriminator_wgan_forward.7} parent=5 // pred_check
      %p745 = pneg %p744
    $region38: #{discriminator_wgan_forward.7} parent=5 // pred_check_branch
      %747 = sbr.rel (%p745) target = $region40
    $region39: #{discriminator_wgan_forward.7} parent=5 // pred_region
      %s748 = ssub.s32 %s9, 2
      // Predicated region
      $region41: #{discriminator_wgan_forward.7} parent=39 // pred_check
        %p749 = pneg %p106
      $region42: #{discriminator_wgan_forward.7} parent=39 // pred_check_branch
        %751 = sbr.rel (%p749) target = $region44
      $region43: #{discriminator_wgan_forward.7} parent=39 // pred_region
        %s752 = smul.u32 9, %s15
        %p753 = scmp.lt.s32.totalorder %s752, 17
        %s754 = scalar_select %p753, %s752, 17
        %s755 = smul.addr %s754, 4
        %s756 = scalar_lea.vmem %s3, %s755
      $region44: #{discriminator_wgan_forward.7} parent=39 // pred_fallthru
        _
    $region40: #{discriminator_wgan_forward.7} parent=5 // pred_fallthru
      _
  $region6: #{discriminator_wgan_forward.7} parent=0 // loop_footer
    %s13 = sadd.s32 1, %s9
  $region7: #{discriminator_wgan_forward.7} parent=0 // loop_footer_branch
    %8 = sbr.rel target = $region3
  $region8: #{discriminator_wgan_forward.7} parent=0 // loop_exit
    _

// kernel: discriminator_wgan_forward.8
$region0: #{discriminator_wgan_forward.8}
  #allocation0 [shape = 'u32[]', space=smem, size = 0x4, offset = 0x4, fixed_abs, tag = 'smem constant byte address 0x4 - core index']
  #allocation1 [shape = 'u32[72,128]{1,0:T(1,128)}', space=vmem, size = 0x9000, scoped, tag = 'internal scratch']
  %s0 = inlined_call_operand.vmem [shape: bf16[64,128], index: 0, kind: input, shape index: {}]
  %s1 = inlined_call_operand.vmem [shape: bf16[4,128,128], index: 1, kind: input, shape index: {}]
  %s2 = inlined_call_operand.vmem [shape: f32[2,128], index: 2, kind: input, shape index: {}]
  %s3 = inlined_call_operand.vmem [shape: bf16[48,128], index: 3, kind: output, shape index: {}]
  %s4 = sld [smem:[#allocation0]]
  $region45: #{discriminator_wgan_forward.8} parent=0
    _
  %s6 = ssub.s32 1, %s4
  %s7 = scalar_select 0, %s6, %s4
  loop: start=0, step=1, limit=4
  $region2: #{discriminator_wgan_forward.8} parent=0 // loop_pre_header
    _
  $region3: #{discriminator_wgan_forward.8} parent=0 // loop_header
    %s9 = sphi 0, %s13
    %p10 = scmp.ge.s32.totalorder %s9, 4
    %s19 = sphi 0, %s21
    %s22 = sphi 0, %s19
    %s23 = sphi 0, %s22
    %s39 = sphi 0, %s23
    %s43 = sphi 0, %s43
    %s45 = sphi 0, %s43
    %s46 = sphi 0, %s45
    %s60 = sphi 0, %s46
    %s64 = sphi 0, %s64
    %s66 = sphi 0, %s64
    %s67 = sphi 0, %s66
    %s81 = sphi 0, %s67
    %s87 = sphi 0, %s89
    %s90 = sphi 0, %s87
    %s91 = sphi 0, %s90
    %s107 = sphi 0, %s91
  $region4: #{discriminator_wgan_forward.8} parent=0 // loop_header_branch
    %12 = sbr.rel (%p10) target = $region8
  $region5: #{discriminator_wgan_forward.8} parent=0 // loop_body
    %s14 = ssub.s32 %s9, 1
    %s15 = ssub.s32 %s9, 2
    %s16 = sadd.s32 %s9, 1
    %s17 = ssub.s32 %s9, %s16
    %p18 = scmp.eq.s32.totalorder %s17, 0
    %s20 = sadd.s32 %s19, 1
    %s21 = scalar_select %p18, %s19, %s20
    %p24 = pneg %p18
    %p25 = scmp.eq.s32.totalorder %s9, 1
    %p26 = por %p24, %p25
    %p27 = scmp.ne.s32.totalorder %s19, %s22
    %p28 = scmp.eq.s32.totalorder %s9, 0
    %p29 = por %p27, %p28
    %p30 = scmp.ne.s32.totalorder %s19, %s22
    %p31 = scmp.eq.s32.totalorder %s14, 1
    %p32 = por %p30, %p31
    %p33 = scmp.ne.s32.totalorder %s22, %s23
    %p34 = scmp.eq.s32.totalorder %s14, 0
    %p35 = por %p33, %p34
    %p36 = scmp.ne.s32.totalorder %s22, %s23
    %p37 = scmp.eq.s32.totalorder %s15, 1
    %p38 = por %p36, %p37
    %p40 = scmp.ne.s32.totalorder %s23, %s39
    %p41 = scmp.eq.s32.totalorder %s15, 0
    %p42 = por %p40, %p41
    %s44 = sadd.s32 %s43, 1
    %p47 = scmp.eq.s32.totalorder %s9, 1
    %p48 = scmp.ne.s32.totalorder %s43, %s45
    %p49 = scmp.eq.s32.totalorder %s9, 0
    %p50 = por %p48, %p49
    %p51 = scmp.ne.s32.totalorder %s43, %s45
    %p52 = scmp.eq.s32.totalorder %s14, 1
    %p53 = por %p51, %p52
    %p54 = scmp.ne.s32.totalorder %s45, %s46
    %p55 = scmp.eq.s32.totalorder %s14, 0
    %p56 = por %p54, %p55
    %p57 = scmp.ne.s32.totalorder %s45, %s46
    %p58 = scmp.eq.s32.totalorder %s15, 1
    %p59 = por %p57, %p58
    %p61 = scmp.ne.s32.totalorder %s46, %s60
    %p62 = scmp.eq.s32.totalorder %s15, 0
    %p63 = por %p61, %p62
    %s65 = sadd.s32 %s64, 1
    %p68 = scmp.eq.s32.totalorder %s9, 1
    %p69 = scmp.ne.s32.totalorder %s64, %s66
    %p70 = scmp.eq.s32.totalorder %s9, 0
    %p71 = por %p69, %p70
    %p72 = scmp.ne.s32.totalorder %s64, %s66
    %p73 = scmp.eq.s32.totalorder %s14, 1
    %p74 = por %p72, %p73
    %p75 = scmp.ne.s32.totalorder %s66, %s67
    %p76 = scmp.eq.s32.totalorder %s14, 0
    %p77 = por %p75, %p76
    %p78 = scmp.ne.s32.totalorder %s66, %s67
    %p79 = scmp.eq.s32.totalorder %s15, 1
    %p80 = por %p78, %p79
    %p82 = scmp.ne.s32.totalorder %s67, %s81
    %p83 = scmp.eq.s32.totalorder %s15, 0
    %p84 = por %p82, %p83
    %s85 = ssub.s32 %s9, %s16
    %p86 = scmp.eq.s32.totalorder %s85, 0
    %s88 = sadd.s32 %s87, 1
    %s89 = scalar_select %p86, %s87, %s88
    %p92 = pneg %p86
    %p93 = scmp.eq.s32.totalorder %s9, 1
    %p94 = por %p92, %p93
    %p95 = scmp.ne.s32.totalorder %s87, %s90
    %p96 = scmp.eq.s32.totalorder %s9, 0
    %p97 = por %p95, %p96
    %p98 = scmp.ne.s32.totalorder %s87, %s90
    %p99 = scmp.eq.s32.totalorder %s14, 1
    %p100 = por %p98, %p99
    %p101 = scmp.ne.s32.totalorder %s90, %s91
    %p102 = scmp.eq.s32.totalorder %s14, 0
    %p103 = por %p101, %p102
    %p104 = scmp.ne.s32.totalorder %s90, %s91
    %p105 = scmp.eq.s32.totalorder %s15, 1
    %p106 = por %p104, %p105
    %p108 = scmp.ne.s32.totalorder %s91, %s107
    %p109 = scmp.eq.s32.totalorder %s15, 0
    %p110 = por %p108, %p109
    %p111 = scmp.le.s32.totalorder 1, %s9
    %p112 = scmp.lt.s32.totalorder %s9, 3
    %p113 = pnand %p111, %p112
    %p114 = pneg %p113
    // Predicated region
    $region9: #{discriminator_wgan_forward.8} parent=5 // pred_check
      _
    $region10: #{discriminator_wgan_forward.8} parent=5 // pred_check_branch
      %116 = sbr.rel (%p113) target = $region12
    $region11: #{discriminator_wgan_forward.8} parent=5 // pred_region
      %s117 = ssub.s32 %s9, 1
      // Predicated region
      $region13: #{discriminator_wgan_forward.8} parent=11 // pred_check
        %p118 = pneg %p56
      $region14: #{discriminator_wgan_forward.8} parent=11 // pred_check_branch
        %120 = sbr.rel (%p118) target = $region16
      $region15: #{discriminator_wgan_forward.8} parent=11 // pred_region
        _
      $region16: #{discriminator_wgan_forward.8} parent=11 // pred_fallthru
        _
      // Predicated region
      $region17: #{discriminator_wgan_forward.8} parent=11 // pred_check
        %p121 = pneg %p77
      $region18: #{discriminator_wgan_forward.8} parent=11 // pred_check_branch
        %123 = sbr.rel (%p121) target = $region20
      $region19: #{discriminator_wgan_forward.8} parent=11 // pred_region
        _
      $region20: #{discriminator_wgan_forward.8} parent=11 // pred_fallthru
        _
    $region12: #{discriminator_wgan_forward.8} parent=5 // pred_fallthru
      _
    %p124 = scmp.lt.s32.totalorder %s9, 2
    // Predicated region
    $region21: #{discriminator_wgan_forward.8} parent=5 // pred_check
      %p125 = pneg %p124
    $region22: #{discriminator_wgan_forward.8} parent=5 // pred_check_branch
      %127 = sbr.rel (%p125) target = $region24
    $region23: #{discriminator_wgan_forward.8} parent=5 // pred_region
      // Predicated region
      $region25: #{discriminator_wgan_forward.8} parent=23 // pred_check
        %p128 = pneg %p29
      $region26: #{discriminator_wgan_forward.8} parent=23 // pred_check_branch
        %130 = sbr.rel (%p128) target = $region28
      $region27: #{discriminator_wgan_forward.8} parent=23 // pred_region
        %s131 = smul.u32 4, %s9
        %p132 = scmp.lt.s32.totalorder %s131, 7
        %s133 = scalar_select %p132, %s131, 7
        %s134 = smul.addr %s133, 4
        %s135 = scalar_lea.vmem %s0, %s134
        %s136 = smul.u32 4, %s9
      $region28: #{discriminator_wgan_forward.8} parent=23 // pred_fallthru
        _
    $region24: #{discriminator_wgan_forward.8} parent=5 // pred_fallthru
      _
    %p137 = scmp.le.s32.totalorder 1, %s9
    %p138 = scmp.lt.s32.totalorder %s9, 3
    %p139 = pnand %p137, %p138
    %p140 = pneg %p139
    // Predicated region
    $region29: #{discriminator_wgan_forward.8} parent=5 // pred_check
      _
    $region30: #{discriminator_wgan_forward.8} parent=5 // pred_check_branch
      %142 = sbr.rel (%p139) target = $region32
    $region31: #{discriminator_wgan_forward.8} parent=5 // pred_region
      %s143 = ssub.s32 %s9, 1
      %s144 = smul.u32 4, %s14
      %p145 = scmp.lt.s32.totalorder %s144, 7
      %s146 = scalar_select %p145, %s144, 7
      %s147 = smul.addr %s146, 4
      %s148 = scalar_lea.vmem %s0, %s147
      %p149 = pneg %p35
      %p150 = pneg %p32
      %p151 = pneg %p56
      %p152 = pneg %p53
      %p153 = pneg %p77
      %p154 = pneg %p74
      %p155 = pneg %p103
      %p156 = pneg %p100
      %s157 = smul.u32 3, %s14
      %p158 = scmp.lt.s32.totalorder %s157, 5
      %s159 = scalar_select %p158, %s157, 5
      %s160 = smul.addr %s159, 4
      %s161 = scalar_lea.vmem %s3, %s160
      %s162 = smul.u32 4, %s14
      %p163 = scmp.lt.s32.totalorder %s162, 7
      %s164 = scalar_select %p163, %s162, 7
      %s165 = smul.addr %s164, 4
      %s166 = scalar_lea.vmem %s0, %s165
      %s167 = smul.u32 4, %s14
      %s168 = smul.u32 3, %s14
      %p169 = scmp.lt.s32.totalorder %s168, 5
      %s170 = scalar_select %p169, %s168, 5
      %s171 = smul.addr %s170, 4
      %s172 = scalar_lea.vmem %s3, %s171
      %s173 = smul.u32 3, %s14
      %v175 = vld [vmem:[%s166] sm:$0xf]
      %v176 = vld [vmem:[%s166 + $0x4] sm:$0xf]
      %v177 = vld [vmem:[%s166 + $0x8] sm:$0x3]
      %v178 = vld [vmem:[%s1] sm:$0xf]
      %v179 = vld [vmem:[%s1 + $0x4] sm:$0xf]
      %v180 = vld [vmem:[%s1 + $0x8] sm:$0xf]
      %v181 = vld [vmem:[%s1 + $0xc] sm:$0xf]
      %v182 = vld [vmem:[%s1 + $0x10] sm:$0xf]
      %v183 = vld [vmem:[%s1 + $0x14] sm:$0xf]
      %v184 = vld [vmem:[%s1 + $0x18] sm:$0xf]
      %v185 = vld [vmem:[%s1 + $0x1c] sm:$0xf]
      %v186 = vld [vmem:[%s1 + $0x20] sm:$0xf]
      %v187 = vld [vmem:[%s1 + $0x24] sm:$0xf]
      %v188 = vld [vmem:[%s1 + $0x28] sm:$0xf]
      %v189 = vld [vmem:[%s1 + $0x2c] sm:$0xf]
      %v190 = vld [vmem:[%s1 + $0x30] sm:$0xf]
      %v191 = vld [vmem:[%s1 + $0x34] sm:$0xf]
      %v192 = vld [vmem:[%s1 + $0x38] sm:$0xf]
      %v193 = vld [vmem:[%s1 + $0x3c] sm:$0xf]
      %v194 = vld [vmem:[%s166 + $0x8] sm:$0x7]
      %s195 = scalar_lea.vmem %s1, 64
      %v196 = vld [vmem:[%s195] sm:$0xf]
      %v197 = vld [vmem:[%s195 + $0x4] sm:$0xf]
      %v198 = vld [vmem:[%s195 + $0x8] sm:$0xf]
      %v199 = vld [vmem:[%s195 + $0xc] sm:$0xf]
      %v200 = vld [vmem:[%s195 + $0x10] sm:$0xf]
      %v201 = vld [vmem:[%s195 + $0x14] sm:$0xf]
      %v202 = vld [vmem:[%s195 + $0x18] sm:$0xf]
      %v203 = vld [vmem:[%s195 + $0x1c] sm:$0xf]
      %v204 = vld [vmem:[%s195 + $0x20] sm:$0xf]
      %v205 = vld [vmem:[%s195 + $0x24] sm:$0xf]
      %v206 = vld [vmem:[%s195 + $0x28] sm:$0xf]
      %v207 = vld [vmem:[%s195 + $0x2c] sm:$0xf]
      %v208 = vld [vmem:[%s195 + $0x30] sm:$0xf]
      %v209 = vld [vmem:[%s195 + $0x34] sm:$0xf]
      %v210 = vld [vmem:[%s195 + $0x38] sm:$0xf]
      %v211 = vld [vmem:[%s195 + $0x3c] sm:$0xf]
      %v215 = vunpack.c.l.b16 %v175
      %v216 = vunpack.c.l.b16 %v176
      %v217 = vunpack.c.l.b16 %v194
      %v218 = vpack.c.b16 %v216, %v215
      %v219 = vpack.c.b16 %v217, %v217
      %vm220 = vsmask.f32 7424
      %v222 = vshrl.u32 %v218, 16
      %v224 = vshll.u32 %v218, 16
      %v226 = vrot.slane %v224, 1
      %v227 = vor.u32 %v222, %v226
      %v229 = vshll.u32 %v219, 16
      %v231 = vrot.slane %v229, 1
      %v232 = vsel %vm220, %v227, %v231
      %v233 = vshrl.u32 %v219, 16
      %v235 = vor.u32 %v233, %v231
      %v254 = vunpack.c.l.b16 %v196
      %v255 = vunpack.c.l.b16 %v197
      %v256 = vunpack.c.l.b16 %v198
      %v257 = vunpack.c.l.b16 %v199
      %v258 = vunpack.c.l.b16 %v200
      %v259 = vunpack.c.l.b16 %v201
      %v260 = vunpack.c.l.b16 %v202
      %v261 = vunpack.c.l.b16 %v203
      %v262 = vunpack.c.l.b16 %v204
      %v263 = vunpack.c.l.b16 %v205
      %v264 = vunpack.c.l.b16 %v206
      %v265 = vunpack.c.l.b16 %v207
      %v266 = vunpack.c.l.b16 %v208
      %v267 = vunpack.c.l.b16 %v209
      %v268 = vunpack.c.l.b16 %v210
      %v269 = vunpack.c.l.b16 %v211
      %v270 = vpack.c.b16 %v255, %v254
      %v271 = vpack.c.b16 %v257, %v256
      %v272 = vpack.c.b16 %v259, %v258
      %v273 = vpack.c.b16 %v261, %v260
      %v274 = vpack.c.b16 %v263, %v262
      %v275 = vpack.c.b16 %v265, %v264
      %v276 = vpack.c.b16 %v267, %v266
      %v277 = vpack.c.b16 %v269, %v268
      %286 = vmatpush.bf16.msra.mxu0 %v277
      %287 = vmatpush.bf16.msra.mxu0 %v276
      %288 = vmatpush.bf16.msra.mxu0 %v275
      %289 = vmatpush.bf16.msra.mxu0 %v274
      %290 = vmatpush.bf16.msra.mxu0 %v273
      %291 = vmatpush.bf16.msra.mxu0 %v272
      %292 = vmatpush.bf16.msra.mxu0 %v271
      %293 = vmatpush.bf16.msra.mxu0 %v270
      %294 = vmatmul.bf16.gmra.mxu0 %v232
      %v295 = vpop.f32.mrf.mxu0
      %v296 = vadd.f32 0.0, %v295
      %v297 = vpop.f32.mrf.mxu0
      %v298 = vadd.f32 0.0, %v297
      %299 = vmatmul.bf16.gmra.mxu0 %v235
      %v300 = vpop.f32.mrf.mxu0
      %v301 = vadd.f32 0.0, %v300
      %v302 = vpop.f32.mrf.mxu0
      %303 = vdwg.mxu0
      %v305 = vunpack.c.l.b16 %v177
      %v306 = vpack.c.b16 %v305, %v305
      %v325 = vunpack.c.l.b16 %v178
      %v326 = vunpack.c.l.b16 %v179
      %v327 = vunpack.c.l.b16 %v180
      %v328 = vunpack.c.l.b16 %v181
      %v329 = vunpack.c.l.b16 %v182
      %v330 = vunpack.c.l.b16 %v183
      %v331 = vunpack.c.l.b16 %v184
      %v332 = vunpack.c.l.b16 %v185
      %v333 = vunpack.c.l.b16 %v186
      %v334 = vunpack.c.l.b16 %v187
      %v335 = vunpack.c.l.b16 %v188
      %v336 = vunpack.c.l.b16 %v189
      %v337 = vunpack.c.l.b16 %v190
      %v338 = vunpack.c.l.b16 %v191
      %v339 = vunpack.c.l.b16 %v192
      %v340 = vunpack.c.l.b16 %v193
      %v341 = vpack.c.b16 %v326, %v325
      %v342 = vpack.c.b16 %v328, %v327
      %v343 = vpack.c.b16 %v330, %v329
      %v344 = vpack.c.b16 %v332, %v331
      %v345 = vpack.c.b16 %v334, %v333
      %v346 = vpack.c.b16 %v336, %v335
      %v347 = vpack.c.b16 %v338, %v337
      %v348 = vpack.c.b16 %v340, %v339
      %357 = vmatpush.bf16.msra.mxu0 %v348
      %358 = vmatpush.bf16.msra.mxu0 %v347
      %359 = vmatpush.bf16.msra.mxu0 %v346
      %360 = vmatpush.bf16.msra.mxu0 %v345
      %361 = vmatpush.bf16.msra.mxu0 %v344
      %362 = vmatpush.bf16.msra.mxu0 %v343
      %363 = vmatpush.bf16.msra.mxu0 %v342
      %364 = vmatpush.bf16.msra.mxu0 %v341
      %365 = vmatmul.bf16.gmra.mxu0 %v218
      %v366 = vpop.f32.mrf.mxu0
      %v367 = vadd.f32 %v296, %v366
      %v368 = vpop.f32.mrf.mxu0
      %v369 = vadd.f32 %v298, %v368
      %370 = vmatmul.bf16.gmra.mxu0 %v306
      %v371 = vpop.f32.mrf.mxu0
      %v372 = vadd.f32 %v301, %v371
      %v373 = vpop.f32.mrf.mxu0
      %374 = vdwg.mxu0
      %v375 = vld [vmem:[%s166] sm:$0xc]
      %v376 = vld [vmem:[%s166 + $0x4] sm:$0xf]
      %v377 = vld [vmem:[%s166 + $0x8] sm:$0xf]
      %v378 = vld [vmem:[%s166 + $0xc] sm:$0x1]
      %s379 = scalar_lea.vmem %s1, 128
      %v380 = vld [vmem:[%s379] sm:$0xf]
      %v381 = vld [vmem:[%s379 + $0x4] sm:$0xf]
      %v382 = vld [vmem:[%s379 + $0x8] sm:$0xf]
      %v383 = vld [vmem:[%s379 + $0xc] sm:$0xf]
      %v384 = vld [vmem:[%s379 + $0x10] sm:$0xf]
      %v385 = vld [vmem:[%s379 + $0x14] sm:$0xf]
      %v386 = vld [vmem:[%s379 + $0x18] sm:$0xf]
      %v387 = vld [vmem:[%s379 + $0x1c] sm:$0xf]
      %v388 = vld [vmem:[%s379 + $0x20] sm:$0xf]
      %v389 = vld [vmem:[%s379 + $0x24] sm:$0xf]
      %v390 = vld [vmem:[%s379 + $0x28] sm:$0xf]
      %v391 = vld [vmem:[%s379 + $0x2c] sm:$0xf]
      %v392 = vld [vmem:[%s379 + $0x30] sm:$0xf]
      %v393 = vld [vmem:[%s379 + $0x34] sm:$0xf]
      %v394 = vld [vmem:[%s379 + $0x38] sm:$0xf]
      %v395 = vld [vmem:[%s379 + $0x3c] sm:$0xf]
      %v400 = vunpack.c.l.b16 %v375
      %v401 = vunpack.c.l.b16 %v376
      %v402 = vunpack.c.l.b16 %v377
      %v403 = vunpack.c.l.b16 %v378
      %v404 = vpack.c.b16 %v401, %v400
      %v405 = vpack.c.b16 %v403, %v402
      %vm406 = vsmask.f32 5376
      %v408 = vshrl.u32 %v404, 16
      %v410 = vrot.slane %v408, 2
      %v411 = vshll.u32 %v404, 16
      %v413 = vrot.slane %v411, 3
      %v414 = vor.u32 %v410, %v413
      %v416 = vshrl.u32 %v405, 16
      %v418 = vrot.slane %v416, 2
      %v419 = vshll.u32 %v405, 16
      %v421 = vrot.slane %v419, 3
      %v422 = vor.u32 %v418, %v421
      %v423 = vsel %vm406, %v414, %v422
      %v442 = vunpack.c.l.b16 %v380
      %v443 = vunpack.c.l.b16 %v381
      %v444 = vunpack.c.l.b16 %v382
      %v445 = vunpack.c.l.b16 %v383
      %v446 = vunpack.c.l.b16 %v384
      %v447 = vunpack.c.l.b16 %v385
      %v448 = vunpack.c.l.b16 %v386
      %v449 = vunpack.c.l.b16 %v387
      %v450 = vunpack.c.l.b16 %v388
      %v451 = vunpack.c.l.b16 %v389
      %v452 = vunpack.c.l.b16 %v390
      %v453 = vunpack.c.l.b16 %v391
      %v454 = vunpack.c.l.b16 %v392
      %v455 = vunpack.c.l.b16 %v393
      %v456 = vunpack.c.l.b16 %v394
      %v457 = vunpack.c.l.b16 %v395
      %v458 = vpack.c.b16 %v443, %v442
      %v459 = vpack.c.b16 %v445, %v444
      %v460 = vpack.c.b16 %v447, %v446
      %v461 = vpack.c.b16 %v449, %v448
      %v462 = vpack.c.b16 %v451, %v450
      %v463 = vpack.c.b16 %v453, %v452
      %v464 = vpack.c.b16 %v455, %v454
      %v465 = vpack.c.b16 %v457, %v456
      %474 = vmatpush.bf16.msra.mxu0 %v465
      %475 = vmatpush.bf16.msra.mxu0 %v464
      %476 = vmatpush.bf16.msra.mxu0 %v463
      %477 = vmatpush.bf16.msra.mxu0 %v462
      %478 = vmatpush.bf16.msra.mxu0 %v461
      %479 = vmatpush.bf16.msra.mxu0 %v460
      %480 = vmatpush.bf16.msra.mxu0 %v459
      %481 = vmatpush.bf16.msra.mxu0 %v458
      %482 = vmatmul.bf16.gmra.mxu0 %v423
      %v483 = vpop.f32.mrf.mxu0
      %v484 = vadd.f32 0.0, %v483
      %v485 = vpop.f32.mrf.mxu0
      %v486 = vadd.f32 0.0, %v485
      %487 = vmatmul.bf16.gmra.mxu0 %v422
      %v488 = vpop.f32.mrf.mxu0
      %v489 = vadd.f32 0.0, %v488
      %v490 = vpop.f32.mrf.mxu0
      %491 = vdwg.mxu0
      %v492 = vadd.f32 %v367, %v484
      %v493 = vadd.f32 %v369, %v486
      %v494 = vadd.f32 %v372, %v489
      %v495 = vld [vmem:[%s166] sm:$0x8]
      %s496 = scalar_lea.vmem %s1, 192
      %v497 = vld [vmem:[%s496] sm:$0xf]
      %v498 = vld [vmem:[%s496 + $0x4] sm:$0xf]
      %v499 = vld [vmem:[%s496 + $0x8] sm:$0xf]
      %v500 = vld [vmem:[%s496 + $0xc] sm:$0xf]
      %v501 = vld [vmem:[%s496 + $0x10] sm:$0xf]
      %v502 = vld [vmem:[%s496 + $0x14] sm:$0xf]
      %v503 = vld [vmem:[%s496 + $0x18] sm:$0xf]
      %v504 = vld [vmem:[%s496 + $0x1c] sm:$0xf]
      %v505 = vld [vmem:[%s496 + $0x20] sm:$0xf]
      %v506 = vld [vmem:[%s496 + $0x24] sm:$0xf]
      %v507 = vld [vmem:[%s496 + $0x28] sm:$0xf]
      %v508 = vld [vmem:[%s496 + $0x2c] sm:$0xf]
      %v509 = vld [vmem:[%s496 + $0x30] sm:$0xf]
      %v510 = vld [vmem:[%s496 + $0x34] sm:$0xf]
      %v511 = vld [vmem:[%s496 + $0x38] sm:$0xf]
      %v512 = vld [vmem:[%s496 + $0x3c] sm:$0xf]
      %v514 = vunpack.c.l.b16 %v495
      %v515 = vpack.c.b16 %v401, %v514
      %vm516 = vcmask 1044480
      %v517 = vrot.slane %v515, 3
      %v518 = vrot.slane %v405, 3
      %v519 = vsel %vm516, %v517, %v518
      %v538 = vunpack.c.l.b16 %v497
      %v539 = vunpack.c.l.b16 %v498
      %v540 = vunpack.c.l.b16 %v499
      %v541 = vunpack.c.l.b16 %v500
      %v542 = vunpack.c.l.b16 %v501
      %v543 = vunpack.c.l.b16 %v502
      %v544 = vunpack.c.l.b16 %v503
      %v545 = vunpack.c.l.b16 %v504
      %v546 = vunpack.c.l.b16 %v505
      %v547 = vunpack.c.l.b16 %v506
      %v548 = vunpack.c.l.b16 %v507
      %v549 = vunpack.c.l.b16 %v508
      %v550 = vunpack.c.l.b16 %v509
      %v551 = vunpack.c.l.b16 %v510
      %v552 = vunpack.c.l.b16 %v511
      %v553 = vunpack.c.l.b16 %v512
      %v554 = vpack.c.b16 %v539, %v538
      %v555 = vpack.c.b16 %v541, %v540
      %v556 = vpack.c.b16 %v543, %v542
      %v557 = vpack.c.b16 %v545, %v544
      %v558 = vpack.c.b16 %v547, %v546
      %v559 = vpack.c.b16 %v549, %v548
      %v560 = vpack.c.b16 %v551, %v550
      %v561 = vpack.c.b16 %v553, %v552
      %570 = vmatpush.bf16.msra.mxu0 %v561
      %571 = vmatpush.bf16.msra.mxu0 %v560
      %572 = vmatpush.bf16.msra.mxu0 %v559
      %573 = vmatpush.bf16.msra.mxu0 %v558
      %574 = vmatpush.bf16.msra.mxu0 %v557
      %575 = vmatpush.bf16.msra.mxu0 %v556
      %576 = vmatpush.bf16.msra.mxu0 %v555
      %577 = vmatpush.bf16.msra.mxu0 %v554
      %578 = vmatmul.bf16.gmra.mxu0 %v519
      %v579 = vpop.f32.mrf.mxu0
      %v580 = vadd.f32 0.0, %v579
      %v581 = vpop.f32.mrf.mxu0
      %v582 = vadd.f32 0.0, %v581
      %583 = vmatmul.bf16.gmra.mxu0 %v518
      %v584 = vpop.f32.mrf.mxu0
      %v585 = vadd.f32 0.0, %v584
      %v586 = vpop.f32.mrf.mxu0
      %587 = vdwg.mxu0
      %v588 = vadd.f32 %v492, %v580
      %v589 = vadd.f32 %v493, %v582
      %v590 = vadd.f32 %v494, %v585
      %v591 = vld [vmem:[%s2] sm:$0x1]
      %v592 = vperm.slane %v591, 0
      %v593 = vmul.f32 %v588, %v592
      %v594 = vmul.f32 %v589, %v592
      %v595 = vmul.f32 %v590, %v592
      %v596 = vld [vmem:[%s2 + $0x1] sm:$0x1]
      %v597 = vperm.slane %v596, 0
      %v598 = vadd.f32 %v593, %v597
      %v599 = vadd.f32 %v594, %v597
      %v600 = vadd.f32 %v595, %v597
      %v601 = vmul.f32 %v598, 0.2
      %v602 = vmul.f32 %v599, 0.2
      %v603 = vmul.f32 %v600, 0.2
      %v604 = vmax.f32 %v598, %v601
      %v605 = vmax.f32 %v599, %v602
      %v606 = vmax.f32 %v600, %v603
      %v607 = vpack.c.bf16 %v604, %v604
      %v608 = vpack.c.bf16 %v605, %v605
      %v609 = vpack.c.bf16 %v606, %v606
      %610 = vst [vmem:[%s172] sm:$0xf] %v607
      %611 = vst [vmem:[%s172 + $0x4] sm:$0xf] %v608
      %612 = vst [vmem:[%s172 + $0x8] sm:$0x3] %v609
      %613 = vst [vmem:[%s172 + $0x8] sm:$0xc] 0
      %s614 = smul.u32 3, %s14
      %p615 = scmp.lt.s32.totalorder %s614, 5
      %s616 = scalar_select %p615, %s614, 5
      %s617 = smul.addr %s616, 4
      %s618 = scalar_lea.vmem %s3, %s617
      // Predicated region
      $region33: #{discriminator_wgan_forward.8} parent=31 // pred_check
        %p619 = pneg %p100
      $region34: #{discriminator_wgan_forward.8} parent=31 // pred_check_branch
        %621 = sbr.rel (%p619) target = $region36
      $region35: #{discriminator_wgan_forward.8} parent=31 // pred_region
        %s622 = smul.u32 3, %s14
      $region36: #{discriminator_wgan_forward.8} parent=31 // pred_fallthru
        _
    $region32: #{discriminator_wgan_forward.8} parent=5 // pred_fallthru
      _
    %p623 = scmp.le.s32.totalorder 2, %s9
    // Predicated region
    $region37: #{discriminator_wgan_forward.8} parent=5 // pred_check
      %p624 = pneg %p623
    $region38: #{discriminator_wgan_forward.8} parent=5 // pred_check_branch
      %626 = sbr.rel (%p624) target = $region40
    $region39: #{discriminator_wgan_forward.8} parent=5 // pred_region
      %s627 = ssub.s32 %s9, 2
      // Predicated region
      $region41: #{discriminator_wgan_forward.8} parent=39 // pred_check
        %p628 = pneg %p106
      $region42: #{discriminator_wgan_forward.8} parent=39 // pred_check_branch
        %630 = sbr.rel (%p628) target = $region44
      $region43: #{discriminator_wgan_forward.8} parent=39 // pred_region
        %s631 = smul.u32 3, %s15
        %p632 = scmp.lt.s32.totalorder %s631, 5
        %s633 = scalar_select %p632, %s631, 5
        %s634 = smul.addr %s633, 4
        %s635 = scalar_lea.vmem %s3, %s634
      $region44: #{discriminator_wgan_forward.8} parent=39 // pred_fallthru
        _
    $region40: #{discriminator_wgan_forward.8} parent=5 // pred_fallthru
      _
  $region6: #{discriminator_wgan_forward.8} parent=0 // loop_footer
    %s13 = sadd.s32 1, %s9
  $region7: #{discriminator_wgan_forward.8} parent=0 // loop_footer_branch
    %8 = sbr.rel target = $region3
  $region8: #{discriminator_wgan_forward.8} parent=0 // loop_exit
    _

// kernel: discriminator_wgan_forward.9
$region0: #{discriminator_wgan_forward.9}
  #allocation0 [shape = 'u32[]', space=smem, size = 0x4, offset = 0x4, fixed_abs, tag = 'smem constant byte address 0x4 - core index']
  #allocation1 [shape = 'u32[72,128]{1,0:T(1,128)}', space=vmem, size = 0x9000, scoped, tag = 'internal scratch']
  %s0 = inlined_call_operand.vmem [shape: bf16[8,1024], index: 0, kind: input, shape index: {}]
  %s1 = inlined_call_operand.vmem [shape: bf16[1024,128], index: 1, kind: input, shape index: {}]
  %s2 = inlined_call_operand.vmem [shape: f32[2,128], index: 2, kind: input, shape index: {}]
  %s3 = inlined_call_operand.vmem [shape: f32[8,128], index: 3, kind: output, shape index: {}]
  %s4 = sld [smem:[#allocation0]]
  $region22: #{discriminator_wgan_forward.9} parent=0
    _
  %s6 = ssub.s32 1, %s4
  %s7 = scalar_select 0, %s6, %s4
  // Predicated region
  $region2: #{discriminator_wgan_forward.9} parent=0 // pred_check
    _
  $region3: #{discriminator_wgan_forward.9} parent=0 // pred_check_branch
    %9 = sbr.rel (0) target = $region5
  $region4: #{discriminator_wgan_forward.9} parent=0 // pred_region
    _
  $region5: #{discriminator_wgan_forward.9} parent=0 // pred_fallthru
    _
  // Predicated region
  $region6: #{discriminator_wgan_forward.9} parent=0 // pred_check
    _
  $region7: #{discriminator_wgan_forward.9} parent=0 // pred_check_branch
    %11 = sbr.rel (0) target = $region9
  $region8: #{discriminator_wgan_forward.9} parent=0 // pred_region
    _
  $region9: #{discriminator_wgan_forward.9} parent=0 // pred_fallthru
    _
  // Predicated region
  $region10: #{discriminator_wgan_forward.9} parent=0 // pred_check
    _
  $region11: #{discriminator_wgan_forward.9} parent=0 // pred_check_branch
    %13 = sbr.rel (0) target = $region13
  $region12: #{discriminator_wgan_forward.9} parent=0 // pred_region
    _
  $region13: #{discriminator_wgan_forward.9} parent=0 // pred_fallthru
    _
  %v14 = vld [vmem:[%s0] sm:$0xff]
  %v15 = vld [vmem:[%s0 + $0x8] sm:$0xff]
  %v16 = vld [vmem:[%s0 + $0x10] sm:$0xff]
  %v17 = vld [vmem:[%s0 + $0x18] sm:$0xff]
  %v18 = vld [vmem:[%s1] sm:$0xf]
  %v19 = vld [vmem:[%s1 + $0x4] sm:$0xf]
  %v20 = vld [vmem:[%s1 + $0x8] sm:$0xf]
  %v21 = vld [vmem:[%s1 + $0xc] sm:$0xf]
  %v22 = vld [vmem:[%s1 + $0x10] sm:$0xf]
  %v23 = vld [vmem:[%s1 + $0x14] sm:$0xf]
  %v24 = vld [vmem:[%s1 + $0x18] sm:$0xf]
  %v25 = vld [vmem:[%s1 + $0x1c] sm:$0xf]
  %v26 = vld [vmem:[%s1 + $0x20] sm:$0xf]
  %v27 = vld [vmem:[%s1 + $0x24] sm:$0xf]
  %v28 = vld [vmem:[%s1 + $0x28] sm:$0xf]
  %v29 = vld [vmem:[%s1 + $0x2c] sm:$0xf]
  %v30 = vld [vmem:[%s1 + $0x30] sm:$0xf]
  %v31 = vld [vmem:[%s1 + $0x34] sm:$0xf]
  %v32 = vld [vmem:[%s1 + $0x38] sm:$0xf]
  %v33 = vld [vmem:[%s1 + $0x3c] sm:$0xf]
  %v34 = vld [vmem:[%s1 + $0x40] sm:$0xf]
  %v35 = vld [vmem:[%s1 + $0x44] sm:$0xf]
  %v36 = vld [vmem:[%s1 + $0x48] sm:$0xf]
  %v37 = vld [vmem:[%s1 + $0x4c] sm:$0xf]
  %v38 = vld [vmem:[%s1 + $0x50] sm:$0xf]
  %v39 = vld [vmem:[%s1 + $0x54] sm:$0xf]
  %v40 = vld [vmem:[%s1 + $0x58] sm:$0xf]
  %v41 = vld [vmem:[%s1 + $0x5c] sm:$0xf]
  %v42 = vld [vmem:[%s1 + $0x60] sm:$0xf]
  %v43 = vld [vmem:[%s1 + $0x64] sm:$0xf]
  %v44 = vld [vmem:[%s1 + $0x68] sm:$0xf]
  %v45 = vld [vmem:[%s1 + $0x6c] sm:$0xf]
  %v46 = vld [vmem:[%s1 + $0x70] sm:$0xf]
  %v47 = vld [vmem:[%s1 + $0x74] sm:$0xf]
  %v48 = vld [vmem:[%s1 + $0x78] sm:$0xf]
  %v49 = vld [vmem:[%s1 + $0x7c] sm:$0xf]
  %v50 = vld [vmem:[%s1 + $0x80] sm:$0xf]
  %v51 = vld [vmem:[%s1 + $0x84] sm:$0xf]
  %v52 = vld [vmem:[%s1 + $0x88] sm:$0xf]
  %v53 = vld [vmem:[%s1 + $0x8c] sm:$0xf]
  %v54 = vld [vmem:[%s1 + $0x90] sm:$0xf]
  %v55 = vld [vmem:[%s1 + $0x94] sm:$0xf]
  %v56 = vld [vmem:[%s1 + $0x98] sm:$0xf]
  %v57 = vld [vmem:[%s1 + $0x9c] sm:$0xf]
  %v58 = vld [vmem:[%s1 + $0xa0] sm:$0xf]
  %v59 = vld [vmem:[%s1 + $0xa4] sm:$0xf]
  %v60 = vld [vmem:[%s1 + $0xa8] sm:$0xf]
  %v61 = vld [vmem:[%s1 + $0xac] sm:$0xf]
  %v62 = vld [vmem:[%s1 + $0xb0] sm:$0xf]
  %v63 = vld [vmem:[%s1 + $0xb4] sm:$0xf]
  %v64 = vld [vmem:[%s1 + $0xb8] sm:$0xf]
  %v65 = vld [vmem:[%s1 + $0xbc] sm:$0xf]
  %v66 = vld [vmem:[%s1 + $0xc0] sm:$0xf]
  %v67 = vld [vmem:[%s1 + $0xc4] sm:$0xf]
  %v68 = vld [vmem:[%s1 + $0xc8] sm:$0xf]
  %v69 = vld [vmem:[%s1 + $0xcc] sm:$0xf]
  %v70 = vld [vmem:[%s1 + $0xd0] sm:$0xf]
  %v71 = vld [vmem:[%s1 + $0xd4] sm:$0xf]
  %v72 = vld [vmem:[%s1 + $0xd8] sm:$0xf]
  %v73 = vld [vmem:[%s1 + $0xdc] sm:$0xf]
  %v74 = vld [vmem:[%s1 + $0xe0] sm:$0xf]
  %v75 = vld [vmem:[%s1 + $0xe4] sm:$0xf]
  %v76 = vld [vmem:[%s1 + $0xe8] sm:$0xf]
  %v77 = vld [vmem:[%s1 + $0xec] sm:$0xf]
  %v78 = vld [vmem:[%s1 + $0xf0] sm:$0xf]
  %v79 = vld [vmem:[%s1 + $0xf4] sm:$0xf]
  %v80 = vld [vmem:[%s1 + $0xf8] sm:$0xf]
  %v81 = vld [vmem:[%s1 + $0xfc] sm:$0xf]
  %v82 = vld [vmem:[%s1 + $0x100] sm:$0xf]
  %v83 = vld [vmem:[%s1 + $0x104] sm:$0xf]
  %v84 = vld [vmem:[%s1 + $0x108] sm:$0xf]
  %v85 = vld [vmem:[%s1 + $0x10c] sm:$0xf]
  %v86 = vld [vmem:[%s1 + $0x110] sm:$0xf]
  %v87 = vld [vmem:[%s1 + $0x114] sm:$0xf]
  %v88 = vld [vmem:[%s1 + $0x118] sm:$0xf]
  %v89 = vld [vmem:[%s1 + $0x11c] sm:$0xf]
  %v90 = vld [vmem:[%s1 + $0x120] sm:$0xf]
  %v91 = vld [vmem:[%s1 + $0x124] sm:$0xf]
  %v92 = vld [vmem:[%s1 + $0x128] sm:$0xf]
  %v93 = vld [vmem:[%s1 + $0x12c] sm:$0xf]
  %v94 = vld [vmem:[%s1 + $0x130] sm:$0xf]
  %v95 = vld [vmem:[%s1 + $0x134] sm:$0xf]
  %v96 = vld [vmem:[%s1 + $0x138] sm:$0xf]
  %v97 = vld [vmem:[%s1 + $0x13c] sm:$0xf]
  %v98 = vld [vmem:[%s1 + $0x140] sm:$0xf]
  %v99 = vld [vmem:[%s1 + $0x144] sm:$0xf]
  %v100 = vld [vmem:[%s1 + $0x148] sm:$0xf]
  %v101 = vld [vmem:[%s1 + $0x14c] sm:$0xf]
  %v102 = vld [vmem:[%s1 + $0x150] sm:$0xf]
  %v103 = vld [vmem:[%s1 + $0x154] sm:$0xf]
  %v104 = vld [vmem:[%s1 + $0x158] sm:$0xf]
  %v105 = vld [vmem:[%s1 + $0x15c] sm:$0xf]
  %v106 = vld [vmem:[%s1 + $0x160] sm:$0xf]
  %v107 = vld [vmem:[%s1 + $0x164] sm:$0xf]
  %v108 = vld [vmem:[%s1 + $0x168] sm:$0xf]
  %v109 = vld [vmem:[%s1 + $0x16c] sm:$0xf]
  %v110 = vld [vmem:[%s1 + $0x170] sm:$0xf]
  %v111 = vld [vmem:[%s1 + $0x174] sm:$0xf]
  %v112 = vld [vmem:[%s1 + $0x178] sm:$0xf]
  %v113 = vld [vmem:[%s1 + $0x17c] sm:$0xf]
  %v114 = vld [vmem:[%s1 + $0x180] sm:$0xf]
  %v115 = vld [vmem:[%s1 + $0x184] sm:$0xf]
  %v116 = vld [vmem:[%s1 + $0x188] sm:$0xf]
  %v117 = vld [vmem:[%s1 + $0x18c] sm:$0xf]
  %v118 = vld [vmem:[%s1 + $0x190] sm:$0xf]
  %v119 = vld [vmem:[%s1 + $0x194] sm:$0xf]
  %v120 = vld [vmem:[%s1 + $0x198] sm:$0xf]
  %v121 = vld [vmem:[%s1 + $0x19c] sm:$0xf]
  %v122 = vld [vmem:[%s1 + $0x1a0] sm:$0xf]
  %v123 = vld [vmem:[%s1 + $0x1a4] sm:$0xf]
  %v124 = vld [vmem:[%s1 + $0x1a8] sm:$0xf]
  %v125 = vld [vmem:[%s1 + $0x1ac] sm:$0xf]
  %v126 = vld [vmem:[%s1 + $0x1b0] sm:$0xf]
  %v127 = vld [vmem:[%s1 + $0x1b4] sm:$0xf]
  %v128 = vld [vmem:[%s1 + $0x1b8] sm:$0xf]
  %v129 = vld [vmem:[%s1 + $0x1bc] sm:$0xf]
  %v130 = vld [vmem:[%s1 + $0x1c0] sm:$0xf]
  %v131 = vld [vmem:[%s1 + $0x1c4] sm:$0xf]
  %v132 = vld [vmem:[%s1 + $0x1c8] sm:$0xf]
  %v133 = vld [vmem:[%s1 + $0x1cc] sm:$0xf]
  %v134 = vld [vmem:[%s1 + $0x1d0] sm:$0xf]
  %v135 = vld [vmem:[%s1 + $0x1d4] sm:$0xf]
  %v136 = vld [vmem:[%s1 + $0x1d8] sm:$0xf]
  %v137 = vld [vmem:[%s1 + $0x1dc] sm:$0xf]
  %v138 = vld [vmem:[%s1 + $0x1e0] sm:$0xf]
  %v139 = vld [vmem:[%s1 + $0x1e4] sm:$0xf]
  %v140 = vld [vmem:[%s1 + $0x1e8] sm:$0xf]
  %v141 = vld [vmem:[%s1 + $0x1ec] sm:$0xf]
  %v142 = vld [vmem:[%s1 + $0x1f0] sm:$0xf]
  %v143 = vld [vmem:[%s1 + $0x1f4] sm:$0xf]
  %v144 = vld [vmem:[%s1 + $0x1f8] sm:$0xf]
  %v145 = vld [vmem:[%s1 + $0x1fc] sm:$0xf]
  %v150 = vunpack.c.l.b16 %v14
  %v151 = vunpack.c.h.b16 %v14
  %v152 = vunpack.c.l.b16 %v15
  %v153 = vunpack.c.h.b16 %v15
  %v154 = vunpack.c.l.b16 %v16
  %v155 = vunpack.c.h.b16 %v16
  %v156 = vunpack.c.l.b16 %v17
  %v157 = vunpack.c.h.b16 %v17
  %v158 = vpack.c.b16 %v150, %v150
  %v159 = vpack.c.b16 %v151, %v151
  %v160 = vpack.c.b16 %v152, %v152
  %v161 = vpack.c.b16 %v153, %v153
  %v162 = vpack.c.b16 %v154, %v154
  %v163 = vpack.c.b16 %v155, %v155
  %v164 = vpack.c.b16 %v156, %v156
  %v165 = vpack.c.b16 %v157, %v157
  %v302 = vunpack.c.l.b16 %v18
  %v303 = vunpack.c.l.b16 %v19
  %v304 = vunpack.c.l.b16 %v20
  %v305 = vunpack.c.l.b16 %v21
  %v306 = vunpack.c.l.b16 %v22
  %v307 = vunpack.c.l.b16 %v23
  %v308 = vunpack.c.l.b16 %v24
  %v309 = vunpack.c.l.b16 %v25
  %v310 = vunpack.c.l.b16 %v26
  %v311 = vunpack.c.l.b16 %v27
  %v312 = vunpack.c.l.b16 %v28
  %v313 = vunpack.c.l.b16 %v29
  %v314 = vunpack.c.l.b16 %v30
  %v315 = vunpack.c.l.b16 %v31
  %v316 = vunpack.c.l.b16 %v32
  %v317 = vunpack.c.l.b16 %v33
  %v318 = vunpack.c.l.b16 %v34
  %v319 = vunpack.c.l.b16 %v35
  %v320 = vunpack.c.l.b16 %v36
  %v321 = vunpack.c.l.b16 %v37
  %v322 = vunpack.c.l.b16 %v38
  %v323 = vunpack.c.l.b16 %v39
  %v324 = vunpack.c.l.b16 %v40
  %v325 = vunpack.c.l.b16 %v41
  %v326 = vunpack.c.l.b16 %v42
  %v327 = vunpack.c.l.b16 %v43
  %v328 = vunpack.c.l.b16 %v44
  %v329 = vunpack.c.l.b16 %v45
  %v330 = vunpack.c.l.b16 %v46
  %v331 = vunpack.c.l.b16 %v47
  %v332 = vunpack.c.l.b16 %v48
  %v333 = vunpack.c.l.b16 %v49
  %v334 = vunpack.c.l.b16 %v50
  %v335 = vunpack.c.l.b16 %v51
  %v336 = vunpack.c.l.b16 %v52
  %v337 = vunpack.c.l.b16 %v53
  %v338 = vunpack.c.l.b16 %v54
  %v339 = vunpack.c.l.b16 %v55
  %v340 = vunpack.c.l.b16 %v56
  %v341 = vunpack.c.l.b16 %v57
  %v342 = vunpack.c.l.b16 %v58
  %v343 = vunpack.c.l.b16 %v59
  %v344 = vunpack.c.l.b16 %v60
  %v345 = vunpack.c.l.b16 %v61
  %v346 = vunpack.c.l.b16 %v62
  %v347 = vunpack.c.l.b16 %v63
  %v348 = vunpack.c.l.b16 %v64
  %v349 = vunpack.c.l.b16 %v65
  %v350 = vunpack.c.l.b16 %v66
  %v351 = vunpack.c.l.b16 %v67
  %v352 = vunpack.c.l.b16 %v68
  %v353 = vunpack.c.l.b16 %v69
  %v354 = vunpack.c.l.b16 %v70
  %v355 = vunpack.c.l.b16 %v71
  %v356 = vunpack.c.l.b16 %v72
  %v357 = vunpack.c.l.b16 %v73
  %v358 = vunpack.c.l.b16 %v74
  %v359 = vunpack.c.l.b16 %v75
  %v360 = vunpack.c.l.b16 %v76
  %v361 = vunpack.c.l.b16 %v77
  %v362 = vunpack.c.l.b16 %v78
  %v363 = vunpack.c.l.b16 %v79
  %v364 = vunpack.c.l.b16 %v80
  %v365 = vunpack.c.l.b16 %v81
  %v366 = vunpack.c.l.b16 %v82
  %v367 = vunpack.c.l.b16 %v83
  %v368 = vunpack.c.l.b16 %v84
  %v369 = vunpack.c.l.b16 %v85
  %v370 = vunpack.c.l.b16 %v86
  %v371 = vunpack.c.l.b16 %v87
  %v372 = vunpack.c.l.b16 %v88
  %v373 = vunpack.c.l.b16 %v89
  %v374 = vunpack.c.l.b16 %v90
  %v375 = vunpack.c.l.b16 %v91
  %v376 = vunpack.c.l.b16 %v92
  %v377 = vunpack.c.l.b16 %v93
  %v378 = vunpack.c.l.b16 %v94
  %v379 = vunpack.c.l.b16 %v95
  %v380 = vunpack.c.l.b16 %v96
  %v381 = vunpack.c.l.b16 %v97
  %v382 = vunpack.c.l.b16 %v98
  %v383 = vunpack.c.l.b16 %v99
  %v384 = vunpack.c.l.b16 %v100
  %v385 = vunpack.c.l.b16 %v101
  %v386 = vunpack.c.l.b16 %v102
  %v387 = vunpack.c.l.b16 %v103
  %v388 = vunpack.c.l.b16 %v104
  %v389 = vunpack.c.l.b16 %v105
  %v390 = vunpack.c.l.b16 %v106
  %v391 = vunpack.c.l.b16 %v107
  %v392 = vunpack.c.l.b16 %v108
  %v393 = vunpack.c.l.b16 %v109
  %v394 = vunpack.c.l.b16 %v110
  %v395 = vunpack.c.l.b16 %v111
  %v396 = vunpack.c.l.b16 %v112
  %v397 = vunpack.c.l.b16 %v113
  %v398 = vunpack.c.l.b16 %v114
  %v399 = vunpack.c.l.b16 %v115
  %v400 = vunpack.c.l.b16 %v116
  %v401 = vunpack.c.l.b16 %v117
  %v402 = vunpack.c.l.b16 %v118
  %v403 = vunpack.c.l.b16 %v119
  %v404 = vunpack.c.l.b16 %v120
  %v405 = vunpack.c.l.b16 %v121
  %v406 = vunpack.c.l.b16 %v122
  %v407 = vunpack.c.l.b16 %v123
  %v408 = vunpack.c.l.b16 %v124
  %v409 = vunpack.c.l.b16 %v125
  %v410 = vunpack.c.l.b16 %v126
  %v411 = vunpack.c.l.b16 %v127
  %v412 = vunpack.c.l.b16 %v128
  %v413 = vunpack.c.l.b16 %v129
  %v414 = vunpack.c.l.b16 %v130
  %v415 = vunpack.c.l.b16 %v131
  %v416 = vunpack.c.l.b16 %v132
  %v417 = vunpack.c.l.b16 %v133
  %v418 = vunpack.c.l.b16 %v134
  %v419 = vunpack.c.l.b16 %v135
  %v420 = vunpack.c.l.b16 %v136
  %v421 = vunpack.c.l.b16 %v137
  %v422 = vunpack.c.l.b16 %v138
  %v423 = vunpack.c.l.b16 %v139
  %v424 = vunpack.c.l.b16 %v140
  %v425 = vunpack.c.l.b16 %v141
  %v426 = vunpack.c.l.b16 %v142
  %v427 = vunpack.c.l.b16 %v143
  %v428 = vunpack.c.l.b16 %v144
  %v429 = vunpack.c.l.b16 %v145
  %v430 = vpack.c.b16 %v303, %v302
  %v431 = vpack.c.b16 %v305, %v304
  %v432 = vpack.c.b16 %v307, %v306
  %v433 = vpack.c.b16 %v309, %v308
  %v434 = vpack.c.b16 %v311, %v310
  %v435 = vpack.c.b16 %v313, %v312
  %v436 = vpack.c.b16 %v315, %v314
  %v437 = vpack.c.b16 %v317, %v316
  %v438 = vpack.c.b16 %v319, %v318
  %v439 = vpack.c.b16 %v321, %v320
  %v440 = vpack.c.b16 %v323, %v322
  %v441 = vpack.c.b16 %v325, %v324
  %v442 = vpack.c.b16 %v327, %v326
  %v443 = vpack.c.b16 %v329, %v328
  %v444 = vpack.c.b16 %v331, %v330
  %v445 = vpack.c.b16 %v333, %v332
  %v446 = vpack.c.b16 %v335, %v334
  %v447 = vpack.c.b16 %v337, %v336
  %v448 = vpack.c.b16 %v339, %v338
  %v449 = vpack.c.b16 %v341, %v340
  %v450 = vpack.c.b16 %v343, %v342
  %v451 = vpack.c.b16 %v345, %v344
  %v452 = vpack.c.b16 %v347, %v346
  %v453 = vpack.c.b16 %v349, %v348
  %v454 = vpack.c.b16 %v351, %v350
  %v455 = vpack.c.b16 %v353, %v352
  %v456 = vpack.c.b16 %v355, %v354
  %v457 = vpack.c.b16 %v357, %v356
  %v458 = vpack.c.b16 %v359, %v358
  %v459 = vpack.c.b16 %v361, %v360
  %v460 = vpack.c.b16 %v363, %v362
  %v461 = vpack.c.b16 %v365, %v364
  %v462 = vpack.c.b16 %v367, %v366
  %v463 = vpack.c.b16 %v369, %v368
  %v464 = vpack.c.b16 %v371, %v370
  %v465 = vpack.c.b16 %v373, %v372
  %v466 = vpack.c.b16 %v375, %v374
  %v467 = vpack.c.b16 %v377, %v376
  %v468 = vpack.c.b16 %v379, %v378
  %v469 = vpack.c.b16 %v381, %v380
  %v470 = vpack.c.b16 %v383, %v382
  %v471 = vpack.c.b16 %v385, %v384
  %v472 = vpack.c.b16 %v387, %v386
  %v473 = vpack.c.b16 %v389, %v388
  %v474 = vpack.c.b16 %v391, %v390
  %v475 = vpack.c.b16 %v393, %v392
  %v476 = vpack.c.b16 %v395, %v394
  %v477 = vpack.c.b16 %v397, %v396
  %v478 = vpack.c.b16 %v399, %v398
  %v479 = vpack.c.b16 %v401, %v400
  %v480 = vpack.c.b16 %v403, %v402
  %v481 = vpack.c.b16 %v405, %v404
  %v482 = vpack.c.b16 %v407, %v406
  %v483 = vpack.c.b16 %v409, %v408
  %v484 = vpack.c.b16 %v411, %v410
  %v485 = vpack.c.b16 %v413, %v412
  %v486 = vpack.c.b16 %v415, %v414
  %v487 = vpack.c.b16 %v417, %v416
  %v488 = vpack.c.b16 %v419, %v418
  %v489 = vpack.c.b16 %v421, %v420
  %v490 = vpack.c.b16 %v423, %v422
  %v491 = vpack.c.b16 %v425, %v424
  %v492 = vpack.c.b16 %v427, %v426
  %v493 = vpack.c.b16 %v429, %v428
  %558 = vmatpush.bf16.msra.mxu0 %v437
  %559 = vmatpush.bf16.msra.mxu0 %v436
  %560 = vmatpush.bf16.msra.mxu0 %v435
  %561 = vmatpush.bf16.msra.mxu0 %v434
  %562 = vmatpush.bf16.msra.mxu0 %v433
  %563 = vmatpush.bf16.msra.mxu0 %v432
  %564 = vmatpush.bf16.msra.mxu0 %v431
  %565 = vmatpush.bf16.msra.mxu0 %v430
  %566 = vmatmul.bf16.gmra.mxu0 %v158
  %v567 = vpop.f32.mrf.mxu0
  %v568 = vadd.f32 0.0, %v567
  %v569 = vpop.f32.mrf.mxu0
  %570 = vdwg.mxu0
  %571 = vmatpush.bf16.msra.mxu0 %v445
  %572 = vmatpush.bf16.msra.mxu0 %v444
  %573 = vmatpush.bf16.msra.mxu0 %v443
  %574 = vmatpush.bf16.msra.mxu0 %v442
  %575 = vmatpush.bf16.msra.mxu0 %v441
  %576 = vmatpush.bf16.msra.mxu0 %v440
  %577 = vmatpush.bf16.msra.mxu0 %v439
  %578 = vmatpush.bf16.msra.mxu0 %v438
  %579 = vmatmul.bf16.gmra.mxu0 %v159
  %v580 = vpop.f32.mrf.mxu0
  %v581 = vadd.f32 %v568, %v580
  %v582 = vpop.f32.mrf.mxu0
  %583 = vdwg.mxu0
  %584 = vmatpush.bf16.msra.mxu0 %v453
  %585 = vmatpush.bf16.msra.mxu0 %v452
  %586 = vmatpush.bf16.msra.mxu0 %v451
  %587 = vmatpush.bf16.msra.mxu0 %v450
  %588 = vmatpush.bf16.msra.mxu0 %v449
  %589 = vmatpush.bf16.msra.mxu0 %v448
  %590 = vmatpush.bf16.msra.mxu0 %v447
  %591 = vmatpush.bf16.msra.mxu0 %v446
  %592 = vmatmul.bf16.gmra.mxu0 %v160
  %v593 = vpop.f32.mrf.mxu0
  %v594 = vadd.f32 %v581, %v593
  %v595 = vpop.f32.mrf.mxu0
  %596 = vdwg.mxu0
  %597 = vmatpush.bf16.msra.mxu0 %v461
  %598 = vmatpush.bf16.msra.mxu0 %v460
  %599 = vmatpush.bf16.msra.mxu0 %v459
  %600 = vmatpush.bf16.msra.mxu0 %v458
  %601 = vmatpush.bf16.msra.mxu0 %v457
  %602 = vmatpush.bf16.msra.mxu0 %v456
  %603 = vmatpush.bf16.msra.mxu0 %v455
  %604 = vmatpush.bf16.msra.mxu0 %v454
  %605 = vmatmul.bf16.gmra.mxu0 %v161
  %v606 = vpop.f32.mrf.mxu0
  %v607 = vadd.f32 %v594, %v606
  %v608 = vpop.f32.mrf.mxu0
  %609 = vdwg.mxu0
  %610 = vmatpush.bf16.msra.mxu0 %v469
  %611 = vmatpush.bf16.msra.mxu0 %v468
  %612 = vmatpush.bf16.msra.mxu0 %v467
  %613 = vmatpush.bf16.msra.mxu0 %v466
  %614 = vmatpush.bf16.msra.mxu0 %v465
  %615 = vmatpush.bf16.msra.mxu0 %v464
  %616 = vmatpush.bf16.msra.mxu0 %v463
  %617 = vmatpush.bf16.msra.mxu0 %v462
  %618 = vmatmul.bf16.gmra.mxu0 %v162
  %v619 = vpop.f32.mrf.mxu0
  %v620 = vadd.f32 %v607, %v619
  %v621 = vpop.f32.mrf.mxu0
  %622 = vdwg.mxu0
  %623 = vmatpush.bf16.msra.mxu0 %v477
  %624 = vmatpush.bf16.msra.mxu0 %v476
  %625 = vmatpush.bf16.msra.mxu0 %v475
  %626 = vmatpush.bf16.msra.mxu0 %v474
  %627 = vmatpush.bf16.msra.mxu0 %v473
  %628 = vmatpush.bf16.msra.mxu0 %v472
  %629 = vmatpush.bf16.msra.mxu0 %v471
  %630 = vmatpush.bf16.msra.mxu0 %v470
  %631 = vmatmul.bf16.gmra.mxu0 %v163
  %v632 = vpop.f32.mrf.mxu0
  %v633 = vadd.f32 %v620, %v632
  %v634 = vpop.f32.mrf.mxu0
  %635 = vdwg.mxu0
  %636 = vmatpush.bf16.msra.mxu0 %v485
  %637 = vmatpush.bf16.msra.mxu0 %v484
  %638 = vmatpush.bf16.msra.mxu0 %v483
  %639 = vmatpush.bf16.msra.mxu0 %v482
  %640 = vmatpush.bf16.msra.mxu0 %v481
  %641 = vmatpush.bf16.msra.mxu0 %v480
  %642 = vmatpush.bf16.msra.mxu0 %v479
  %643 = vmatpush.bf16.msra.mxu0 %v478
  %644 = vmatmul.bf16.gmra.mxu0 %v164
  %v645 = vpop.f32.mrf.mxu0
  %v646 = vadd.f32 %v633, %v645
  %v647 = vpop.f32.mrf.mxu0
  %648 = vdwg.mxu0
  %649 = vmatpush.bf16.msra.mxu0 %v493
  %650 = vmatpush.bf16.msra.mxu0 %v492
  %651 = vmatpush.bf16.msra.mxu0 %v491
  %652 = vmatpush.bf16.msra.mxu0 %v490
  %653 = vmatpush.bf16.msra.mxu0 %v489
  %654 = vmatpush.bf16.msra.mxu0 %v488
  %655 = vmatpush.bf16.msra.mxu0 %v487
  %656 = vmatpush.bf16.msra.mxu0 %v486
  %657 = vmatmul.bf16.gmra.mxu0 %v165
  %v658 = vpop.f32.mrf.mxu0
  %v659 = vadd.f32 %v646, %v658
  %v660 = vpop.f32.mrf.mxu0
  %661 = vdwg.mxu0
  %v662 = vld [vmem:[%s2] sm:$0x1]
  %v663 = vperm.slane %v662, 0
  %v664 = vmul.f32 %v659, %v663
  %v665 = vld [vmem:[%s2 + $0x1] sm:$0x1]
  %v666 = vperm.slane %v665, 0
  %v667 = vadd.f32 %v664, %v666
  %668 = vst [vmem:[%s3] sm:$0xff] %v667
  // Predicated region
  $region14: #{discriminator_wgan_forward.9} parent=0 // pred_check
    _
  $region15: #{discriminator_wgan_forward.9} parent=0 // pred_check_branch
    %670 = sbr.rel (0) target = $region17
  $region16: #{discriminator_wgan_forward.9} parent=0 // pred_region
    _
  $region17: #{discriminator_wgan_forward.9} parent=0 // pred_fallthru
    _
  // Predicated region
  $region18: #{discriminator_wgan_forward.9} parent=0 // pred_check
    _
  $region19: #{discriminator_wgan_forward.9} parent=0 // pred_check_branch
    %672 = sbr.rel (0) target = $region21
  $region20: #{discriminator_wgan_forward.9} parent=0 // pred_region
    _
  $region21: #{discriminator_wgan_forward.9} parent=0 // pred_fallthru
    _

</llo_original>
